<compile_context>
chip_gen: v7x
topology: tpu7x:2x2x1
jax: 0.10.0
libtpu: 0.0.40
codegen_flags: <defaults>
</compile_context>

<pallas_src>
import functools

import jax
import jax.numpy as jnp
from jax.experimental import pallas as pl
from jax.experimental.pallas import tpu as pltpu


# ----------------------------------------------------------------------------
# Kernel
# ----------------------------------------------------------------------------
def _pad_hw1(a):
    """Zero-pad a (H, W, C) activation by 1 on both spatial dims (in-kernel)."""
    H, W, C = a.shape
    zr = jnp.zeros((1, W, C), a.dtype)
    a = jnp.concatenate([zr, a, zr], axis=0)            # (H+2, W, C)
    zc = jnp.zeros((H + 2, 1, C), a.dtype)
    a = jnp.concatenate([zc, a, zc], axis=1)            # (H+2, W+2, C)
    return a


def _conv_block(act, w_ref, scale_ref, bias_ref):
    """Conv3x3(pad=1) -> BN(eval) -> ReLU -> MaxPool2x2 on one (H, W, Cin) map.

    w_ref:     (9*Cin, Cout) bf16, flattened in (ky, kx, cin) order
    scale_ref: (1, Cout) f32 fused BN scale (gamma / sqrt(var+eps))
    bias_ref:  (1, Cout) f32 fused BN bias (incl. conv bias)
    """
    H, W, Cin = act.shape
    Cout = w_ref.shape[1]

    xp = _pad_hw1(act)                                   # (H+2, W+2, Cin)
    # im2col: tap order (ky, kx) with channels innermost -> (H*W, 9*Cin).
    taps = [xp[dy:dy + H, dx:dx + W, :] for dy in range(3) for dx in range(3)]
    patches = jnp.concatenate(taps, axis=-1).reshape(H * W, 9 * Cin)

    # Single MXU matmul with K = 9*Cin, bf16 operands, f32 accumulation.
    y = jnp.dot(patches.astype(jnp.bfloat16), w_ref[...],
                preferred_element_type=jnp.float32)      # (H*W, Cout)
    y = y * scale_ref[...] + bias_ref[...]               # BatchNorm (eval)
    y = jnp.maximum(y, 0.0)                              # ReLU

    # MaxPool 2x2 stride 2.
    y = y.reshape(H // 2, 2, W // 2, 2, Cout)
    y = jnp.max(y, axis=3)
    y = jnp.max(y, axis=1)
    return y                                             # (H//2, W//2, Cout)


def _cnn4_kernel(x_ref,
                 w1, s1, b1, w2, s2, b2, w3, s3, b3, w4, s4, b4,
                 fcw_ref, fcb_ref, o_ref):
    """Fused CNN4 forward for one batch element (all activations stay in VMEM).

    x_ref:   (1, H, W, Cin) f32 input tile (NHWC)
    fcw_ref: (F, CPAD) bf16 FC weight, rows in NHWC flatten order, lane-padded
    fcb_ref: (1, CPAD) f32 FC bias (zero-padded)
    o_ref:   (1, 1, CPAD) f32 lane-dense logits output
    """
    act = x_ref[0]                                       # (H, W, Cin)
    for w, s, b in ((w1, s1, b1), (w2, s2, b2), (w3, s3, b3), (w4, s4, b4)):
        act = _conv_block(act, w, s, b)

    Hs, Ws, Cd = act.shape
    feat = act.reshape(1, Hs * Ws * Cd)                  # NHWC flatten
    logits = jnp.dot(feat.astype(jnp.bfloat16), fcw_ref[...],
                     preferred_element_type=jnp.float32) + fcb_ref[...]
    o_ref[0] = logits.astype(o_ref.dtype)


# ----------------------------------------------------------------------------
# Wrapper (single pallas_call for the whole network)
# ----------------------------------------------------------------------------
def cnn4_pallas(x_nhwc, params):
    """x_nhwc: (N, H, W, Cin) f32 -> (N, CPAD) f32 (lane-padded logits)."""
    N, H, W, Cin = x_nhwc.shape
    blocks = params["blocks"]
    Cd = blocks[0]["w"].shape[1]
    cpad = params["fc_w"].shape[1]

    assert H % 16 == 0 and W % 16 == 0, "need four exact 2x2 pools"
    assert params["fc_w"].shape[0] == (H // 16) * (W // 16) * Cd, \
        "fc weight size does not match flattened feature map"

    def fixed(shape):
        # Whole-array block, resident across the batch grid (DMA'd once).
        return pl.BlockSpec(shape, lambda n: (0,) * len(shape))

    in_specs = [pl.BlockSpec((1, H, W, Cin), lambda n: (n, 0, 0, 0))]
    inputs = [x_nhwc]
    for blk in blocks:
        in_specs += [fixed(blk["w"].shape), fixed(blk["scale"].shape),
                     fixed(blk["bias"].shape)]
        inputs += [blk["w"], blk["scale"], blk["bias"]]
    in_specs += [fixed(params["fc_w"].shape), fixed(params["fc_b"].shape)]
    inputs += [params["fc_w"], params["fc_b"]]

    out = pl.pallas_call(
        _cnn4_kernel,
        out_shape=jax.ShapeDtypeStruct((N, 1, cpad), jnp.float32),
        grid=(N,),
        in_specs=in_specs,
        out_specs=pl.BlockSpec((1, 1, cpad), lambda n: (n, 0, 0)),
        compiler_params=pltpu.CompilerParams(
            dimension_semantics=("parallel",)),
    )(*inputs)
    return out.reshape(N, cpad)


@functools.partial(jax.jit, static_argnames=("num_classes",))
def cnn4_forward(x_nchw, params, *, num_classes):
    # NCHW (PyTorch) -> NHWC (kernel layout); only wrapper-side glue op left.
    x = jnp.transpose(x_nchw, (0, 2, 3, 1)).astype(jnp.float32)
    out = cnn4_pallas(x, params)
    return out[:, :num_classes]


# ----------------------------------------------------------------------------
# Parameter construction (deterministic, kernel-ready layout)
# ----------------------------------------------------------------------------
def init_params(key, in_channels, hidden_dim, num_classes, spatial_size):
    eps = 1e-5
    blocks = []
    cin = in_channels
    for _ in range(4):
        key, kw, kb = jax.random.split(key, 3)
        # PyTorch conv.weight is (Cout, Cin, 3, 3); kept here as the
        # equivalent (3, 3, Cin, Cout) (= weight.permute(2, 3, 1, 0)) and
        # flattened to (9*Cin, Cout) in (ky, kx, cin) order to match the
        # kernel's im2col tap order.
        w = 0.05 * jax.random.normal(kw, (3, 3, cin, hidden_dim), jnp.float32)
        conv_b = 0.05 * jax.random.normal(kb, (hidden_dim,), jnp.float32)
        # BN eval params: gamma=1, beta=0, running_mean=0, running_var=1.
        gamma = jnp.ones((hidden_dim,), jnp.float32)
        beta = jnp.zeros((hidden_dim,), jnp.float32)
        running_mean = jnp.zeros((hidden_dim,), jnp.float32)
        running_var = jnp.ones((hidden_dim,), jnp.float32)
        scale = gamma / jnp.sqrt(running_var + eps)
        bias = beta + scale * (conv_b - running_mean)
        blocks.append({
            "w": w.reshape(9 * cin, hidden_dim).astype(jnp.bfloat16),
            "scale": scale.reshape(1, hidden_dim).astype(jnp.float32),
            "bias": bias.reshape(1, hidden_dim).astype(jnp.float32),
        })
        cin = hidden_dim

    feat = hidden_dim * spatial_size * spatial_size
    key, kw, kb = jax.random.split(key, 3)
    # fc.weight.T stored as (F, num_classes) with F in PyTorch NCHW (c, h, w)
    # flatten order -- i.e. the order of `out4.view(N, -1)`.
    fc_w_nchw = 0.05 * jax.random.normal(kw, (feat, num_classes), jnp.float32)
    fc_b = 0.05 * jax.random.normal(kb, (num_classes,), jnp.float32)

    # Re-order rows to the kernel's NHWC (h, w, c) flatten order and pad the
    # class dim up to a full 128-lane tile (sliced back in the wrapper).
    hs = ws = spatial_size
    f = jnp.arange(feat)
    c = f % hidden_dim
    w_idx = (f // hidden_dim) % ws
    h_idx = f // (ws * hidden_dim)
    perm = c * (hs * ws) + h_idx * ws + w_idx
    fc_w_nhwc = fc_w_nchw[perm, :]

    cpad = ((num_classes + 127) // 128) * 128
    fc_w_pad = jnp.zeros((feat, cpad), jnp.float32).at[:, :num_classes].set(fc_w_nhwc)
    fc_b_pad = jnp.zeros((1, cpad), jnp.float32).at[0, :num_classes].set(fc_b)

    return {
        "blocks": blocks,
        "fc_w": fc_w_pad.astype(jnp.bfloat16),
        "fc_b": fc_b_pad,
    }


# ----------------------------------------------------------------------------
# Main
# ----------------------------------------------------------------------------
if __name__ == "__main__":
    # Small shapes: batch=2, in_channels=3, hidden_dim=32, spatial=16.
    # Four 2x2 pools: 16 -> 8 -> 4 -> 2 -> 1, so spatial_size=1 and the
    # fc input is hidden_dim * 1 * 1 = 32.
    batch, in_channels, hidden_dim, spatial, num_classes = 2, 3, 32, 16, 5
    spatial_size = spatial // 16  # = 1

    key = jax.random.PRNGKey(0)
    key, kx = jax.random.split(key)
    x = jax.random.normal(kx, (batch, in_channels, spatial, spatial), jnp.float32)

    params = init_params(key, in_channels, hidden_dim, num_classes, spatial_size)

    out = cnn4_forward(x, params, num_classes=num_classes)
    out = jax.block_until_ready(out)
    assert out.shape == (batch, num_classes), out.shape
    print("KERNEL_OK")
</pallas_src>

<mosaic_0001>
module attributes {stable_mosaic.version = 11 : i64} {
  func.func @_cnn4_kernel(%arg0: i32, %arg1: memref<1x16x16x3xf32, #tpu.memory_space<vmem>>, %arg2: memref<27x32xbf16, #tpu.memory_space<vmem>>, %arg3: memref<1x32xf32, #tpu.memory_space<vmem>>, %arg4: memref<1x32xf32, #tpu.memory_space<vmem>>, %arg5: memref<288x32xbf16, #tpu.memory_space<vmem>>, %arg6: memref<1x32xf32, #tpu.memory_space<vmem>>, %arg7: memref<1x32xf32, #tpu.memory_space<vmem>>, %arg8: memref<288x32xbf16, #tpu.memory_space<vmem>>, %arg9: memref<1x32xf32, #tpu.memory_space<vmem>>, %arg10: memref<1x32xf32, #tpu.memory_space<vmem>>, %arg11: memref<288x32xbf16, #tpu.memory_space<vmem>>, %arg12: memref<1x32xf32, #tpu.memory_space<vmem>>, %arg13: memref<1x32xf32, #tpu.memory_space<vmem>>, %arg14: memref<32x128xbf16, #tpu.memory_space<vmem>>, %arg15: memref<1x128xf32, #tpu.memory_space<vmem>>, %arg16: memref<1x1x128xf32, #tpu.memory_space<vmem>>) attributes {dimension_semantics = [#tpu.dimension_semantics<parallel>], iteration_bounds = array<i64: 2>, scalar_prefetch = 0 : i64, scratch_operands = 0 : i64, tpu.core_type = #tpu.core_type<tc>, window_params = [{transform_indices = @transform_0, window_bounds = array<i64: 1, 16, 16, 3>}, {pipeline_mode = #tpu.pipeline_mode<synchronous>, transform_indices = @transform_1, window_bounds = array<i64: 27, 32>}, {pipeline_mode = #tpu.pipeline_mode<synchronous>, transform_indices = @transform_2, window_bounds = array<i64: 1, 32>}, {pipeline_mode = #tpu.pipeline_mode<synchronous>, transform_indices = @transform_3, window_bounds = array<i64: 1, 32>}, {pipeline_mode = #tpu.pipeline_mode<synchronous>, transform_indices = @transform_4, window_bounds = array<i64: 288, 32>}, {pipeline_mode = #tpu.pipeline_mode<synchronous>, transform_indices = @transform_5, window_bounds = array<i64: 1, 32>}, {pipeline_mode = #tpu.pipeline_mode<synchronous>, transform_indices = @transform_6, window_bounds = array<i64: 1, 32>}, {pipeline_mode = #tpu.pipeline_mode<synchronous>, transform_indices = @transform_7, window_bounds = array<i64: 288, 32>}, {pipeline_mode = #tpu.pipeline_mode<synchronous>, transform_indices = @transform_8, window_bounds = array<i64: 1, 32>}, {pipeline_mode = #tpu.pipeline_mode<synchronous>, transform_indices = @transform_9, window_bounds = array<i64: 1, 32>}, {pipeline_mode = #tpu.pipeline_mode<synchronous>, transform_indices = @transform_10, window_bounds = array<i64: 288, 32>}, {pipeline_mode = #tpu.pipeline_mode<synchronous>, transform_indices = @transform_11, window_bounds = array<i64: 1, 32>}, {pipeline_mode = #tpu.pipeline_mode<synchronous>, transform_indices = @transform_12, window_bounds = array<i64: 1, 32>}, {pipeline_mode = #tpu.pipeline_mode<synchronous>, transform_indices = @transform_13, window_bounds = array<i64: 32, 128>}, {pipeline_mode = #tpu.pipeline_mode<synchronous>, transform_indices = @transform_14, window_bounds = array<i64: 1, 128>}, {transform_indices = @transform_15, window_bounds = array<i64: 1, 1, 128>}]} {
    %c0 = arith.constant 0 : index
    %c0_0 = arith.constant 0 : index
    %c0_1 = arith.constant 0 : index
    %c0_2 = arith.constant 0 : index
    %0 = vector.load %arg1[%c0, %c0_0, %c0_1, %c0_2] : memref<1x16x16x3xf32, #tpu.memory_space<vmem>>, vector<1x16x16x3xf32>
    %1 = vector.shape_cast %0 : vector<1x16x16x3xf32> to vector<16x16x3xf32>
    %cst = arith.constant 0.000000e+00 : f32
    %2 = vector.broadcast %cst : f32 to vector<1x16x3xf32>
    %3 = tpu.concatenate %2, %1, %2 in 0 : vector<1x16x3xf32>, vector<16x16x3xf32>, vector<1x16x3xf32> -> vector<18x16x3xf32>
    %cst_3 = arith.constant 0.000000e+00 : f32
    %4 = vector.broadcast %cst_3 : f32 to vector<18x1x3xf32>
    %5 = tpu.concatenate %4, %3, %4 in 1 : vector<18x1x3xf32>, vector<18x16x3xf32>, vector<18x1x3xf32> -> vector<18x18x3xf32>
    %6 = vector.extract_strided_slice %5 {offsets = [0, 0, 0], sizes = [16, 16, 3], strides = [1, 1, 1]} : vector<18x18x3xf32> to vector<16x16x3xf32>
    %7 = vector.extract_strided_slice %5 {offsets = [0, 1, 0], sizes = [16, 16, 3], strides = [1, 1, 1]} : vector<18x18x3xf32> to vector<16x16x3xf32>
    %8 = vector.extract_strided_slice %5 {offsets = [0, 2, 0], sizes = [16, 16, 3], strides = [1, 1, 1]} : vector<18x18x3xf32> to vector<16x16x3xf32>
    %9 = vector.extract_strided_slice %5 {offsets = [1, 0, 0], sizes = [16, 16, 3], strides = [1, 1, 1]} : vector<18x18x3xf32> to vector<16x16x3xf32>
    %10 = vector.extract_strided_slice %5 {offsets = [1, 1, 0], sizes = [16, 16, 3], strides = [1, 1, 1]} : vector<18x18x3xf32> to vector<16x16x3xf32>
    %11 = vector.extract_strided_slice %5 {offsets = [1, 2, 0], sizes = [16, 16, 3], strides = [1, 1, 1]} : vector<18x18x3xf32> to vector<16x16x3xf32>
    %12 = vector.extract_strided_slice %5 {offsets = [2, 0, 0], sizes = [16, 16, 3], strides = [1, 1, 1]} : vector<18x18x3xf32> to vector<16x16x3xf32>
    %13 = vector.extract_strided_slice %5 {offsets = [2, 1, 0], sizes = [16, 16, 3], strides = [1, 1, 1]} : vector<18x18x3xf32> to vector<16x16x3xf32>
    %14 = vector.extract_strided_slice %5 {offsets = [2, 2, 0], sizes = [16, 16, 3], strides = [1, 1, 1]} : vector<18x18x3xf32> to vector<16x16x3xf32>
    %15 = tpu.concatenate %6, %7, %8, %9, %10, %11, %12, %13, %14 in 2 : vector<16x16x3xf32>, vector<16x16x3xf32>, vector<16x16x3xf32>, vector<16x16x3xf32>, vector<16x16x3xf32>, vector<16x16x3xf32>, vector<16x16x3xf32>, vector<16x16x3xf32>, vector<16x16x3xf32> -> vector<16x16x27xf32>
    %16 = vector.shape_cast %15 : vector<16x16x27xf32> to vector<256x27xf32>
    %17 = arith.truncf %16 : vector<256x27xf32> to vector<256x27xbf16>
    %c0_4 = arith.constant 0 : index
    %c0_5 = arith.constant 0 : index
    %18 = vector.load %arg2[%c0_4, %c0_5] : memref<27x32xbf16, #tpu.memory_space<vmem>>, vector<27x32xbf16>
    %cst_6 = arith.constant dense<0.000000e+00> : vector<256x32xf32>
    %19 = tpu.matmul %17, %18, %cst_6 {dimension_numbers = #tpu.dot_dimension_numbers<[1], [0], [0], [1], [0, 0, 1, 1], [], []>} : vector<256x27xbf16>, vector<27x32xbf16>, vector<256x32xf32> -> vector<256x32xf32>
    %c0_7 = arith.constant 0 : index
    %c0_8 = arith.constant 0 : index
    %20 = vector.load %arg3[%c0_7, %c0_8] : memref<1x32xf32, #tpu.memory_space<vmem>>, vector<1x32xf32>
    %21 = vector.broadcast %20 : vector<1x32xf32> to vector<256x32xf32>
    %22 = arith.mulf %19, %21 : vector<256x32xf32>
    %c0_9 = arith.constant 0 : index
    %c0_10 = arith.constant 0 : index
    %23 = vector.load %arg4[%c0_9, %c0_10] : memref<1x32xf32, #tpu.memory_space<vmem>>, vector<1x32xf32>
    %24 = vector.broadcast %23 : vector<1x32xf32> to vector<256x32xf32>
    %25 = arith.addf %22, %24 : vector<256x32xf32>
    %cst_11 = arith.constant 0.000000e+00 : f32
    %26 = vector.broadcast %cst_11 : f32 to vector<256x32xf32>
    %27 = arith.maximumf %25, %26 : vector<256x32xf32>
    %28 = vector.shape_cast %27 : vector<256x32xf32> to vector<8x2x8x2x32xf32>
    %cst_12 = arith.constant dense<0xFF800000> : vector<8x2x8x32xf32>
    %29 = vector.multi_reduction <maximumf>, %28, %cst_12 [3] : vector<8x2x8x2x32xf32> to vector<8x2x8x32xf32>
    %cst_13 = arith.constant dense<0xFF800000> : vector<8x8x32xf32>
    %30 = vector.multi_reduction <maximumf>, %29, %cst_13 [1] : vector<8x2x8x32xf32> to vector<8x8x32xf32>
    %cst_14 = arith.constant 0.000000e+00 : f32
    %31 = vector.broadcast %cst_14 : f32 to vector<1x8x32xf32>
    %32 = tpu.concatenate %31, %30, %31 in 0 : vector<1x8x32xf32>, vector<8x8x32xf32>, vector<1x8x32xf32> -> vector<10x8x32xf32>
    %cst_15 = arith.constant 0.000000e+00 : f32
    %33 = vector.broadcast %cst_15 : f32 to vector<10x1x32xf32>
    %34 = tpu.concatenate %33, %32, %33 in 1 : vector<10x1x32xf32>, vector<10x8x32xf32>, vector<10x1x32xf32> -> vector<10x10x32xf32>
    %35 = vector.extract_strided_slice %34 {offsets = [0, 0, 0], sizes = [8, 8, 32], strides = [1, 1, 1]} : vector<10x10x32xf32> to vector<8x8x32xf32>
    %36 = vector.extract_strided_slice %34 {offsets = [0, 1, 0], sizes = [8, 8, 32], strides = [1, 1, 1]} : vector<10x10x32xf32> to vector<8x8x32xf32>
    %37 = vector.extract_strided_slice %34 {offsets = [0, 2, 0], sizes = [8, 8, 32], strides = [1, 1, 1]} : vector<10x10x32xf32> to vector<8x8x32xf32>
    %38 = vector.extract_strided_slice %34 {offsets = [1, 0, 0], sizes = [8, 8, 32], strides = [1, 1, 1]} : vector<10x10x32xf32> to vector<8x8x32xf32>
    %39 = vector.extract_strided_slice %34 {offsets = [1, 1, 0], sizes = [8, 8, 32], strides = [1, 1, 1]} : vector<10x10x32xf32> to vector<8x8x32xf32>
    %40 = vector.extract_strided_slice %34 {offsets = [1, 2, 0], sizes = [8, 8, 32], strides = [1, 1, 1]} : vector<10x10x32xf32> to vector<8x8x32xf32>
    %41 = vector.extract_strided_slice %34 {offsets = [2, 0, 0], sizes = [8, 8, 32], strides = [1, 1, 1]} : vector<10x10x32xf32> to vector<8x8x32xf32>
    %42 = vector.extract_strided_slice %34 {offsets = [2, 1, 0], sizes = [8, 8, 32], strides = [1, 1, 1]} : vector<10x10x32xf32> to vector<8x8x32xf32>
    %43 = vector.extract_strided_slice %34 {offsets = [2, 2, 0], sizes = [8, 8, 32], strides = [1, 1, 1]} : vector<10x10x32xf32> to vector<8x8x32xf32>
    %44 = tpu.concatenate %35, %36, %37, %38, %39, %40, %41, %42, %43 in 2 : vector<8x8x32xf32>, vector<8x8x32xf32>, vector<8x8x32xf32>, vector<8x8x32xf32>, vector<8x8x32xf32>, vector<8x8x32xf32>, vector<8x8x32xf32>, vector<8x8x32xf32>, vector<8x8x32xf32> -> vector<8x8x288xf32>
    %45 = vector.shape_cast %44 : vector<8x8x288xf32> to vector<64x288xf32>
    %46 = arith.truncf %45 : vector<64x288xf32> to vector<64x288xbf16>
    %c0_16 = arith.constant 0 : index
    %c0_17 = arith.constant 0 : index
    %47 = vector.load %arg5[%c0_16, %c0_17] : memref<288x32xbf16, #tpu.memory_space<vmem>>, vector<288x32xbf16>
    %cst_18 = arith.constant dense<0.000000e+00> : vector<64x32xf32>
    %48 = tpu.matmul %46, %47, %cst_18 {dimension_numbers = #tpu.dot_dimension_numbers<[1], [0], [0], [1], [0, 0, 1, 1], [], []>} : vector<64x288xbf16>, vector<288x32xbf16>, vector<64x32xf32> -> vector<64x32xf32>
    %c0_19 = arith.constant 0 : index
    %c0_20 = arith.constant 0 : index
    %49 = vector.load %arg6[%c0_19, %c0_20] : memref<1x32xf32, #tpu.memory_space<vmem>>, vector<1x32xf32>
    %50 = vector.broadcast %49 : vector<1x32xf32> to vector<64x32xf32>
    %51 = arith.mulf %48, %50 : vector<64x32xf32>
    %c0_21 = arith.constant 0 : index
    %c0_22 = arith.constant 0 : index
    %52 = vector.load %arg7[%c0_21, %c0_22] : memref<1x32xf32, #tpu.memory_space<vmem>>, vector<1x32xf32>
    %53 = vector.broadcast %52 : vector<1x32xf32> to vector<64x32xf32>
    %54 = arith.addf %51, %53 : vector<64x32xf32>
    %cst_23 = arith.constant 0.000000e+00 : f32
    %55 = vector.broadcast %cst_23 : f32 to vector<64x32xf32>
    %56 = arith.maximumf %54, %55 : vector<64x32xf32>
    %57 = vector.shape_cast %56 : vector<64x32xf32> to vector<4x2x4x2x32xf32>
    %cst_24 = arith.constant dense<0xFF800000> : vector<4x2x4x32xf32>
    %58 = vector.multi_reduction <maximumf>, %57, %cst_24 [3] : vector<4x2x4x2x32xf32> to vector<4x2x4x32xf32>
    %cst_25 = arith.constant dense<0xFF800000> : vector<4x4x32xf32>
    %59 = vector.multi_reduction <maximumf>, %58, %cst_25 [1] : vector<4x2x4x32xf32> to vector<4x4x32xf32>
    %cst_26 = arith.constant 0.000000e+00 : f32
    %60 = vector.broadcast %cst_26 : f32 to vector<1x4x32xf32>
    %61 = tpu.concatenate %60, %59, %60 in 0 : vector<1x4x32xf32>, vector<4x4x32xf32>, vector<1x4x32xf32> -> vector<6x4x32xf32>
    %cst_27 = arith.constant 0.000000e+00 : f32
    %62 = vector.broadcast %cst_27 : f32 to vector<6x1x32xf32>
    %63 = tpu.concatenate %62, %61, %62 in 1 : vector<6x1x32xf32>, vector<6x4x32xf32>, vector<6x1x32xf32> -> vector<6x6x32xf32>
    %64 = vector.extract_strided_slice %63 {offsets = [0, 0, 0], sizes = [4, 4, 32], strides = [1, 1, 1]} : vector<6x6x32xf32> to vector<4x4x32xf32>
    %65 = vector.extract_strided_slice %63 {offsets = [0, 1, 0], sizes = [4, 4, 32], strides = [1, 1, 1]} : vector<6x6x32xf32> to vector<4x4x32xf32>
    %66 = vector.extract_strided_slice %63 {offsets = [0, 2, 0], sizes = [4, 4, 32], strides = [1, 1, 1]} : vector<6x6x32xf32> to vector<4x4x32xf32>
    %67 = vector.extract_strided_slice %63 {offsets = [1, 0, 0], sizes = [4, 4, 32], strides = [1, 1, 1]} : vector<6x6x32xf32> to vector<4x4x32xf32>
    %68 = vector.extract_strided_slice %63 {offsets = [1, 1, 0], sizes = [4, 4, 32], strides = [1, 1, 1]} : vector<6x6x32xf32> to vector<4x4x32xf32>
    %69 = vector.extract_strided_slice %63 {offsets = [1, 2, 0], sizes = [4, 4, 32], strides = [1, 1, 1]} : vector<6x6x32xf32> to vector<4x4x32xf32>
    %70 = vector.extract_strided_slice %63 {offsets = [2, 0, 0], sizes = [4, 4, 32], strides = [1, 1, 1]} : vector<6x6x32xf32> to vector<4x4x32xf32>
    %71 = vector.extract_strided_slice %63 {offsets = [2, 1, 0], sizes = [4, 4, 32], strides = [1, 1, 1]} : vector<6x6x32xf32> to vector<4x4x32xf32>
    %72 = vector.extract_strided_slice %63 {offsets = [2, 2, 0], sizes = [4, 4, 32], strides = [1, 1, 1]} : vector<6x6x32xf32> to vector<4x4x32xf32>
    %73 = tpu.concatenate %64, %65, %66, %67, %68, %69, %70, %71, %72 in 2 : vector<4x4x32xf32>, vector<4x4x32xf32>, vector<4x4x32xf32>, vector<4x4x32xf32>, vector<4x4x32xf32>, vector<4x4x32xf32>, vector<4x4x32xf32>, vector<4x4x32xf32>, vector<4x4x32xf32> -> vector<4x4x288xf32>
    %74 = vector.shape_cast %73 : vector<4x4x288xf32> to vector<16x288xf32>
    %75 = arith.truncf %74 : vector<16x288xf32> to vector<16x288xbf16>
    %c0_28 = arith.constant 0 : index
    %c0_29 = arith.constant 0 : index
    %76 = vector.load %arg8[%c0_28, %c0_29] : memref<288x32xbf16, #tpu.memory_space<vmem>>, vector<288x32xbf16>
    %cst_30 = arith.constant dense<0.000000e+00> : vector<16x32xf32>
    %77 = tpu.matmul %75, %76, %cst_30 {dimension_numbers = #tpu.dot_dimension_numbers<[1], [0], [0], [1], [0, 0, 1, 1], [], []>} : vector<16x288xbf16>, vector<288x32xbf16>, vector<16x32xf32> -> vector<16x32xf32>
    %c0_31 = arith.constant 0 : index
    %c0_32 = arith.constant 0 : index
    %78 = vector.load %arg9[%c0_31, %c0_32] : memref<1x32xf32, #tpu.memory_space<vmem>>, vector<1x32xf32>
    %79 = vector.broadcast %78 : vector<1x32xf32> to vector<16x32xf32>
    %80 = arith.mulf %77, %79 : vector<16x32xf32>
    %c0_33 = arith.constant 0 : index
    %c0_34 = arith.constant 0 : index
    %81 = vector.load %arg10[%c0_33, %c0_34] : memref<1x32xf32, #tpu.memory_space<vmem>>, vector<1x32xf32>
    %82 = vector.broadcast %81 : vector<1x32xf32> to vector<16x32xf32>
    %83 = arith.addf %80, %82 : vector<16x32xf32>
    %cst_35 = arith.constant 0.000000e+00 : f32
    %84 = vector.broadcast %cst_35 : f32 to vector<16x32xf32>
    %85 = arith.maximumf %83, %84 : vector<16x32xf32>
    %86 = vector.shape_cast %85 : vector<16x32xf32> to vector<2x2x2x2x32xf32>
    %cst_36 = arith.constant dense<0xFF800000> : vector<2x2x2x32xf32>
    %87 = vector.multi_reduction <maximumf>, %86, %cst_36 [3] : vector<2x2x2x2x32xf32> to vector<2x2x2x32xf32>
    %cst_37 = arith.constant dense<0xFF800000> : vector<2x2x32xf32>
    %88 = vector.multi_reduction <maximumf>, %87, %cst_37 [1] : vector<2x2x2x32xf32> to vector<2x2x32xf32>
    %cst_38 = arith.constant 0.000000e+00 : f32
    %89 = vector.broadcast %cst_38 : f32 to vector<1x2x32xf32>
    %90 = tpu.concatenate %89, %88, %89 in 0 : vector<1x2x32xf32>, vector<2x2x32xf32>, vector<1x2x32xf32> -> vector<4x2x32xf32>
    %cst_39 = arith.constant 0.000000e+00 : f32
    %91 = vector.broadcast %cst_39 : f32 to vector<4x1x32xf32>
    %92 = tpu.concatenate %91, %90, %91 in 1 : vector<4x1x32xf32>, vector<4x2x32xf32>, vector<4x1x32xf32> -> vector<4x4x32xf32>
    %93 = vector.extract_strided_slice %92 {offsets = [0, 0, 0], sizes = [2, 2, 32], strides = [1, 1, 1]} : vector<4x4x32xf32> to vector<2x2x32xf32>
    %94 = vector.extract_strided_slice %92 {offsets = [0, 1, 0], sizes = [2, 2, 32], strides = [1, 1, 1]} : vector<4x4x32xf32> to vector<2x2x32xf32>
    %95 = vector.extract_strided_slice %92 {offsets = [0, 2, 0], sizes = [2, 2, 32], strides = [1, 1, 1]} : vector<4x4x32xf32> to vector<2x2x32xf32>
    %96 = vector.extract_strided_slice %92 {offsets = [1, 0, 0], sizes = [2, 2, 32], strides = [1, 1, 1]} : vector<4x4x32xf32> to vector<2x2x32xf32>
    %97 = vector.extract_strided_slice %92 {offsets = [1, 1, 0], sizes = [2, 2, 32], strides = [1, 1, 1]} : vector<4x4x32xf32> to vector<2x2x32xf32>
    %98 = vector.extract_strided_slice %92 {offsets = [1, 2, 0], sizes = [2, 2, 32], strides = [1, 1, 1]} : vector<4x4x32xf32> to vector<2x2x32xf32>
    %99 = vector.extract_strided_slice %92 {offsets = [2, 0, 0], sizes = [2, 2, 32], strides = [1, 1, 1]} : vector<4x4x32xf32> to vector<2x2x32xf32>
    %100 = vector.extract_strided_slice %92 {offsets = [2, 1, 0], sizes = [2, 2, 32], strides = [1, 1, 1]} : vector<4x4x32xf32> to vector<2x2x32xf32>
    %101 = vector.extract_strided_slice %92 {offsets = [2, 2, 0], sizes = [2, 2, 32], strides = [1, 1, 1]} : vector<4x4x32xf32> to vector<2x2x32xf32>
    %102 = tpu.concatenate %93, %94, %95, %96, %97, %98, %99, %100, %101 in 2 : vector<2x2x32xf32>, vector<2x2x32xf32>, vector<2x2x32xf32>, vector<2x2x32xf32>, vector<2x2x32xf32>, vector<2x2x32xf32>, vector<2x2x32xf32>, vector<2x2x32xf32>, vector<2x2x32xf32> -> vector<2x2x288xf32>
    %103 = vector.shape_cast %102 : vector<2x2x288xf32> to vector<4x288xf32>
    %104 = arith.truncf %103 : vector<4x288xf32> to vector<4x288xbf16>
    %c0_40 = arith.constant 0 : index
    %c0_41 = arith.constant 0 : index
    %105 = vector.load %arg11[%c0_40, %c0_41] : memref<288x32xbf16, #tpu.memory_space<vmem>>, vector<288x32xbf16>
    %cst_42 = arith.constant dense<0.000000e+00> : vector<4x32xf32>
    %106 = tpu.matmul %104, %105, %cst_42 {dimension_numbers = #tpu.dot_dimension_numbers<[1], [0], [0], [1], [0, 0, 1, 1], [], []>} : vector<4x288xbf16>, vector<288x32xbf16>, vector<4x32xf32> -> vector<4x32xf32>
    %c0_43 = arith.constant 0 : index
    %c0_44 = arith.constant 0 : index
    %107 = vector.load %arg12[%c0_43, %c0_44] : memref<1x32xf32, #tpu.memory_space<vmem>>, vector<1x32xf32>
    %108 = vector.broadcast %107 : vector<1x32xf32> to vector<4x32xf32>
    %109 = arith.mulf %106, %108 : vector<4x32xf32>
    %c0_45 = arith.constant 0 : index
    %c0_46 = arith.constant 0 : index
    %110 = vector.load %arg13[%c0_45, %c0_46] : memref<1x32xf32, #tpu.memory_space<vmem>>, vector<1x32xf32>
    %111 = vector.broadcast %110 : vector<1x32xf32> to vector<4x32xf32>
    %112 = arith.addf %109, %111 : vector<4x32xf32>
    %cst_47 = arith.constant 0.000000e+00 : f32
    %113 = vector.broadcast %cst_47 : f32 to vector<4x32xf32>
    %114 = arith.maximumf %112, %113 : vector<4x32xf32>
    %115 = vector.shape_cast %114 : vector<4x32xf32> to vector<1x2x1x2x32xf32>
    %cst_48 = arith.constant dense<0xFF800000> : vector<1x2x1x32xf32>
    %116 = vector.multi_reduction <maximumf>, %115, %cst_48 [3] : vector<1x2x1x2x32xf32> to vector<1x2x1x32xf32>
    %cst_49 = arith.constant dense<0xFF800000> : vector<1x1x32xf32>
    %117 = vector.multi_reduction <maximumf>, %116, %cst_49 [1] : vector<1x2x1x32xf32> to vector<1x1x32xf32>
    %118 = vector.shape_cast %117 : vector<1x1x32xf32> to vector<1x32xf32>
    %119 = arith.truncf %118 : vector<1x32xf32> to vector<1x32xbf16>
    %c0_50 = arith.constant 0 : index
    %c0_51 = arith.constant 0 : index
    %120 = vector.load %arg14[%c0_50, %c0_51] : memref<32x128xbf16, #tpu.memory_space<vmem>>, vector<32x128xbf16>
    %cst_52 = arith.constant dense<0.000000e+00> : vector<1x128xf32>
    %121 = tpu.matmul %119, %120, %cst_52 {dimension_numbers = #tpu.dot_dimension_numbers<[1], [0], [0], [1], [0, 0, 1, 1], [], []>} : vector<1x32xbf16>, vector<32x128xbf16>, vector<1x128xf32> -> vector<1x128xf32>
    %c0_53 = arith.constant 0 : index
    %c0_54 = arith.constant 0 : index
    %122 = vector.load %arg15[%c0_53, %c0_54] : memref<1x128xf32, #tpu.memory_space<vmem>>, vector<1x128xf32>
    %123 = arith.addf %121, %122 : vector<1x128xf32>
    %c0_55 = arith.constant 0 : index
    %c0_56 = arith.constant 0 : index
    %c0_57 = arith.constant 0 : index
    %124 = vector.load %arg16[%c0_55, %c0_56, %c0_57] : memref<1x1x128xf32, #tpu.memory_space<vmem>>, vector<1x1x128xf32>
    %125 = vector.shape_cast %124 : vector<1x1x128xf32> to vector<1x128xf32>
    %126 = vector.shape_cast %123 : vector<1x128xf32> to vector<1x1x128xf32>
    tpu.vector_store %arg16[%c0_55, %c0_56, %c0_57], %126 {strides = array<i32>} : memref<1x1x128xf32, #tpu.memory_space<vmem>>, vector<1x1x128xf32>,
    return
  }
  func.func @transform_0(%arg0: i32) -> (i32, i32, i32, i32) {
    %c0_i32 = arith.constant 0 : i32
    %c0_i32_0 = arith.constant 0 : i32
    %c0_i32_1 = arith.constant 0 : i32
    %c0_i32_2 = arith.constant 0 : i32
    return %arg0, %c0_i32, %c0_i32_0, %c0_i32_1 : i32, i32, i32, i32
  }
  func.func @transform_1(%arg0: i32) -> (i32, i32) {
    %c0_i32 = arith.constant 0 : i32
    %c0_i32_0 = arith.constant 0 : i32
    %c0_i32_1 = arith.constant 0 : i32
    return %c0_i32, %c0_i32_0 : i32, i32
  }
  func.func @transform_2(%arg0: i32) -> (i32, i32) {
    %c0_i32 = arith.constant 0 : i32
    %c0_i32_0 = arith.constant 0 : i32
    %c0_i32_1 = arith.constant 0 : i32
    return %c0_i32, %c0_i32_0 : i32, i32
  }
  func.func @transform_3(%arg0: i32) -> (i32, i32) {
    %c0_i32 = arith.constant 0 : i32
    %c0_i32_0 = arith.constant 0 : i32
    %c0_i32_1 = arith.constant 0 : i32
    return %c0_i32, %c0_i32_0 : i32, i32
  }
  func.func @transform_4(%arg0: i32) -> (i32, i32) {
    %c0_i32 = arith.constant 0 : i32
    %c0_i32_0 = arith.constant 0 : i32
    %c0_i32_1 = arith.constant 0 : i32
    return %c0_i32, %c0_i32_0 : i32, i32
  }
  func.func @transform_5(%arg0: i32) -> (i32, i32) {
    %c0_i32 = arith.constant 0 : i32
    %c0_i32_0 = arith.constant 0 : i32
    %c0_i32_1 = arith.constant 0 : i32
    return %c0_i32, %c0_i32_0 : i32, i32
  }
  func.func @transform_6(%arg0: i32) -> (i32, i32) {
    %c0_i32 = arith.constant 0 : i32
    %c0_i32_0 = arith.constant 0 : i32
    %c0_i32_1 = arith.constant 0 : i32
    return %c0_i32, %c0_i32_0 : i32, i32
  }
  func.func @transform_7(%arg0: i32) -> (i32, i32) {
    %c0_i32 = arith.constant 0 : i32
    %c0_i32_0 = arith.constant 0 : i32
    %c0_i32_1 = arith.constant 0 : i32
    return %c0_i32, %c0_i32_0 : i32, i32
  }
  func.func @transform_8(%arg0: i32) -> (i32, i32) {
    %c0_i32 = arith.constant 0 : i32
    %c0_i32_0 = arith.constant 0 : i32
    %c0_i32_1 = arith.constant 0 : i32
    return %c0_i32, %c0_i32_0 : i32, i32
  }
  func.func @transform_9(%arg0: i32) -> (i32, i32) {
    %c0_i32 = arith.constant 0 : i32
    %c0_i32_0 = arith.constant 0 : i32
    %c0_i32_1 = arith.constant 0 : i32
    return %c0_i32, %c0_i32_0 : i32, i32
  }
  func.func @transform_10(%arg0: i32) -> (i32, i32) {
    %c0_i32 = arith.constant 0 : i32
    %c0_i32_0 = arith.constant 0 : i32
    %c0_i32_1 = arith.constant 0 : i32
    return %c0_i32, %c0_i32_0 : i32, i32
  }
  func.func @transform_11(%arg0: i32) -> (i32, i32) {
    %c0_i32 = arith.constant 0 : i32
    %c0_i32_0 = arith.constant 0 : i32
    %c0_i32_1 = arith.constant 0 : i32
    return %c0_i32, %c0_i32_0 : i32, i32
  }
  func.func @transform_12(%arg0: i32) -> (i32, i32) {
    %c0_i32 = arith.constant 0 : i32
    %c0_i32_0 = arith.constant 0 : i32
    %c0_i32_1 = arith.constant 0 : i32
    return %c0_i32, %c0_i32_0 : i32, i32
  }
  func.func @transform_13(%arg0: i32) -> (i32, i32) {
    %c0_i32 = arith.constant 0 : i32
    %c0_i32_0 = arith.constant 0 : i32
    %c0_i32_1 = arith.constant 0 : i32
    return %c0_i32, %c0_i32_0 : i32, i32
  }
  func.func @transform_14(%arg0: i32) -> (i32, i32) {
    %c0_i32 = arith.constant 0 : i32
    %c0_i32_0 = arith.constant 0 : i32
    %c0_i32_1 = arith.constant 0 : i32
    return %c0_i32, %c0_i32_0 : i32, i32
  }
  func.func @transform_15(%arg0: i32) -> (i32, i32, i32) {
    %c0_i32 = arith.constant 0 : i32
    %c0_i32_0 = arith.constant 0 : i32
    %c0_i32_1 = arith.constant 0 : i32
    return %arg0, %c0_i32, %c0_i32_0 : i32, i32, i32
  }
}

</mosaic_0001>

<llo_original>
// kernel: cnn4_forward.1
$region0: #{cnn4_forward.1}
  #allocation0 [shape = 'u32[]', space=smem, size = 0x4, offset = 0x4, fixed_abs, tag = 'smem constant byte address 0x4 - core index']
  #allocation1 [shape = 'u32[144,128]{1,0:T(1,128)}', space=vmem, size = 0x12000, scoped, tag = 'internal scratch']
  %s0 = inlined_call_operand.vmem [shape: f32[2,16,16,3], index: 0, kind: input, shape index: {}]
  %s1 = inlined_call_operand.vmem [shape: bf16[27,32], index: 1, kind: input, shape index: {}]
  %s2 = inlined_call_operand.vmem [shape: f32[1,32], index: 2, kind: input, shape index: {}]
  %s3 = inlined_call_operand.vmem [shape: f32[1,32], index: 3, kind: input, shape index: {}]
  %s4 = inlined_call_operand.vmem [shape: bf16[288,32], index: 4, kind: input, shape index: {}]
  %s5 = inlined_call_operand.vmem [shape: f32[1,32], index: 5, kind: input, shape index: {}]
  %s6 = inlined_call_operand.vmem [shape: f32[1,32], index: 6, kind: input, shape index: {}]
  %s7 = inlined_call_operand.vmem [shape: bf16[288,32], index: 7, kind: input, shape index: {}]
  %s8 = inlined_call_operand.vmem [shape: f32[1,32], index: 8, kind: input, shape index: {}]
  %s9 = inlined_call_operand.vmem [shape: f32[1,32], index: 9, kind: input, shape index: {}]
  %s10 = inlined_call_operand.vmem [shape: bf16[288,32], index: 10, kind: input, shape index: {}]
  %s11 = inlined_call_operand.vmem [shape: f32[1,32], index: 11, kind: input, shape index: {}]
  %s12 = inlined_call_operand.vmem [shape: f32[1,32], index: 12, kind: input, shape index: {}]
  %s13 = inlined_call_operand.vmem [shape: bf16[32,128], index: 13, kind: input, shape index: {}]
  %s14 = inlined_call_operand.vmem [shape: f32[1,128], index: 14, kind: input, shape index: {}]
  %s15 = inlined_call_operand.hbm [shape: f32[2,1,128], index: 15, kind: output, shape index: {}]
  %s16 = sld [smem:[#allocation0]]
  $region93: #{cnn4_forward.1} parent=0
    _
  %s18 = ssub.s32 1, %s16
  %s19 = scalar_select 0, %s18, %s16
  $region1: #{cnn4_forward.1} parent=0
    #allocation2 [shape = 'u8[1024]{0}', space=vmem, size = 0x400, scoped, tag = 'output window, operand 0']
    #allocation3 [shape = 's32[2]{0}', space=sflag, size = 0x8, scoped, tag = 'scoped memory for cnn4_forward.1']
    %20 = vsyncpa [#allocation3], 0
    %s21 = scalar_lea.sflag [#allocation3], 1
    %22 = vsyncpa %s21, 0
    loop: start=0, step=1, limit=4
    $region2: #{cnn4_forward.1} parent=1 // loop_pre_header
      _
    $region3: #{cnn4_forward.1} parent=1 // loop_header
      %s24 = sphi 0, %s28
      %p25 = scmp.ge.s32.totalorder %s24, 4
      %s34 = sphi 0, %s36
      %s37 = sphi 0, %s34
      %s38 = sphi 0, %s37
      %s54 = sphi 0, %s38
      %s58 = sphi 0, %s58
      %s60 = sphi 0, %s58
      %s61 = sphi 0, %s60
      %s75 = sphi 0, %s61
      %s79 = sphi 0, %s79
      %s81 = sphi 0, %s79
      %s82 = sphi 0, %s81
      %s96 = sphi 0, %s82
      %s100 = sphi 0, %s100
      %s102 = sphi 0, %s100
      %s103 = sphi 0, %s102
      %s117 = sphi 0, %s103
      %s121 = sphi 0, %s121
      %s123 = sphi 0, %s121
      %s124 = sphi 0, %s123
      %s138 = sphi 0, %s124
      %s142 = sphi 0, %s142
      %s144 = sphi 0, %s142
      %s145 = sphi 0, %s144
      %s159 = sphi 0, %s145
      %s163 = sphi 0, %s163
      %s165 = sphi 0, %s163
      %s166 = sphi 0, %s165
      %s180 = sphi 0, %s166
      %s184 = sphi 0, %s184
      %s186 = sphi 0, %s184
      %s187 = sphi 0, %s186
      %s201 = sphi 0, %s187
      %s205 = sphi 0, %s205
      %s207 = sphi 0, %s205
      %s208 = sphi 0, %s207
      %s222 = sphi 0, %s208
      %s226 = sphi 0, %s226
      %s228 = sphi 0, %s226
      %s229 = sphi 0, %s228
      %s243 = sphi 0, %s229
      %s247 = sphi 0, %s247
      %s249 = sphi 0, %s247
      %s250 = sphi 0, %s249
      %s264 = sphi 0, %s250
      %s268 = sphi 0, %s268
      %s270 = sphi 0, %s268
      %s271 = sphi 0, %s270
      %s285 = sphi 0, %s271
      %s289 = sphi 0, %s289
      %s291 = sphi 0, %s289
      %s292 = sphi 0, %s291
      %s306 = sphi 0, %s292
      %s310 = sphi 0, %s310
      %s312 = sphi 0, %s310
      %s313 = sphi 0, %s312
      %s327 = sphi 0, %s313
      %s331 = sphi 0, %s331
      %s333 = sphi 0, %s331
      %s334 = sphi 0, %s333
      %s348 = sphi 0, %s334
      %s354 = sphi 0, %s356
      %s357 = sphi 0, %s354
      %s358 = sphi 0, %s357
      %s374 = sphi 0, %s358
    $region4: #{cnn4_forward.1} parent=1 // loop_header_branch
      %27 = sbr.rel (%p25) target = $region8
    $region5: #{cnn4_forward.1} parent=1 // loop_body
      %s29 = ssub.s32 %s24, 1
      %s30 = ssub.s32 %s24, 2
      %s31 = sadd.s32 %s24, 1
      %s32 = ssub.s32 %s24, %s31
      %p33 = scmp.eq.s32.totalorder %s32, 0
      %s35 = sadd.s32 %s34, 1
      %s36 = scalar_select %p33, %s34, %s35
      %p39 = pneg %p33
      %p40 = scmp.eq.s32.totalorder %s24, 1
      %p41 = por %p39, %p40
      %p42 = scmp.ne.s32.totalorder %s34, %s37
      %p43 = scmp.eq.s32.totalorder %s24, 0
      %p44 = por %p42, %p43
      %p45 = scmp.ne.s32.totalorder %s34, %s37
      %p46 = scmp.eq.s32.totalorder %s29, 1
      %p47 = por %p45, %p46
      %p48 = scmp.ne.s32.totalorder %s37, %s38
      %p49 = scmp.eq.s32.totalorder %s29, 0
      %p50 = por %p48, %p49
      %p51 = scmp.ne.s32.totalorder %s37, %s38
      %p52 = scmp.eq.s32.totalorder %s30, 1
      %p53 = por %p51, %p52
      %p55 = scmp.ne.s32.totalorder %s38, %s54
      %p56 = scmp.eq.s32.totalorder %s30, 0
      %p57 = por %p55, %p56
      %s59 = sadd.s32 %s58, 1
      %p62 = scmp.eq.s32.totalorder %s24, 1
      %p63 = scmp.ne.s32.totalorder %s58, %s60
      %p64 = scmp.eq.s32.totalorder %s24, 0
      %p65 = por %p63, %p64
      %p66 = scmp.ne.s32.totalorder %s58, %s60
      %p67 = scmp.eq.s32.totalorder %s29, 1
      %p68 = por %p66, %p67
      %p69 = scmp.ne.s32.totalorder %s60, %s61
      %p70 = scmp.eq.s32.totalorder %s29, 0
      %p71 = por %p69, %p70
      %p72 = scmp.ne.s32.totalorder %s60, %s61
      %p73 = scmp.eq.s32.totalorder %s30, 1
      %p74 = por %p72, %p73
      %p76 = scmp.ne.s32.totalorder %s61, %s75
      %p77 = scmp.eq.s32.totalorder %s30, 0
      %p78 = por %p76, %p77
      %s80 = sadd.s32 %s79, 1
      %p83 = scmp.eq.s32.totalorder %s24, 1
      %p84 = scmp.ne.s32.totalorder %s79, %s81
      %p85 = scmp.eq.s32.totalorder %s24, 0
      %p86 = por %p84, %p85
      %p87 = scmp.ne.s32.totalorder %s79, %s81
      %p88 = scmp.eq.s32.totalorder %s29, 1
      %p89 = por %p87, %p88
      %p90 = scmp.ne.s32.totalorder %s81, %s82
      %p91 = scmp.eq.s32.totalorder %s29, 0
      %p92 = por %p90, %p91
      %p93 = scmp.ne.s32.totalorder %s81, %s82
      %p94 = scmp.eq.s32.totalorder %s30, 1
      %p95 = por %p93, %p94
      %p97 = scmp.ne.s32.totalorder %s82, %s96
      %p98 = scmp.eq.s32.totalorder %s30, 0
      %p99 = por %p97, %p98
      %s101 = sadd.s32 %s100, 1
      %p104 = scmp.eq.s32.totalorder %s24, 1
      %p105 = scmp.ne.s32.totalorder %s100, %s102
      %p106 = scmp.eq.s32.totalorder %s24, 0
      %p107 = por %p105, %p106
      %p108 = scmp.ne.s32.totalorder %s100, %s102
      %p109 = scmp.eq.s32.totalorder %s29, 1
      %p110 = por %p108, %p109
      %p111 = scmp.ne.s32.totalorder %s102, %s103
      %p112 = scmp.eq.s32.totalorder %s29, 0
      %p113 = por %p111, %p112
      %p114 = scmp.ne.s32.totalorder %s102, %s103
      %p115 = scmp.eq.s32.totalorder %s30, 1
      %p116 = por %p114, %p115
      %p118 = scmp.ne.s32.totalorder %s103, %s117
      %p119 = scmp.eq.s32.totalorder %s30, 0
      %p120 = por %p118, %p119
      %s122 = sadd.s32 %s121, 1
      %p125 = scmp.eq.s32.totalorder %s24, 1
      %p126 = scmp.ne.s32.totalorder %s121, %s123
      %p127 = scmp.eq.s32.totalorder %s24, 0
      %p128 = por %p126, %p127
      %p129 = scmp.ne.s32.totalorder %s121, %s123
      %p130 = scmp.eq.s32.totalorder %s29, 1
      %p131 = por %p129, %p130
      %p132 = scmp.ne.s32.totalorder %s123, %s124
      %p133 = scmp.eq.s32.totalorder %s29, 0
      %p134 = por %p132, %p133
      %p135 = scmp.ne.s32.totalorder %s123, %s124
      %p136 = scmp.eq.s32.totalorder %s30, 1
      %p137 = por %p135, %p136
      %p139 = scmp.ne.s32.totalorder %s124, %s138
      %p140 = scmp.eq.s32.totalorder %s30, 0
      %p141 = por %p139, %p140
      %s143 = sadd.s32 %s142, 1
      %p146 = scmp.eq.s32.totalorder %s24, 1
      %p147 = scmp.ne.s32.totalorder %s142, %s144
      %p148 = scmp.eq.s32.totalorder %s24, 0
      %p149 = por %p147, %p148
      %p150 = scmp.ne.s32.totalorder %s142, %s144
      %p151 = scmp.eq.s32.totalorder %s29, 1
      %p152 = por %p150, %p151
      %p153 = scmp.ne.s32.totalorder %s144, %s145
      %p154 = scmp.eq.s32.totalorder %s29, 0
      %p155 = por %p153, %p154
      %p156 = scmp.ne.s32.totalorder %s144, %s145
      %p157 = scmp.eq.s32.totalorder %s30, 1
      %p158 = por %p156, %p157
      %p160 = scmp.ne.s32.totalorder %s145, %s159
      %p161 = scmp.eq.s32.totalorder %s30, 0
      %p162 = por %p160, %p161
      %s164 = sadd.s32 %s163, 1
      %p167 = scmp.eq.s32.totalorder %s24, 1
      %p168 = scmp.ne.s32.totalorder %s163, %s165
      %p169 = scmp.eq.s32.totalorder %s24, 0
      %p170 = por %p168, %p169
      %p171 = scmp.ne.s32.totalorder %s163, %s165
      %p172 = scmp.eq.s32.totalorder %s29, 1
      %p173 = por %p171, %p172
      %p174 = scmp.ne.s32.totalorder %s165, %s166
      %p175 = scmp.eq.s32.totalorder %s29, 0
      %p176 = por %p174, %p175
      %p177 = scmp.ne.s32.totalorder %s165, %s166
      %p178 = scmp.eq.s32.totalorder %s30, 1
      %p179 = por %p177, %p178
      %p181 = scmp.ne.s32.totalorder %s166, %s180
      %p182 = scmp.eq.s32.totalorder %s30, 0
      %p183 = por %p181, %p182
      %s185 = sadd.s32 %s184, 1
      %p188 = scmp.eq.s32.totalorder %s24, 1
      %p189 = scmp.ne.s32.totalorder %s184, %s186
      %p190 = scmp.eq.s32.totalorder %s24, 0
      %p191 = por %p189, %p190
      %p192 = scmp.ne.s32.totalorder %s184, %s186
      %p193 = scmp.eq.s32.totalorder %s29, 1
      %p194 = por %p192, %p193
      %p195 = scmp.ne.s32.totalorder %s186, %s187
      %p196 = scmp.eq.s32.totalorder %s29, 0
      %p197 = por %p195, %p196
      %p198 = scmp.ne.s32.totalorder %s186, %s187
      %p199 = scmp.eq.s32.totalorder %s30, 1
      %p200 = por %p198, %p199
      %p202 = scmp.ne.s32.totalorder %s187, %s201
      %p203 = scmp.eq.s32.totalorder %s30, 0
      %p204 = por %p202, %p203
      %s206 = sadd.s32 %s205, 1
      %p209 = scmp.eq.s32.totalorder %s24, 1
      %p210 = scmp.ne.s32.totalorder %s205, %s207
      %p211 = scmp.eq.s32.totalorder %s24, 0
      %p212 = por %p210, %p211
      %p213 = scmp.ne.s32.totalorder %s205, %s207
      %p214 = scmp.eq.s32.totalorder %s29, 1
      %p215 = por %p213, %p214
      %p216 = scmp.ne.s32.totalorder %s207, %s208
      %p217 = scmp.eq.s32.totalorder %s29, 0
      %p218 = por %p216, %p217
      %p219 = scmp.ne.s32.totalorder %s207, %s208
      %p220 = scmp.eq.s32.totalorder %s30, 1
      %p221 = por %p219, %p220
      %p223 = scmp.ne.s32.totalorder %s208, %s222
      %p224 = scmp.eq.s32.totalorder %s30, 0
      %p225 = por %p223, %p224
      %s227 = sadd.s32 %s226, 1
      %p230 = scmp.eq.s32.totalorder %s24, 1
      %p231 = scmp.ne.s32.totalorder %s226, %s228
      %p232 = scmp.eq.s32.totalorder %s24, 0
      %p233 = por %p231, %p232
      %p234 = scmp.ne.s32.totalorder %s226, %s228
      %p235 = scmp.eq.s32.totalorder %s29, 1
      %p236 = por %p234, %p235
      %p237 = scmp.ne.s32.totalorder %s228, %s229
      %p238 = scmp.eq.s32.totalorder %s29, 0
      %p239 = por %p237, %p238
      %p240 = scmp.ne.s32.totalorder %s228, %s229
      %p241 = scmp.eq.s32.totalorder %s30, 1
      %p242 = por %p240, %p241
      %p244 = scmp.ne.s32.totalorder %s229, %s243
      %p245 = scmp.eq.s32.totalorder %s30, 0
      %p246 = por %p244, %p245
      %s248 = sadd.s32 %s247, 1
      %p251 = scmp.eq.s32.totalorder %s24, 1
      %p252 = scmp.ne.s32.totalorder %s247, %s249
      %p253 = scmp.eq.s32.totalorder %s24, 0
      %p254 = por %p252, %p253
      %p255 = scmp.ne.s32.totalorder %s247, %s249
      %p256 = scmp.eq.s32.totalorder %s29, 1
      %p257 = por %p255, %p256
      %p258 = scmp.ne.s32.totalorder %s249, %s250
      %p259 = scmp.eq.s32.totalorder %s29, 0
      %p260 = por %p258, %p259
      %p261 = scmp.ne.s32.totalorder %s249, %s250
      %p262 = scmp.eq.s32.totalorder %s30, 1
      %p263 = por %p261, %p262
      %p265 = scmp.ne.s32.totalorder %s250, %s264
      %p266 = scmp.eq.s32.totalorder %s30, 0
      %p267 = por %p265, %p266
      %s269 = sadd.s32 %s268, 1
      %p272 = scmp.eq.s32.totalorder %s24, 1
      %p273 = scmp.ne.s32.totalorder %s268, %s270
      %p274 = scmp.eq.s32.totalorder %s24, 0
      %p275 = por %p273, %p274
      %p276 = scmp.ne.s32.totalorder %s268, %s270
      %p277 = scmp.eq.s32.totalorder %s29, 1
      %p278 = por %p276, %p277
      %p279 = scmp.ne.s32.totalorder %s270, %s271
      %p280 = scmp.eq.s32.totalorder %s29, 0
      %p281 = por %p279, %p280
      %p282 = scmp.ne.s32.totalorder %s270, %s271
      %p283 = scmp.eq.s32.totalorder %s30, 1
      %p284 = por %p282, %p283
      %p286 = scmp.ne.s32.totalorder %s271, %s285
      %p287 = scmp.eq.s32.totalorder %s30, 0
      %p288 = por %p286, %p287
      %s290 = sadd.s32 %s289, 1
      %p293 = scmp.eq.s32.totalorder %s24, 1
      %p294 = scmp.ne.s32.totalorder %s289, %s291
      %p295 = scmp.eq.s32.totalorder %s24, 0
      %p296 = por %p294, %p295
      %p297 = scmp.ne.s32.totalorder %s289, %s291
      %p298 = scmp.eq.s32.totalorder %s29, 1
      %p299 = por %p297, %p298
      %p300 = scmp.ne.s32.totalorder %s291, %s292
      %p301 = scmp.eq.s32.totalorder %s29, 0
      %p302 = por %p300, %p301
      %p303 = scmp.ne.s32.totalorder %s291, %s292
      %p304 = scmp.eq.s32.totalorder %s30, 1
      %p305 = por %p303, %p304
      %p307 = scmp.ne.s32.totalorder %s292, %s306
      %p308 = scmp.eq.s32.totalorder %s30, 0
      %p309 = por %p307, %p308
      %s311 = sadd.s32 %s310, 1
      %p314 = scmp.eq.s32.totalorder %s24, 1
      %p315 = scmp.ne.s32.totalorder %s310, %s312
      %p316 = scmp.eq.s32.totalorder %s24, 0
      %p317 = por %p315, %p316
      %p318 = scmp.ne.s32.totalorder %s310, %s312
      %p319 = scmp.eq.s32.totalorder %s29, 1
      %p320 = por %p318, %p319
      %p321 = scmp.ne.s32.totalorder %s312, %s313
      %p322 = scmp.eq.s32.totalorder %s29, 0
      %p323 = por %p321, %p322
      %p324 = scmp.ne.s32.totalorder %s312, %s313
      %p325 = scmp.eq.s32.totalorder %s30, 1
      %p326 = por %p324, %p325
      %p328 = scmp.ne.s32.totalorder %s313, %s327
      %p329 = scmp.eq.s32.totalorder %s30, 0
      %p330 = por %p328, %p329
      %s332 = sadd.s32 %s331, 1
      %p335 = scmp.eq.s32.totalorder %s24, 1
      %p336 = scmp.ne.s32.totalorder %s331, %s333
      %p337 = scmp.eq.s32.totalorder %s24, 0
      %p338 = por %p336, %p337
      %p339 = scmp.ne.s32.totalorder %s331, %s333
      %p340 = scmp.eq.s32.totalorder %s29, 1
      %p341 = por %p339, %p340
      %p342 = scmp.ne.s32.totalorder %s333, %s334
      %p343 = scmp.eq.s32.totalorder %s29, 0
      %p344 = por %p342, %p343
      %p345 = scmp.ne.s32.totalorder %s333, %s334
      %p346 = scmp.eq.s32.totalorder %s30, 1
      %p347 = por %p345, %p346
      %p349 = scmp.ne.s32.totalorder %s334, %s348
      %p350 = scmp.eq.s32.totalorder %s30, 0
      %p351 = por %p349, %p350
      %s352 = ssub.s32 %s24, %s31
      %p353 = scmp.eq.s32.totalorder %s352, 0
      %s355 = sadd.s32 %s354, 1
      %s356 = scalar_select %p353, %s354, %s355
      %p359 = pneg %p353
      %p360 = scmp.eq.s32.totalorder %s24, 1
      %p361 = por %p359, %p360
      %p362 = scmp.ne.s32.totalorder %s354, %s357
      %p363 = scmp.eq.s32.totalorder %s24, 0
      %p364 = por %p362, %p363
      %p365 = scmp.ne.s32.totalorder %s354, %s357
      %p366 = scmp.eq.s32.totalorder %s29, 1
      %p367 = por %p365, %p366
      %p368 = scmp.ne.s32.totalorder %s357, %s358
      %p369 = scmp.eq.s32.totalorder %s29, 0
      %p370 = por %p368, %p369
      %p371 = scmp.ne.s32.totalorder %s357, %s358
      %p372 = scmp.eq.s32.totalorder %s30, 1
      %p373 = por %p371, %p372
      %p375 = scmp.ne.s32.totalorder %s358, %s374
      %p376 = scmp.eq.s32.totalorder %s30, 0
      %p377 = por %p375, %p376
      %p378 = scmp.le.s32.totalorder 1, %s24
      %p379 = scmp.lt.s32.totalorder %s24, 3
      %p380 = pnand %p378, %p379
      %p381 = pneg %p380
      // Predicated region
      $region9: #{cnn4_forward.1} parent=5 // pred_check
        _
      $region10: #{cnn4_forward.1} parent=5 // pred_check_branch
        %383 = sbr.rel (%p380) target = $region12
      $region11: #{cnn4_forward.1} parent=5 // pred_region
        %s384 = ssub.s32 %s24, 1
        // Predicated region
        $region13: #{cnn4_forward.1} parent=11 // pred_check
          %p385 = pneg %p71
        $region14: #{cnn4_forward.1} parent=11 // pred_check_branch
          %387 = sbr.rel (%p385) target = $region16
        $region15: #{cnn4_forward.1} parent=11 // pred_region
          _
        $region16: #{cnn4_forward.1} parent=11 // pred_fallthru
          _
        // Predicated region
        $region17: #{cnn4_forward.1} parent=11 // pred_check
          %p388 = pneg %p92
        $region18: #{cnn4_forward.1} parent=11 // pred_check_branch
          %390 = sbr.rel (%p388) target = $region20
        $region19: #{cnn4_forward.1} parent=11 // pred_region
          _
        $region20: #{cnn4_forward.1} parent=11 // pred_fallthru
          _
        // Predicated region
        $region21: #{cnn4_forward.1} parent=11 // pred_check
          %p391 = pneg %p113
        $region22: #{cnn4_forward.1} parent=11 // pred_check_branch
          %393 = sbr.rel (%p391) target = $region24
        $region23: #{cnn4_forward.1} parent=11 // pred_region
          _
        $region24: #{cnn4_forward.1} parent=11 // pred_fallthru
          _
        // Predicated region
        $region25: #{cnn4_forward.1} parent=11 // pred_check
          %p394 = pneg %p134
        $region26: #{cnn4_forward.1} parent=11 // pred_check_branch
          %396 = sbr.rel (%p394) target = $region28
        $region27: #{cnn4_forward.1} parent=11 // pred_region
          _
        $region28: #{cnn4_forward.1} parent=11 // pred_fallthru
          _
        // Predicated region
        $region29: #{cnn4_forward.1} parent=11 // pred_check
          %p397 = pneg %p155
        $region30: #{cnn4_forward.1} parent=11 // pred_check_branch
          %399 = sbr.rel (%p397) target = $region32
        $region31: #{cnn4_forward.1} parent=11 // pred_region
          _
        $region32: #{cnn4_forward.1} parent=11 // pred_fallthru
          _
        // Predicated region
        $region33: #{cnn4_forward.1} parent=11 // pred_check
          %p400 = pneg %p176
        $region34: #{cnn4_forward.1} parent=11 // pred_check_branch
          %402 = sbr.rel (%p400) target = $region36
        $region35: #{cnn4_forward.1} parent=11 // pred_region
          _
        $region36: #{cnn4_forward.1} parent=11 // pred_fallthru
          _
        // Predicated region
        $region37: #{cnn4_forward.1} parent=11 // pred_check
          %p403 = pneg %p197
        $region38: #{cnn4_forward.1} parent=11 // pred_check_branch
          %405 = sbr.rel (%p403) target = $region40
        $region39: #{cnn4_forward.1} parent=11 // pred_region
          _
        $region40: #{cnn4_forward.1} parent=11 // pred_fallthru
          _
        // Predicated region
        $region41: #{cnn4_forward.1} parent=11 // pred_check
          %p406 = pneg %p218
        $region42: #{cnn4_forward.1} parent=11 // pred_check_branch
          %408 = sbr.rel (%p406) target = $region44
        $region43: #{cnn4_forward.1} parent=11 // pred_region
          _
        $region44: #{cnn4_forward.1} parent=11 // pred_fallthru
          _
        // Predicated region
        $region45: #{cnn4_forward.1} parent=11 // pred_check
          %p409 = pneg %p239
        $region46: #{cnn4_forward.1} parent=11 // pred_check_branch
          %411 = sbr.rel (%p409) target = $region48
        $region47: #{cnn4_forward.1} parent=11 // pred_region
          _
        $region48: #{cnn4_forward.1} parent=11 // pred_fallthru
          _
        // Predicated region
        $region49: #{cnn4_forward.1} parent=11 // pred_check
          %p412 = pneg %p260
        $region50: #{cnn4_forward.1} parent=11 // pred_check_branch
          %414 = sbr.rel (%p412) target = $region52
        $region51: #{cnn4_forward.1} parent=11 // pred_region
          _
        $region52: #{cnn4_forward.1} parent=11 // pred_fallthru
          _
        // Predicated region
        $region53: #{cnn4_forward.1} parent=11 // pred_check
          %p415 = pneg %p281
        $region54: #{cnn4_forward.1} parent=11 // pred_check_branch
          %417 = sbr.rel (%p415) target = $region56
        $region55: #{cnn4_forward.1} parent=11 // pred_region
          _
        $region56: #{cnn4_forward.1} parent=11 // pred_fallthru
          _
        // Predicated region
        $region57: #{cnn4_forward.1} parent=11 // pred_check
          %p418 = pneg %p302
        $region58: #{cnn4_forward.1} parent=11 // pred_check_branch
          %420 = sbr.rel (%p418) target = $region60
        $region59: #{cnn4_forward.1} parent=11 // pred_region
          _
        $region60: #{cnn4_forward.1} parent=11 // pred_fallthru
          _
        // Predicated region
        $region61: #{cnn4_forward.1} parent=11 // pred_check
          %p421 = pneg %p323
        $region62: #{cnn4_forward.1} parent=11 // pred_check_branch
          %423 = sbr.rel (%p421) target = $region64
        $region63: #{cnn4_forward.1} parent=11 // pred_region
          _
        $region64: #{cnn4_forward.1} parent=11 // pred_fallthru
          _
        // Predicated region
        $region65: #{cnn4_forward.1} parent=11 // pred_check
          %p424 = pneg %p344
        $region66: #{cnn4_forward.1} parent=11 // pred_check_branch
          %426 = sbr.rel (%p424) target = $region68
        $region67: #{cnn4_forward.1} parent=11 // pred_region
          _
        $region68: #{cnn4_forward.1} parent=11 // pred_fallthru
          _
      $region12: #{cnn4_forward.1} parent=5 // pred_fallthru
        _
      %p427 = scmp.lt.s32.totalorder %s24, 2
      // Predicated region
      $region69: #{cnn4_forward.1} parent=5 // pred_check
        %p428 = pneg %p427
      $region70: #{cnn4_forward.1} parent=5 // pred_check_branch
        %430 = sbr.rel (%p428) target = $region72
      $region71: #{cnn4_forward.1} parent=5 // pred_region
        // Predicated region
        $region73: #{cnn4_forward.1} parent=71 // pred_check
          %p431 = pneg %p44
        $region74: #{cnn4_forward.1} parent=71 // pred_check_branch
          %433 = sbr.rel (%p431) target = $region76
        $region75: #{cnn4_forward.1} parent=71 // pred_region
          %p434 = scmp.lt.s32.totalorder %s24, 1
          %s435 = scalar_select %p434, %s24, 1
          %s436 = smul.addr %s435, 32
          %s437 = smul.addr %s436, 8
          %s438 = scalar_lea.vmem %s0, %s437
        $region76: #{cnn4_forward.1} parent=71 // pred_fallthru
          _
      $region72: #{cnn4_forward.1} parent=5 // pred_fallthru
        _
      %p439 = scmp.le.s32.totalorder 1, %s24
      %p440 = scmp.lt.s32.totalorder %s24, 3
      %p441 = pnand %p439, %p440
      %p442 = pneg %p441
      // Predicated region
      $region77: #{cnn4_forward.1} parent=5 // pred_check
        _
      $region78: #{cnn4_forward.1} parent=5 // pred_check_branch
        %444 = sbr.rel (%p441) target = $region80
      $region79: #{cnn4_forward.1} parent=5 // pred_region
        %s445 = ssub.s32 %s24, 1
        %p446 = scmp.lt.s32.totalorder %s29, 1
        %s447 = scalar_select %p446, %s29, 1
        %s448 = smul.addr %s447, 32
        %s449 = smul.addr %s448, 8
        %s450 = scalar_lea.vmem %s0, %s449
        %p451 = pneg %p50
        %p452 = pneg %p47
        %p453 = pneg %p71
        %p454 = pneg %p68
        %p455 = pneg %p92
        %p456 = pneg %p89
        %p457 = pneg %p113
        %p458 = pneg %p110
        %p459 = pneg %p134
        %p460 = pneg %p131
        %p461 = pneg %p155
        %p462 = pneg %p152
        %p463 = pneg %p176
        %p464 = pneg %p173
        %p465 = pneg %p197
        %p466 = pneg %p194
        %p467 = pneg %p218
        %p468 = pneg %p215
        %p469 = pneg %p239
        %p470 = pneg %p236
        %p471 = pneg %p260
        %p472 = pneg %p257
        %p473 = pneg %p281
        %p474 = pneg %p278
        %p475 = pneg %p302
        %p476 = pneg %p299
        %p477 = pneg %p323
        %p478 = pneg %p320
        %p479 = pneg %p344
        %p480 = pneg %p341
        %p481 = pneg %p370
        %p482 = pneg %p367
        %s483 = sand.u32 %s357, 1
        %s484 = scalar_lea.sflag [#allocation3], %s483
        %s485 = sand.u32 %s357, 1
        %s486 = scalar_lea.vmem [#allocation2], %s485
        %p487 = scmp.lt.s32.totalorder %s29, 1
        %s488 = scalar_select %p487, %s29, 1
        %s489 = smul.addr %s488, 32
        %s490 = smul.addr %s489, 8
        %s491 = scalar_lea.vmem %s0, %s490
        %v493 = vld [vmem:[%s491] sm:$0xff]
        %v494 = vld [vmem:[%s491 + $0x8] sm:$0xff]
        %v495 = vld [vmem:[%s491 + $0x10] sm:$0xff]
        %v496 = vld [vmem:[%s491 + $0x18] sm:$0xff]
        %v497 = vld [vmem:[%s491 + $0x20] sm:$0xff]
        %v498 = vld [vmem:[%s491 + $0x28] sm:$0xff]
        %v499 = vld [vmem:[%s491 + $0x30] sm:$0xff]
        %v500 = vld [vmem:[%s491 + $0x38] sm:$0xff]
        %v501 = vld [vmem:[%s491 + $0x40] sm:$0xff]
        %v502 = vld [vmem:[%s491 + $0x48] sm:$0xff]
        %v503 = vld [vmem:[%s491 + $0x50] sm:$0xff]
        %v504 = vld [vmem:[%s491 + $0x58] sm:$0xff]
        %v505 = vld [vmem:[%s491 + $0x60] sm:$0xff]
        %v506 = vld [vmem:[%s491 + $0x68] sm:$0xff]
        %v507 = vld [vmem:[%s491 + $0x70] sm:$0xff]
        %v508 = vld [vmem:[%s491 + $0x78] sm:$0xff]
        %v509 = vld [vmem:[%s491 + $0x80] sm:$0xff]
        %v510 = vld [vmem:[%s491 + $0x88] sm:$0xff]
        %v511 = vld [vmem:[%s491 + $0x90] sm:$0xff]
        %v512 = vld [vmem:[%s491 + $0x98] sm:$0xff]
        %v513 = vld [vmem:[%s491 + $0xa0] sm:$0xff]
        %v514 = vld [vmem:[%s491 + $0xa8] sm:$0xff]
        %v515 = vld [vmem:[%s491 + $0xb0] sm:$0xff]
        %v516 = vld [vmem:[%s491 + $0xb8] sm:$0xff]
        %v517 = vld [vmem:[%s491 + $0xc0] sm:$0xff]
        %v518 = vld [vmem:[%s491 + $0xc8] sm:$0xff]
        %v519 = vld [vmem:[%s491 + $0xd0] sm:$0xff]
        %v520 = vld [vmem:[%s491 + $0xd8] sm:$0xff]
        %v521 = vld [vmem:[%s491 + $0xe0] sm:$0xff]
        %v522 = vld [vmem:[%s491 + $0xe8] sm:$0xff]
        %v523 = vld [vmem:[%s491 + $0xf0] sm:$0xff]
        %v524 = vld [vmem:[%s491 + $0xf8] sm:$0xff]
        %vm558 = vcmask 1040384
        %v559 = vrot.slane 0.0, 7
        %v560 = vsel %vm558, %v559, %v559
        %v561 = vrot.slane %v493, 7
        %v562 = vrot.slane %v494, 7
        %v563 = vsel %vm558, %v561, %v562
        %v564 = vrot.slane %v495, 7
        %v565 = vrot.slane %v496, 7
        %v566 = vsel %vm558, %v564, %v565
        %v567 = vrot.slane %v497, 7
        %v568 = vrot.slane %v498, 7
        %v569 = vsel %vm558, %v567, %v568
        %v570 = vrot.slane %v499, 7
        %v571 = vrot.slane %v500, 7
        %v572 = vsel %vm558, %v570, %v571
        %v573 = vrot.slane %v501, 7
        %v574 = vrot.slane %v502, 7
        %v575 = vsel %vm558, %v573, %v574
        %v576 = vrot.slane %v503, 7
        %v577 = vrot.slane %v504, 7
        %v578 = vsel %vm558, %v576, %v577
        %v579 = vrot.slane %v505, 7
        %v580 = vrot.slane %v506, 7
        %v581 = vsel %vm558, %v579, %v580
        %v582 = vrot.slane %v507, 7
        %v583 = vrot.slane %v508, 7
        %v584 = vsel %vm558, %v582, %v583
        %v585 = vrot.slane %v509, 7
        %v586 = vrot.slane %v510, 7
        %v587 = vsel %vm558, %v585, %v586
        %v588 = vrot.slane %v511, 7
        %v589 = vrot.slane %v512, 7
        %v590 = vsel %vm558, %v588, %v589
        %v591 = vrot.slane %v513, 7
        %v592 = vrot.slane %v514, 7
        %v593 = vsel %vm558, %v591, %v592
        %v594 = vrot.slane %v515, 7
        %v595 = vrot.slane %v516, 7
        %v596 = vsel %vm558, %v594, %v595
        %v597 = vrot.slane %v517, 7
        %v598 = vrot.slane %v518, 7
        %v599 = vsel %vm558, %v597, %v598
        %v600 = vrot.slane %v519, 7
        %v601 = vrot.slane %v520, 7
        %v602 = vsel %vm558, %v600, %v601
        %v603 = vrot.slane %v521, 7
        %v604 = vrot.slane %v522, 7
        %v605 = vsel %vm558, %v603, %v604
        %v606 = vrot.slane %v523, 7
        %v607 = vrot.slane %v524, 7
        %v608 = vsel %vm558, %v606, %v607
        %v658 = vsel %vm558, 0.0, %v559
        %v659 = vsel %vm558, 0.0, %v561
        %v660 = vsel %vm558, 0.0, %v564
        %v661 = vsel %vm558, 0.0, %v567
        %v662 = vsel %vm558, 0.0, %v570
        %v663 = vsel %vm558, 0.0, %v573
        %v664 = vsel %vm558, 0.0, %v576
        %v665 = vsel %vm558, 0.0, %v579
        %v666 = vsel %vm558, 0.0, %v582
        %v667 = vsel %vm558, 0.0, %v585
        %v668 = vsel %vm558, 0.0, %v588
        %v669 = vsel %vm558, 0.0, %v591
        %v670 = vsel %vm558, 0.0, %v594
        %v671 = vsel %vm558, 0.0, %v597
        %v672 = vsel %vm558, 0.0, %v600
        %v673 = vsel %vm558, 0.0, %v603
        %v674 = vsel %vm558, 0.0, %v606
        %v675 = vsel %vm558, %v559, 0.0
        %v676 = vsel %vm558, %v562, 0.0
        %v677 = vsel %vm558, %v565, 0.0
        %v678 = vsel %vm558, %v568, 0.0
        %v679 = vsel %vm558, %v571, 0.0
        %v680 = vsel %vm558, %v574, 0.0
        %v681 = vsel %vm558, %v577, 0.0
        %v682 = vsel %vm558, %v580, 0.0
        %v683 = vsel %vm558, %v583, 0.0
        %v684 = vsel %vm558, %v586, 0.0
        %v685 = vsel %vm558, %v589, 0.0
        %v686 = vsel %vm558, %v592, 0.0
        %v687 = vsel %vm558, %v595, 0.0
        %v688 = vsel %vm558, %v598, 0.0
        %v689 = vsel %vm558, %v601, 0.0
        %v690 = vsel %vm558, %v604, 0.0
        %v691 = vsel %vm558, %v607, 0.0
        %vm724 = vcmask 1046528
        %v725 = vrot.slane %v658, 1
        %v726 = vrot.slane %v560, 1
        %v727 = vsel %vm724, %v725, %v726
        %v728 = vrot.slane %v675, 1
        %v729 = vsel %vm724, %v726, %v728
        %v730 = vrot.slane %v659, 1
        %v731 = vrot.slane %v563, 1
        %v732 = vsel %vm724, %v730, %v731
        %v733 = vrot.slane %v676, 1
        %v734 = vsel %vm724, %v731, %v733
        %v735 = vrot.slane %v660, 1
        %v736 = vrot.slane %v566, 1
        %v737 = vsel %vm724, %v735, %v736
        %v738 = vrot.slane %v677, 1
        %v739 = vsel %vm724, %v736, %v738
        %v740 = vrot.slane %v661, 1
        %v741 = vrot.slane %v569, 1
        %v742 = vsel %vm724, %v740, %v741
        %v743 = vrot.slane %v678, 1
        %v744 = vsel %vm724, %v741, %v743
        %v745 = vrot.slane %v662, 1
        %v746 = vrot.slane %v572, 1
        %v747 = vsel %vm724, %v745, %v746
        %v748 = vrot.slane %v679, 1
        %v749 = vsel %vm724, %v746, %v748
        %v750 = vrot.slane %v663, 1
        %v751 = vrot.slane %v575, 1
        %v752 = vsel %vm724, %v750, %v751
        %v753 = vrot.slane %v680, 1
        %v754 = vsel %vm724, %v751, %v753
        %v755 = vrot.slane %v664, 1
        %v756 = vrot.slane %v578, 1
        %v757 = vsel %vm724, %v755, %v756
        %v758 = vrot.slane %v681, 1
        %v759 = vsel %vm724, %v756, %v758
        %v760 = vrot.slane %v665, 1
        %v761 = vrot.slane %v581, 1
        %v762 = vsel %vm724, %v760, %v761
        %v763 = vrot.slane %v682, 1
        %v764 = vsel %vm724, %v761, %v763
        %v765 = vrot.slane %v666, 1
        %v766 = vrot.slane %v584, 1
        %v767 = vsel %vm724, %v765, %v766
        %v768 = vrot.slane %v683, 1
        %v769 = vsel %vm724, %v766, %v768
        %v770 = vrot.slane %v667, 1
        %v771 = vrot.slane %v587, 1
        %v772 = vsel %vm724, %v770, %v771
        %v773 = vrot.slane %v684, 1
        %v774 = vsel %vm724, %v771, %v773
        %v775 = vrot.slane %v668, 1
        %v776 = vrot.slane %v590, 1
        %v777 = vsel %vm724, %v775, %v776
        %v778 = vrot.slane %v685, 1
        %v779 = vsel %vm724, %v776, %v778
        %v780 = vrot.slane %v669, 1
        %v781 = vrot.slane %v593, 1
        %v782 = vsel %vm724, %v780, %v781
        %v783 = vrot.slane %v686, 1
        %v784 = vsel %vm724, %v781, %v783
        %v785 = vrot.slane %v670, 1
        %v786 = vrot.slane %v596, 1
        %v787 = vsel %vm724, %v785, %v786
        %v788 = vrot.slane %v687, 1
        %v789 = vsel %vm724, %v786, %v788
        %v790 = vrot.slane %v671, 1
        %v791 = vrot.slane %v599, 1
        %v792 = vsel %vm724, %v790, %v791
        %v793 = vrot.slane %v688, 1
        %v794 = vsel %vm724, %v791, %v793
        %v795 = vrot.slane %v672, 1
        %v796 = vrot.slane %v602, 1
        %v797 = vsel %vm724, %v795, %v796
        %v798 = vrot.slane %v689, 1
        %v799 = vsel %vm724, %v796, %v798
        %v800 = vrot.slane %v673, 1
        %v801 = vrot.slane %v605, 1
        %v802 = vsel %vm724, %v800, %v801
        %v803 = vrot.slane %v690, 1
        %v804 = vsel %vm724, %v801, %v803
        %805 = vrot.lane.b32.xlu0 %v727, 3
        %v806 = vpop.permute.xlu0 %805
        %807 = vrot.lane.b32.xlu0 %v729, 3
        %v808 = vpop.permute.xlu0 %807
        %809 = vrot.lane.b32.xlu0 %v732, 3
        %v810 = vpop.permute.xlu0 %809
        %811 = vrot.lane.b32.xlu0 %v734, 3
        %v812 = vpop.permute.xlu0 %811
        %813 = vrot.lane.b32.xlu0 %v737, 3
        %v814 = vpop.permute.xlu0 %813
        %815 = vrot.lane.b32.xlu0 %v739, 3
        %v816 = vpop.permute.xlu0 %815
        %817 = vrot.lane.b32.xlu0 %v742, 3
        %v818 = vpop.permute.xlu0 %817
        %819 = vrot.lane.b32.xlu0 %v744, 3
        %v820 = vpop.permute.xlu0 %819
        %821 = vrot.lane.b32.xlu0 %v747, 3
        %v822 = vpop.permute.xlu0 %821
        %823 = vrot.lane.b32.xlu0 %v749, 3
        %v824 = vpop.permute.xlu0 %823
        %825 = vrot.lane.b32.xlu0 %v752, 3
        %v826 = vpop.permute.xlu0 %825
        %827 = vrot.lane.b32.xlu0 %v754, 3
        %v828 = vpop.permute.xlu0 %827
        %829 = vrot.lane.b32.xlu0 %v757, 3
        %v830 = vpop.permute.xlu0 %829
        %831 = vrot.lane.b32.xlu0 %v759, 3
        %v832 = vpop.permute.xlu0 %831
        %833 = vrot.lane.b32.xlu0 %v762, 3
        %v834 = vpop.permute.xlu0 %833
        %835 = vrot.lane.b32.xlu0 %v764, 3
        %v836 = vpop.permute.xlu0 %835
        %837 = vrot.lane.b32.xlu0 %v767, 3
        %v838 = vpop.permute.xlu0 %837
        %839 = vrot.lane.b32.xlu0 %v769, 3
        %v840 = vpop.permute.xlu0 %839
        %841 = vrot.lane.b32.xlu0 %v772, 3
        %v842 = vpop.permute.xlu0 %841
        %843 = vrot.lane.b32.xlu0 %v774, 3
        %v844 = vpop.permute.xlu0 %843
        %845 = vrot.lane.b32.xlu0 %v777, 3
        %v846 = vpop.permute.xlu0 %845
        %847 = vrot.lane.b32.xlu0 %v779, 3
        %v848 = vpop.permute.xlu0 %847
        %849 = vrot.lane.b32.xlu0 %v782, 3
        %v850 = vpop.permute.xlu0 %849
        %851 = vrot.lane.b32.xlu0 %v784, 3
        %v852 = vpop.permute.xlu0 %851
        %853 = vrot.lane.b32.xlu0 %v787, 3
        %v854 = vpop.permute.xlu0 %853
        %855 = vrot.lane.b32.xlu0 %v789, 3
        %v856 = vpop.permute.xlu0 %855
        %857 = vrot.lane.b32.xlu0 %v792, 3
        %v858 = vpop.permute.xlu0 %857
        %859 = vrot.lane.b32.xlu0 %v794, 3
        %v860 = vpop.permute.xlu0 %859
        %861 = vrot.lane.b32.xlu0 %v797, 3
        %v862 = vpop.permute.xlu0 %861
        %863 = vrot.lane.b32.xlu0 %v799, 3
        %v864 = vpop.permute.xlu0 %863
        %865 = vrot.lane.b32.xlu0 %v802, 3
        %v866 = vpop.permute.xlu0 %865
        %867 = vrot.lane.b32.xlu0 %v804, 3
        %v868 = vpop.permute.xlu0 %867
        %vm901 = vcmask 1045504
        %v902 = vrot.slane %v658, 2
        %v903 = vrot.slane %v560, 2
        %v904 = vsel %vm901, %v902, %v903
        %v905 = vrot.slane %v675, 2
        %v906 = vsel %vm901, %v903, %v905
        %v907 = vrot.slane %v659, 2
        %v908 = vrot.slane %v563, 2
        %v909 = vsel %vm901, %v907, %v908
        %v910 = vrot.slane %v676, 2
        %v911 = vsel %vm901, %v908, %v910
        %v912 = vrot.slane %v660, 2
        %v913 = vrot.slane %v566, 2
        %v914 = vsel %vm901, %v912, %v913
        %v915 = vrot.slane %v677, 2
        %v916 = vsel %vm901, %v913, %v915
        %v917 = vrot.slane %v661, 2
        %v918 = vrot.slane %v569, 2
        %v919 = vsel %vm901, %v917, %v918
        %v920 = vrot.slane %v678, 2
        %v921 = vsel %vm901, %v918, %v920
        %v922 = vrot.slane %v662, 2
        %v923 = vrot.slane %v572, 2
        %v924 = vsel %vm901, %v922, %v923
        %v925 = vrot.slane %v679, 2
        %v926 = vsel %vm901, %v923, %v925
        %v927 = vrot.slane %v663, 2
        %v928 = vrot.slane %v575, 2
        %v929 = vsel %vm901, %v927, %v928
        %v930 = vrot.slane %v680, 2
        %v931 = vsel %vm901, %v928, %v930
        %v932 = vrot.slane %v664, 2
        %v933 = vrot.slane %v578, 2
        %v934 = vsel %vm901, %v932, %v933
        %v935 = vrot.slane %v681, 2
        %v936 = vsel %vm901, %v933, %v935
        %v937 = vrot.slane %v665, 2
        %v938 = vrot.slane %v581, 2
        %v939 = vsel %vm901, %v937, %v938
        %v940 = vrot.slane %v682, 2
        %v941 = vsel %vm901, %v938, %v940
        %v942 = vrot.slane %v666, 2
        %v943 = vrot.slane %v584, 2
        %v944 = vsel %vm901, %v942, %v943
        %v945 = vrot.slane %v683, 2
        %v946 = vsel %vm901, %v943, %v945
        %v947 = vrot.slane %v667, 2
        %v948 = vrot.slane %v587, 2
        %v949 = vsel %vm901, %v947, %v948
        %v950 = vrot.slane %v684, 2
        %v951 = vsel %vm901, %v948, %v950
        %v952 = vrot.slane %v668, 2
        %v953 = vrot.slane %v590, 2
        %v954 = vsel %vm901, %v952, %v953
        %v955 = vrot.slane %v685, 2
        %v956 = vsel %vm901, %v953, %v955
        %v957 = vrot.slane %v669, 2
        %v958 = vrot.slane %v593, 2
        %v959 = vsel %vm901, %v957, %v958
        %v960 = vrot.slane %v686, 2
        %v961 = vsel %vm901, %v958, %v960
        %v962 = vrot.slane %v670, 2
        %v963 = vrot.slane %v596, 2
        %v964 = vsel %vm901, %v962, %v963
        %v965 = vrot.slane %v687, 2
        %v966 = vsel %vm901, %v963, %v965
        %v967 = vrot.slane %v671, 2
        %v968 = vrot.slane %v599, 2
        %v969 = vsel %vm901, %v967, %v968
        %v970 = vrot.slane %v688, 2
        %v971 = vsel %vm901, %v968, %v970
        %v972 = vrot.slane %v672, 2
        %v973 = vrot.slane %v602, 2
        %v974 = vsel %vm901, %v972, %v973
        %v975 = vrot.slane %v689, 2
        %v976 = vsel %vm901, %v973, %v975
        %v977 = vrot.slane %v673, 2
        %v978 = vrot.slane %v605, 2
        %v979 = vsel %vm901, %v977, %v978
        %v980 = vrot.slane %v690, 2
        %v981 = vsel %vm901, %v978, %v980
        %982 = vrot.lane.b32.xlu0 %v904, 6
        %v983 = vpop.permute.xlu0 %982
        %984 = vrot.lane.b32.xlu0 %v906, 6
        %v985 = vpop.permute.xlu0 %984
        %986 = vrot.lane.b32.xlu0 %v909, 6
        %v987 = vpop.permute.xlu0 %986
        %988 = vrot.lane.b32.xlu0 %v911, 6
        %v989 = vpop.permute.xlu0 %988
        %990 = vrot.lane.b32.xlu0 %v914, 6
        %v991 = vpop.permute.xlu0 %990
        %992 = vrot.lane.b32.xlu0 %v916, 6
        %v993 = vpop.permute.xlu0 %992
        %994 = vrot.lane.b32.xlu0 %v919, 6
        %v995 = vpop.permute.xlu0 %994
        %996 = vrot.lane.b32.xlu0 %v921, 6
        %v997 = vpop.permute.xlu0 %996
        %998 = vrot.lane.b32.xlu0 %v924, 6
        %v999 = vpop.permute.xlu0 %998
        %1000 = vrot.lane.b32.xlu0 %v926, 6
        %v1001 = vpop.permute.xlu0 %1000
        %1002 = vrot.lane.b32.xlu0 %v929, 6
        %v1003 = vpop.permute.xlu0 %1002
        %1004 = vrot.lane.b32.xlu0 %v931, 6
        %v1005 = vpop.permute.xlu0 %1004
        %1006 = vrot.lane.b32.xlu0 %v934, 6
        %v1007 = vpop.permute.xlu0 %1006
        %1008 = vrot.lane.b32.xlu0 %v936, 6
        %v1009 = vpop.permute.xlu0 %1008
        %1010 = vrot.lane.b32.xlu0 %v939, 6
        %v1011 = vpop.permute.xlu0 %1010
        %1012 = vrot.lane.b32.xlu0 %v941, 6
        %v1013 = vpop.permute.xlu0 %1012
        %1014 = vrot.lane.b32.xlu0 %v944, 6
        %v1015 = vpop.permute.xlu0 %1014
        %1016 = vrot.lane.b32.xlu0 %v946, 6
        %v1017 = vpop.permute.xlu0 %1016
        %1018 = vrot.lane.b32.xlu0 %v949, 6
        %v1019 = vpop.permute.xlu0 %1018
        %1020 = vrot.lane.b32.xlu0 %v951, 6
        %v1021 = vpop.permute.xlu0 %1020
        %1022 = vrot.lane.b32.xlu0 %v954, 6
        %v1023 = vpop.permute.xlu0 %1022
        %1024 = vrot.lane.b32.xlu0 %v956, 6
        %v1025 = vpop.permute.xlu0 %1024
        %1026 = vrot.lane.b32.xlu0 %v959, 6
        %v1027 = vpop.permute.xlu0 %1026
        %1028 = vrot.lane.b32.xlu0 %v961, 6
        %v1029 = vpop.permute.xlu0 %1028
        %1030 = vrot.lane.b32.xlu0 %v964, 6
        %v1031 = vpop.permute.xlu0 %1030
        %1032 = vrot.lane.b32.xlu0 %v966, 6
        %v1033 = vpop.permute.xlu0 %1032
        %1034 = vrot.lane.b32.xlu0 %v969, 6
        %v1035 = vpop.permute.xlu0 %1034
        %1036 = vrot.lane.b32.xlu0 %v971, 6
        %v1037 = vpop.permute.xlu0 %1036
        %1038 = vrot.lane.b32.xlu0 %v974, 6
        %v1039 = vpop.permute.xlu0 %1038
        %1040 = vrot.lane.b32.xlu0 %v976, 6
        %v1041 = vpop.permute.xlu0 %1040
        %1042 = vrot.lane.b32.xlu0 %v979, 6
        %v1043 = vpop.permute.xlu0 %1042
        %1044 = vrot.lane.b32.xlu0 %v981, 6
        %v1045 = vpop.permute.xlu0 %1044
        %1079 = vrot.lane.b32.xlu0 %v659, 9
        %v1080 = vpop.permute.xlu0 %1079
        %1081 = vrot.lane.b32.xlu0 %v563, 9
        %v1082 = vpop.permute.xlu0 %1081
        %1083 = vrot.lane.b32.xlu0 %v660, 9
        %v1084 = vpop.permute.xlu0 %1083
        %1085 = vrot.lane.b32.xlu0 %v566, 9
        %v1086 = vpop.permute.xlu0 %1085
        %1087 = vrot.lane.b32.xlu0 %v661, 9
        %v1088 = vpop.permute.xlu0 %1087
        %1089 = vrot.lane.b32.xlu0 %v569, 9
        %v1090 = vpop.permute.xlu0 %1089
        %1091 = vrot.lane.b32.xlu0 %v662, 9
        %v1092 = vpop.permute.xlu0 %1091
        %1093 = vrot.lane.b32.xlu0 %v572, 9
        %v1094 = vpop.permute.xlu0 %1093
        %1095 = vrot.lane.b32.xlu0 %v663, 9
        %v1096 = vpop.permute.xlu0 %1095
        %1097 = vrot.lane.b32.xlu0 %v575, 9
        %v1098 = vpop.permute.xlu0 %1097
        %1099 = vrot.lane.b32.xlu0 %v664, 9
        %v1100 = vpop.permute.xlu0 %1099
        %1101 = vrot.lane.b32.xlu0 %v578, 9
        %v1102 = vpop.permute.xlu0 %1101
        %1103 = vrot.lane.b32.xlu0 %v665, 9
        %v1104 = vpop.permute.xlu0 %1103
        %1105 = vrot.lane.b32.xlu0 %v581, 9
        %v1106 = vpop.permute.xlu0 %1105
        %1107 = vrot.lane.b32.xlu0 %v666, 9
        %v1108 = vpop.permute.xlu0 %1107
        %1109 = vrot.lane.b32.xlu0 %v584, 9
        %v1110 = vpop.permute.xlu0 %1109
        %1111 = vrot.lane.b32.xlu0 %v667, 9
        %v1112 = vpop.permute.xlu0 %1111
        %1113 = vrot.lane.b32.xlu0 %v587, 9
        %v1114 = vpop.permute.xlu0 %1113
        %1115 = vrot.lane.b32.xlu0 %v668, 9
        %v1116 = vpop.permute.xlu0 %1115
        %1117 = vrot.lane.b32.xlu0 %v590, 9
        %v1118 = vpop.permute.xlu0 %1117
        %1119 = vrot.lane.b32.xlu0 %v669, 9
        %v1120 = vpop.permute.xlu0 %1119
        %1121 = vrot.lane.b32.xlu0 %v593, 9
        %v1122 = vpop.permute.xlu0 %1121
        %1123 = vrot.lane.b32.xlu0 %v670, 9
        %v1124 = vpop.permute.xlu0 %1123
        %1125 = vrot.lane.b32.xlu0 %v596, 9
        %v1126 = vpop.permute.xlu0 %1125
        %1127 = vrot.lane.b32.xlu0 %v671, 9
        %v1128 = vpop.permute.xlu0 %1127
        %1129 = vrot.lane.b32.xlu0 %v599, 9
        %v1130 = vpop.permute.xlu0 %1129
        %1131 = vrot.lane.b32.xlu0 %v672, 9
        %v1132 = vpop.permute.xlu0 %1131
        %1133 = vrot.lane.b32.xlu0 %v602, 9
        %v1134 = vpop.permute.xlu0 %1133
        %1135 = vrot.lane.b32.xlu0 %v673, 9
        %v1136 = vpop.permute.xlu0 %1135
        %1137 = vrot.lane.b32.xlu0 %v605, 9
        %v1138 = vpop.permute.xlu0 %1137
        %1139 = vrot.lane.b32.xlu0 %v674, 9
        %v1140 = vpop.permute.xlu0 %1139
        %1141 = vrot.lane.b32.xlu0 %v608, 9
        %v1142 = vpop.permute.xlu0 %1141
        %v1176 = vrot.slane %v674, 1
        %v1177 = vrot.slane %v608, 1
        %v1178 = vsel %vm724, %v1176, %v1177
        %v1179 = vrot.slane %v691, 1
        %v1180 = vsel %vm724, %v1177, %v1179
        %1181 = vrot.lane.b32.xlu0 %v732, 12
        %v1182 = vpop.permute.xlu0 %1181
        %1183 = vrot.lane.b32.xlu0 %v734, 12
        %v1184 = vpop.permute.xlu0 %1183
        %1185 = vrot.lane.b32.xlu0 %v737, 12
        %v1186 = vpop.permute.xlu0 %1185
        %1187 = vrot.lane.b32.xlu0 %v739, 12
        %v1188 = vpop.permute.xlu0 %1187
        %1189 = vrot.lane.b32.xlu0 %v742, 12
        %v1190 = vpop.permute.xlu0 %1189
        %1191 = vrot.lane.b32.xlu0 %v744, 12
        %v1192 = vpop.permute.xlu0 %1191
        %1193 = vrot.lane.b32.xlu0 %v747, 12
        %v1194 = vpop.permute.xlu0 %1193
        %1195 = vrot.lane.b32.xlu0 %v749, 12
        %v1196 = vpop.permute.xlu0 %1195
        %1197 = vrot.lane.b32.xlu0 %v752, 12
        %v1198 = vpop.permute.xlu0 %1197
        %1199 = vrot.lane.b32.xlu0 %v754, 12
        %v1200 = vpop.permute.xlu0 %1199
        %1201 = vrot.lane.b32.xlu0 %v757, 12
        %v1202 = vpop.permute.xlu0 %1201
        %1203 = vrot.lane.b32.xlu0 %v759, 12
        %v1204 = vpop.permute.xlu0 %1203
        %1205 = vrot.lane.b32.xlu0 %v762, 12
        %v1206 = vpop.permute.xlu0 %1205
        %1207 = vrot.lane.b32.xlu0 %v764, 12
        %v1208 = vpop.permute.xlu0 %1207
        %1209 = vrot.lane.b32.xlu0 %v767, 12
        %v1210 = vpop.permute.xlu0 %1209
        %1211 = vrot.lane.b32.xlu0 %v769, 12
        %v1212 = vpop.permute.xlu0 %1211
        %1213 = vrot.lane.b32.xlu0 %v772, 12
        %v1214 = vpop.permute.xlu0 %1213
        %1215 = vrot.lane.b32.xlu0 %v774, 12
        %v1216 = vpop.permute.xlu0 %1215
        %1217 = vrot.lane.b32.xlu0 %v777, 12
        %v1218 = vpop.permute.xlu0 %1217
        %1219 = vrot.lane.b32.xlu0 %v779, 12
        %v1220 = vpop.permute.xlu0 %1219
        %1221 = vrot.lane.b32.xlu0 %v782, 12
        %v1222 = vpop.permute.xlu0 %1221
        %1223 = vrot.lane.b32.xlu0 %v784, 12
        %v1224 = vpop.permute.xlu0 %1223
        %1225 = vrot.lane.b32.xlu0 %v787, 12
        %v1226 = vpop.permute.xlu0 %1225
        %1227 = vrot.lane.b32.xlu0 %v789, 12
        %v1228 = vpop.permute.xlu0 %1227
        %1229 = vrot.lane.b32.xlu0 %v792, 12
        %v1230 = vpop.permute.xlu0 %1229
        %1231 = vrot.lane.b32.xlu0 %v794, 12
        %v1232 = vpop.permute.xlu0 %1231
        %1233 = vrot.lane.b32.xlu0 %v797, 12
        %v1234 = vpop.permute.xlu0 %1233
        %1235 = vrot.lane.b32.xlu0 %v799, 12
        %v1236 = vpop.permute.xlu0 %1235
        %1237 = vrot.lane.b32.xlu0 %v802, 12
        %v1238 = vpop.permute.xlu0 %1237
        %1239 = vrot.lane.b32.xlu0 %v804, 12
        %v1240 = vpop.permute.xlu0 %1239
        %1241 = vrot.lane.b32.xlu0 %v1178, 12
        %v1242 = vpop.permute.xlu0 %1241
        %1243 = vrot.lane.b32.xlu0 %v1180, 12
        %v1244 = vpop.permute.xlu0 %1243
        %v1277 = vrot.slane %v674, 2
        %v1278 = vrot.slane %v608, 2
        %v1279 = vsel %vm901, %v1277, %v1278
        %v1280 = vrot.slane %v691, 2
        %v1281 = vsel %vm901, %v1278, %v1280
        %1282 = vrot.lane.b32.xlu0 %v909, 15
        %v1283 = vpop.permute.xlu0 %1282
        %1284 = vrot.lane.b32.xlu0 %v911, 15
        %v1285 = vpop.permute.xlu0 %1284
        %1286 = vrot.lane.b32.xlu0 %v914, 15
        %v1287 = vpop.permute.xlu0 %1286
        %1288 = vrot.lane.b32.xlu0 %v916, 15
        %v1289 = vpop.permute.xlu0 %1288
        %1290 = vrot.lane.b32.xlu0 %v919, 15
        %v1291 = vpop.permute.xlu0 %1290
        %1292 = vrot.lane.b32.xlu0 %v921, 15
        %v1293 = vpop.permute.xlu0 %1292
        %1294 = vrot.lane.b32.xlu0 %v924, 15
        %v1295 = vpop.permute.xlu0 %1294
        %1296 = vrot.lane.b32.xlu0 %v926, 15
        %v1297 = vpop.permute.xlu0 %1296
        %1298 = vrot.lane.b32.xlu0 %v929, 15
        %v1299 = vpop.permute.xlu0 %1298
        %1300 = vrot.lane.b32.xlu0 %v931, 15
        %v1301 = vpop.permute.xlu0 %1300
        %1302 = vrot.lane.b32.xlu0 %v934, 15
        %v1303 = vpop.permute.xlu0 %1302
        %1304 = vrot.lane.b32.xlu0 %v936, 15
        %v1305 = vpop.permute.xlu0 %1304
        %1306 = vrot.lane.b32.xlu0 %v939, 15
        %v1307 = vpop.permute.xlu0 %1306
        %1308 = vrot.lane.b32.xlu0 %v941, 15
        %v1309 = vpop.permute.xlu0 %1308
        %1310 = vrot.lane.b32.xlu0 %v944, 15
        %v1311 = vpop.permute.xlu0 %1310
        %1312 = vrot.lane.b32.xlu0 %v946, 15
        %v1313 = vpop.permute.xlu0 %1312
        %1314 = vrot.lane.b32.xlu0 %v949, 15
        %v1315 = vpop.permute.xlu0 %1314
        %1316 = vrot.lane.b32.xlu0 %v951, 15
        %v1317 = vpop.permute.xlu0 %1316
        %1318 = vrot.lane.b32.xlu0 %v954, 15
        %v1319 = vpop.permute.xlu0 %1318
        %1320 = vrot.lane.b32.xlu0 %v956, 15
        %v1321 = vpop.permute.xlu0 %1320
        %1322 = vrot.lane.b32.xlu0 %v959, 15
        %v1323 = vpop.permute.xlu0 %1322
        %1324 = vrot.lane.b32.xlu0 %v961, 15
        %v1325 = vpop.permute.xlu0 %1324
        %1326 = vrot.lane.b32.xlu0 %v964, 15
        %v1327 = vpop.permute.xlu0 %1326
        %1328 = vrot.lane.b32.xlu0 %v966, 15
        %v1329 = vpop.permute.xlu0 %1328
        %1330 = vrot.lane.b32.xlu0 %v969, 15
        %v1331 = vpop.permute.xlu0 %1330
        %1332 = vrot.lane.b32.xlu0 %v971, 15
        %v1333 = vpop.permute.xlu0 %1332
        %1334 = vrot.lane.b32.xlu0 %v974, 15
        %v1335 = vpop.permute.xlu0 %1334
        %1336 = vrot.lane.b32.xlu0 %v976, 15
        %v1337 = vpop.permute.xlu0 %1336
        %1338 = vrot.lane.b32.xlu0 %v979, 15
        %v1339 = vpop.permute.xlu0 %1338
        %1340 = vrot.lane.b32.xlu0 %v981, 15
        %v1341 = vpop.permute.xlu0 %1340
        %1342 = vrot.lane.b32.xlu0 %v1279, 15
        %v1343 = vpop.permute.xlu0 %1342
        %1344 = vrot.lane.b32.xlu0 %v1281, 15
        %v1345 = vpop.permute.xlu0 %1344
        %1378 = vrot.lane.b32.xlu0 %v660, 18
        %v1379 = vpop.permute.xlu0 %1378
        %1380 = vrot.lane.b32.xlu0 %v566, 18
        %v1381 = vpop.permute.xlu0 %1380
        %1382 = vrot.lane.b32.xlu0 %v661, 18
        %v1383 = vpop.permute.xlu0 %1382
        %1384 = vrot.lane.b32.xlu0 %v569, 18
        %v1385 = vpop.permute.xlu0 %1384
        %1386 = vrot.lane.b32.xlu0 %v662, 18
        %v1387 = vpop.permute.xlu0 %1386
        %1388 = vrot.lane.b32.xlu0 %v572, 18
        %v1389 = vpop.permute.xlu0 %1388
        %1390 = vrot.lane.b32.xlu0 %v663, 18
        %v1391 = vpop.permute.xlu0 %1390
        %1392 = vrot.lane.b32.xlu0 %v575, 18
        %v1393 = vpop.permute.xlu0 %1392
        %1394 = vrot.lane.b32.xlu0 %v664, 18
        %v1395 = vpop.permute.xlu0 %1394
        %1396 = vrot.lane.b32.xlu0 %v578, 18
        %v1397 = vpop.permute.xlu0 %1396
        %1398 = vrot.lane.b32.xlu0 %v665, 18
        %v1399 = vpop.permute.xlu0 %1398
        %1400 = vrot.lane.b32.xlu0 %v581, 18
        %v1401 = vpop.permute.xlu0 %1400
        %1402 = vrot.lane.b32.xlu0 %v666, 18
        %v1403 = vpop.permute.xlu0 %1402
        %1404 = vrot.lane.b32.xlu0 %v584, 18
        %v1405 = vpop.permute.xlu0 %1404
        %1406 = vrot.lane.b32.xlu0 %v667, 18
        %v1407 = vpop.permute.xlu0 %1406
        %1408 = vrot.lane.b32.xlu0 %v587, 18
        %v1409 = vpop.permute.xlu0 %1408
        %1410 = vrot.lane.b32.xlu0 %v668, 18
        %v1411 = vpop.permute.xlu0 %1410
        %1412 = vrot.lane.b32.xlu0 %v590, 18
        %v1413 = vpop.permute.xlu0 %1412
        %1414 = vrot.lane.b32.xlu0 %v669, 18
        %v1415 = vpop.permute.xlu0 %1414
        %1416 = vrot.lane.b32.xlu0 %v593, 18
        %v1417 = vpop.permute.xlu0 %1416
        %1418 = vrot.lane.b32.xlu0 %v670, 18
        %v1419 = vpop.permute.xlu0 %1418
        %1420 = vrot.lane.b32.xlu0 %v596, 18
        %v1421 = vpop.permute.xlu0 %1420
        %1422 = vrot.lane.b32.xlu0 %v671, 18
        %v1423 = vpop.permute.xlu0 %1422
        %1424 = vrot.lane.b32.xlu0 %v599, 18
        %v1425 = vpop.permute.xlu0 %1424
        %1426 = vrot.lane.b32.xlu0 %v672, 18
        %v1427 = vpop.permute.xlu0 %1426
        %1428 = vrot.lane.b32.xlu0 %v602, 18
        %v1429 = vpop.permute.xlu0 %1428
        %1430 = vrot.lane.b32.xlu0 %v673, 18
        %v1431 = vpop.permute.xlu0 %1430
        %1432 = vrot.lane.b32.xlu0 %v605, 18
        %v1433 = vpop.permute.xlu0 %1432
        %1434 = vrot.lane.b32.xlu0 %v674, 18
        %v1435 = vpop.permute.xlu0 %1434
        %1436 = vrot.lane.b32.xlu0 %v608, 18
        %v1437 = vpop.permute.xlu0 %1436
        %1438 = vrot.lane.b32.xlu0 %v658, 18
        %v1439 = vpop.permute.xlu0 %1438
        %1440 = vrot.lane.b32.xlu0 %v560, 18
        %v1441 = vpop.permute.xlu0 %1440
        %1474 = vrot.lane.b32.xlu0 %v737, 21
        %v1475 = vpop.permute.xlu0 %1474
        %1476 = vrot.lane.b32.xlu0 %v739, 21
        %v1477 = vpop.permute.xlu0 %1476
        %1478 = vrot.lane.b32.xlu0 %v742, 21
        %v1479 = vpop.permute.xlu0 %1478
        %1480 = vrot.lane.b32.xlu0 %v744, 21
        %v1481 = vpop.permute.xlu0 %1480
        %1482 = vrot.lane.b32.xlu0 %v747, 21
        %v1483 = vpop.permute.xlu0 %1482
        %1484 = vrot.lane.b32.xlu0 %v749, 21
        %v1485 = vpop.permute.xlu0 %1484
        %1486 = vrot.lane.b32.xlu0 %v752, 21
        %v1487 = vpop.permute.xlu0 %1486
        %1488 = vrot.lane.b32.xlu0 %v754, 21
        %v1489 = vpop.permute.xlu0 %1488
        %1490 = vrot.lane.b32.xlu0 %v757, 21
        %v1491 = vpop.permute.xlu0 %1490
        %1492 = vrot.lane.b32.xlu0 %v759, 21
        %v1493 = vpop.permute.xlu0 %1492
        %1494 = vrot.lane.b32.xlu0 %v762, 21
        %v1495 = vpop.permute.xlu0 %1494
        %1496 = vrot.lane.b32.xlu0 %v764, 21
        %v1497 = vpop.permute.xlu0 %1496
        %1498 = vrot.lane.b32.xlu0 %v767, 21
        %v1499 = vpop.permute.xlu0 %1498
        %1500 = vrot.lane.b32.xlu0 %v769, 21
        %v1501 = vpop.permute.xlu0 %1500
        %1502 = vrot.lane.b32.xlu0 %v772, 21
        %v1503 = vpop.permute.xlu0 %1502
        %1504 = vrot.lane.b32.xlu0 %v774, 21
        %v1505 = vpop.permute.xlu0 %1504
        %1506 = vrot.lane.b32.xlu0 %v777, 21
        %v1507 = vpop.permute.xlu0 %1506
        %1508 = vrot.lane.b32.xlu0 %v779, 21
        %v1509 = vpop.permute.xlu0 %1508
        %1510 = vrot.lane.b32.xlu0 %v782, 21
        %v1511 = vpop.permute.xlu0 %1510
        %1512 = vrot.lane.b32.xlu0 %v784, 21
        %v1513 = vpop.permute.xlu0 %1512
        %1514 = vrot.lane.b32.xlu0 %v787, 21
        %v1515 = vpop.permute.xlu0 %1514
        %1516 = vrot.lane.b32.xlu0 %v789, 21
        %v1517 = vpop.permute.xlu0 %1516
        %1518 = vrot.lane.b32.xlu0 %v792, 21
        %v1519 = vpop.permute.xlu0 %1518
        %1520 = vrot.lane.b32.xlu0 %v794, 21
        %v1521 = vpop.permute.xlu0 %1520
        %1522 = vrot.lane.b32.xlu0 %v797, 21
        %v1523 = vpop.permute.xlu0 %1522
        %1524 = vrot.lane.b32.xlu0 %v799, 21
        %v1525 = vpop.permute.xlu0 %1524
        %1526 = vrot.lane.b32.xlu0 %v802, 21
        %v1527 = vpop.permute.xlu0 %1526
        %1528 = vrot.lane.b32.xlu0 %v804, 21
        %v1529 = vpop.permute.xlu0 %1528
        %1530 = vrot.lane.b32.xlu0 %v1178, 21
        %v1531 = vpop.permute.xlu0 %1530
        %1532 = vrot.lane.b32.xlu0 %v1180, 21
        %v1533 = vpop.permute.xlu0 %1532
        %1534 = vrot.lane.b32.xlu0 %v727, 21
        %v1535 = vpop.permute.xlu0 %1534
        %1536 = vrot.lane.b32.xlu0 %v729, 21
        %v1537 = vpop.permute.xlu0 %1536
        %1570 = vrot.lane.b32.xlu0 %v914, 24
        %v1571 = vpop.permute.xlu0 %1570
        %1572 = vrot.lane.b32.xlu0 %v916, 24
        %v1573 = vpop.permute.xlu0 %1572
        %1574 = vrot.lane.b32.xlu0 %v919, 24
        %v1575 = vpop.permute.xlu0 %1574
        %1576 = vrot.lane.b32.xlu0 %v921, 24
        %v1577 = vpop.permute.xlu0 %1576
        %1578 = vrot.lane.b32.xlu0 %v924, 24
        %v1579 = vpop.permute.xlu0 %1578
        %1580 = vrot.lane.b32.xlu0 %v926, 24
        %v1581 = vpop.permute.xlu0 %1580
        %1582 = vrot.lane.b32.xlu0 %v929, 24
        %v1583 = vpop.permute.xlu0 %1582
        %1584 = vrot.lane.b32.xlu0 %v931, 24
        %v1585 = vpop.permute.xlu0 %1584
        %1586 = vrot.lane.b32.xlu0 %v934, 24
        %v1587 = vpop.permute.xlu0 %1586
        %1588 = vrot.lane.b32.xlu0 %v936, 24
        %v1589 = vpop.permute.xlu0 %1588
        %1590 = vrot.lane.b32.xlu0 %v939, 24
        %v1591 = vpop.permute.xlu0 %1590
        %1592 = vrot.lane.b32.xlu0 %v941, 24
        %v1593 = vpop.permute.xlu0 %1592
        %1594 = vrot.lane.b32.xlu0 %v944, 24
        %v1595 = vpop.permute.xlu0 %1594
        %1596 = vrot.lane.b32.xlu0 %v946, 24
        %v1597 = vpop.permute.xlu0 %1596
        %1598 = vrot.lane.b32.xlu0 %v949, 24
        %v1599 = vpop.permute.xlu0 %1598
        %1600 = vrot.lane.b32.xlu0 %v951, 24
        %v1601 = vpop.permute.xlu0 %1600
        %1602 = vrot.lane.b32.xlu0 %v954, 24
        %v1603 = vpop.permute.xlu0 %1602
        %1604 = vrot.lane.b32.xlu0 %v956, 24
        %v1605 = vpop.permute.xlu0 %1604
        %1606 = vrot.lane.b32.xlu0 %v959, 24
        %v1607 = vpop.permute.xlu0 %1606
        %1608 = vrot.lane.b32.xlu0 %v961, 24
        %v1609 = vpop.permute.xlu0 %1608
        %1610 = vrot.lane.b32.xlu0 %v964, 24
        %v1611 = vpop.permute.xlu0 %1610
        %1612 = vrot.lane.b32.xlu0 %v966, 24
        %v1613 = vpop.permute.xlu0 %1612
        %1614 = vrot.lane.b32.xlu0 %v969, 24
        %v1615 = vpop.permute.xlu0 %1614
        %1616 = vrot.lane.b32.xlu0 %v971, 24
        %v1617 = vpop.permute.xlu0 %1616
        %1618 = vrot.lane.b32.xlu0 %v974, 24
        %v1619 = vpop.permute.xlu0 %1618
        %1620 = vrot.lane.b32.xlu0 %v976, 24
        %v1621 = vpop.permute.xlu0 %1620
        %1622 = vrot.lane.b32.xlu0 %v979, 24
        %v1623 = vpop.permute.xlu0 %1622
        %1624 = vrot.lane.b32.xlu0 %v981, 24
        %v1625 = vpop.permute.xlu0 %1624
        %1626 = vrot.lane.b32.xlu0 %v1279, 24
        %v1627 = vpop.permute.xlu0 %1626
        %1628 = vrot.lane.b32.xlu0 %v1281, 24
        %v1629 = vpop.permute.xlu0 %1628
        %1630 = vrot.lane.b32.xlu0 %v904, 24
        %v1631 = vpop.permute.xlu0 %1630
        %1632 = vrot.lane.b32.xlu0 %v906, 24
        %v1633 = vpop.permute.xlu0 %1632
        %vm1666 = vcmask 23552
        %v1667 = vsel %vm1666, %v658, %v806
        %v1668 = vsel %vm1666, %v560, %v808
        %v1669 = vsel %vm1666, %v659, %v810
        %v1670 = vsel %vm1666, %v563, %v812
        %v1671 = vsel %vm1666, %v660, %v814
        %v1672 = vsel %vm1666, %v566, %v816
        %v1673 = vsel %vm1666, %v661, %v818
        %v1674 = vsel %vm1666, %v569, %v820
        %v1675 = vsel %vm1666, %v662, %v822
        %v1676 = vsel %vm1666, %v572, %v824
        %v1677 = vsel %vm1666, %v663, %v826
        %v1678 = vsel %vm1666, %v575, %v828
        %v1679 = vsel %vm1666, %v664, %v830
        %v1680 = vsel %vm1666, %v578, %v832
        %v1681 = vsel %vm1666, %v665, %v834
        %v1682 = vsel %vm1666, %v581, %v836
        %v1683 = vsel %vm1666, %v666, %v838
        %v1684 = vsel %vm1666, %v584, %v840
        %v1685 = vsel %vm1666, %v667, %v842
        %v1686 = vsel %vm1666, %v587, %v844
        %v1687 = vsel %vm1666, %v668, %v846
        %v1688 = vsel %vm1666, %v590, %v848
        %v1689 = vsel %vm1666, %v669, %v850
        %v1690 = vsel %vm1666, %v593, %v852
        %v1691 = vsel %vm1666, %v670, %v854
        %v1692 = vsel %vm1666, %v596, %v856
        %v1693 = vsel %vm1666, %v671, %v858
        %v1694 = vsel %vm1666, %v599, %v860
        %v1695 = vsel %vm1666, %v672, %v862
        %v1696 = vsel %vm1666, %v602, %v864
        %v1697 = vsel %vm1666, %v673, %v866
        %v1698 = vsel %vm1666, %v605, %v868
        %vm1699 = vcmask 48128
        %v1700 = vsel %vm1699, %v1667, %v983
        %v1701 = vsel %vm1699, %v1668, %v985
        %v1702 = vsel %vm1699, %v1669, %v987
        %v1703 = vsel %vm1699, %v1670, %v989
        %v1704 = vsel %vm1699, %v1671, %v991
        %v1705 = vsel %vm1699, %v1672, %v993
        %v1706 = vsel %vm1699, %v1673, %v995
        %v1707 = vsel %vm1699, %v1674, %v997
        %v1708 = vsel %vm1699, %v1675, %v999
        %v1709 = vsel %vm1699, %v1676, %v1001
        %v1710 = vsel %vm1699, %v1677, %v1003
        %v1711 = vsel %vm1699, %v1678, %v1005
        %v1712 = vsel %vm1699, %v1679, %v1007
        %v1713 = vsel %vm1699, %v1680, %v1009
        %v1714 = vsel %vm1699, %v1681, %v1011
        %v1715 = vsel %vm1699, %v1682, %v1013
        %v1716 = vsel %vm1699, %v1683, %v1015
        %v1717 = vsel %vm1699, %v1684, %v1017
        %v1718 = vsel %vm1699, %v1685, %v1019
        %v1719 = vsel %vm1699, %v1686, %v1021
        %v1720 = vsel %vm1699, %v1687, %v1023
        %v1721 = vsel %vm1699, %v1688, %v1025
        %v1722 = vsel %vm1699, %v1689, %v1027
        %v1723 = vsel %vm1699, %v1690, %v1029
        %v1724 = vsel %vm1699, %v1691, %v1031
        %v1725 = vsel %vm1699, %v1692, %v1033
        %v1726 = vsel %vm1699, %v1693, %v1035
        %v1727 = vsel %vm1699, %v1694, %v1037
        %v1728 = vsel %vm1699, %v1695, %v1039
        %v1729 = vsel %vm1699, %v1696, %v1041
        %v1730 = vsel %vm1699, %v1697, %v1043
        %v1731 = vsel %vm1699, %v1698, %v1045
        %vm1732 = vcmask 72704
        %v1733 = vsel %vm1732, %v1700, %v1080
        %v1734 = vsel %vm1732, %v1701, %v1082
        %v1735 = vsel %vm1732, %v1702, %v1084
        %v1736 = vsel %vm1732, %v1703, %v1086
        %v1737 = vsel %vm1732, %v1704, %v1088
        %v1738 = vsel %vm1732, %v1705, %v1090
        %v1739 = vsel %vm1732, %v1706, %v1092
        %v1740 = vsel %vm1732, %v1707, %v1094
        %v1741 = vsel %vm1732, %v1708, %v1096
        %v1742 = vsel %vm1732, %v1709, %v1098
        %v1743 = vsel %vm1732, %v1710, %v1100
        %v1744 = vsel %vm1732, %v1711, %v1102
        %v1745 = vsel %vm1732, %v1712, %v1104
        %v1746 = vsel %vm1732, %v1713, %v1106
        %v1747 = vsel %vm1732, %v1714, %v1108
        %v1748 = vsel %vm1732, %v1715, %v1110
        %v1749 = vsel %vm1732, %v1716, %v1112
        %v1750 = vsel %vm1732, %v1717, %v1114
        %v1751 = vsel %vm1732, %v1718, %v1116
        %v1752 = vsel %vm1732, %v1719, %v1118
        %v1753 = vsel %vm1732, %v1720, %v1120
        %v1754 = vsel %vm1732, %v1721, %v1122
        %v1755 = vsel %vm1732, %v1722, %v1124
        %v1756 = vsel %vm1732, %v1723, %v1126
        %v1757 = vsel %vm1732, %v1724, %v1128
        %v1758 = vsel %vm1732, %v1725, %v1130
        %v1759 = vsel %vm1732, %v1726, %v1132
        %v1760 = vsel %vm1732, %v1727, %v1134
        %v1761 = vsel %vm1732, %v1728, %v1136
        %v1762 = vsel %vm1732, %v1729, %v1138
        %v1763 = vsel %vm1732, %v1730, %v1140
        %v1764 = vsel %vm1732, %v1731, %v1142
        %vm1765 = vcmask 97280
        %v1766 = vsel %vm1765, %v1733, %v1182
        %v1767 = vsel %vm1765, %v1734, %v1184
        %v1768 = vsel %vm1765, %v1735, %v1186
        %v1769 = vsel %vm1765, %v1736, %v1188
        %v1770 = vsel %vm1765, %v1737, %v1190
        %v1771 = vsel %vm1765, %v1738, %v1192
        %v1772 = vsel %vm1765, %v1739, %v1194
        %v1773 = vsel %vm1765, %v1740, %v1196
        %v1774 = vsel %vm1765, %v1741, %v1198
        %v1775 = vsel %vm1765, %v1742, %v1200
        %v1776 = vsel %vm1765, %v1743, %v1202
        %v1777 = vsel %vm1765, %v1744, %v1204
        %v1778 = vsel %vm1765, %v1745, %v1206
        %v1779 = vsel %vm1765, %v1746, %v1208
        %v1780 = vsel %vm1765, %v1747, %v1210
        %v1781 = vsel %vm1765, %v1748, %v1212
        %v1782 = vsel %vm1765, %v1749, %v1214
        %v1783 = vsel %vm1765, %v1750, %v1216
        %v1784 = vsel %vm1765, %v1751, %v1218
        %v1785 = vsel %vm1765, %v1752, %v1220
        %v1786 = vsel %vm1765, %v1753, %v1222
        %v1787 = vsel %vm1765, %v1754, %v1224
        %v1788 = vsel %vm1765, %v1755, %v1226
        %v1789 = vsel %vm1765, %v1756, %v1228
        %v1790 = vsel %vm1765, %v1757, %v1230
        %v1791 = vsel %vm1765, %v1758, %v1232
        %v1792 = vsel %vm1765, %v1759, %v1234
        %v1793 = vsel %vm1765, %v1760, %v1236
        %v1794 = vsel %vm1765, %v1761, %v1238
        %v1795 = vsel %vm1765, %v1762, %v1240
        %v1796 = vsel %vm1765, %v1763, %v1242
        %v1797 = vsel %vm1765, %v1764, %v1244
        %vm1798 = vcmask 121856
        %v1799 = vsel %vm1798, %v1766, %v1283
        %v1800 = vsel %vm1798, %v1767, %v1285
        %v1801 = vsel %vm1798, %v1768, %v1287
        %v1802 = vsel %vm1798, %v1769, %v1289
        %v1803 = vsel %vm1798, %v1770, %v1291
        %v1804 = vsel %vm1798, %v1771, %v1293
        %v1805 = vsel %vm1798, %v1772, %v1295
        %v1806 = vsel %vm1798, %v1773, %v1297
        %v1807 = vsel %vm1798, %v1774, %v1299
        %v1808 = vsel %vm1798, %v1775, %v1301
        %v1809 = vsel %vm1798, %v1776, %v1303
        %v1810 = vsel %vm1798, %v1777, %v1305
        %v1811 = vsel %vm1798, %v1778, %v1307
        %v1812 = vsel %vm1798, %v1779, %v1309
        %v1813 = vsel %vm1798, %v1780, %v1311
        %v1814 = vsel %vm1798, %v1781, %v1313
        %v1815 = vsel %vm1798, %v1782, %v1315
        %v1816 = vsel %vm1798, %v1783, %v1317
        %v1817 = vsel %vm1798, %v1784, %v1319
        %v1818 = vsel %vm1798, %v1785, %v1321
        %v1819 = vsel %vm1798, %v1786, %v1323
        %v1820 = vsel %vm1798, %v1787, %v1325
        %v1821 = vsel %vm1798, %v1788, %v1327
        %v1822 = vsel %vm1798, %v1789, %v1329
        %v1823 = vsel %vm1798, %v1790, %v1331
        %v1824 = vsel %vm1798, %v1791, %v1333
        %v1825 = vsel %vm1798, %v1792, %v1335
        %v1826 = vsel %vm1798, %v1793, %v1337
        %v1827 = vsel %vm1798, %v1794, %v1339
        %v1828 = vsel %vm1798, %v1795, %v1341
        %v1829 = vsel %vm1798, %v1796, %v1343
        %v1830 = vsel %vm1798, %v1797, %v1345
        %vm1831 = vcmask 146432
        %v1832 = vsel %vm1831, %v1799, %v1379
        %v1833 = vsel %vm1831, %v1800, %v1381
        %v1834 = vsel %vm1831, %v1801, %v1383
        %v1835 = vsel %vm1831, %v1802, %v1385
        %v1836 = vsel %vm1831, %v1803, %v1387
        %v1837 = vsel %vm1831, %v1804, %v1389
        %v1838 = vsel %vm1831, %v1805, %v1391
        %v1839 = vsel %vm1831, %v1806, %v1393
        %v1840 = vsel %vm1831, %v1807, %v1395
        %v1841 = vsel %vm1831, %v1808, %v1397
        %v1842 = vsel %vm1831, %v1809, %v1399
        %v1843 = vsel %vm1831, %v1810, %v1401
        %v1844 = vsel %vm1831, %v1811, %v1403
        %v1845 = vsel %vm1831, %v1812, %v1405
        %v1846 = vsel %vm1831, %v1813, %v1407
        %v1847 = vsel %vm1831, %v1814, %v1409
        %v1848 = vsel %vm1831, %v1815, %v1411
        %v1849 = vsel %vm1831, %v1816, %v1413
        %v1850 = vsel %vm1831, %v1817, %v1415
        %v1851 = vsel %vm1831, %v1818, %v1417
        %v1852 = vsel %vm1831, %v1819, %v1419
        %v1853 = vsel %vm1831, %v1820, %v1421
        %v1854 = vsel %vm1831, %v1821, %v1423
        %v1855 = vsel %vm1831, %v1822, %v1425
        %v1856 = vsel %vm1831, %v1823, %v1427
        %v1857 = vsel %vm1831, %v1824, %v1429
        %v1858 = vsel %vm1831, %v1825, %v1431
        %v1859 = vsel %vm1831, %v1826, %v1433
        %v1860 = vsel %vm1831, %v1827, %v1435
        %v1861 = vsel %vm1831, %v1828, %v1437
        %v1862 = vsel %vm1831, %v1829, %v1439
        %v1863 = vsel %vm1831, %v1830, %v1441
        %vm1864 = vcmask 171008
        %v1865 = vsel %vm1864, %v1832, %v1475
        %v1866 = vsel %vm1864, %v1833, %v1477
        %v1867 = vsel %vm1864, %v1834, %v1479
        %v1868 = vsel %vm1864, %v1835, %v1481
        %v1869 = vsel %vm1864, %v1836, %v1483
        %v1870 = vsel %vm1864, %v1837, %v1485
        %v1871 = vsel %vm1864, %v1838, %v1487
        %v1872 = vsel %vm1864, %v1839, %v1489
        %v1873 = vsel %vm1864, %v1840, %v1491
        %v1874 = vsel %vm1864, %v1841, %v1493
        %v1875 = vsel %vm1864, %v1842, %v1495
        %v1876 = vsel %vm1864, %v1843, %v1497
        %v1877 = vsel %vm1864, %v1844, %v1499
        %v1878 = vsel %vm1864, %v1845, %v1501
        %v1879 = vsel %vm1864, %v1846, %v1503
        %v1880 = vsel %vm1864, %v1847, %v1505
        %v1881 = vsel %vm1864, %v1848, %v1507
        %v1882 = vsel %vm1864, %v1849, %v1509
        %v1883 = vsel %vm1864, %v1850, %v1511
        %v1884 = vsel %vm1864, %v1851, %v1513
        %v1885 = vsel %vm1864, %v1852, %v1515
        %v1886 = vsel %vm1864, %v1853, %v1517
        %v1887 = vsel %vm1864, %v1854, %v1519
        %v1888 = vsel %vm1864, %v1855, %v1521
        %v1889 = vsel %vm1864, %v1856, %v1523
        %v1890 = vsel %vm1864, %v1857, %v1525
        %v1891 = vsel %vm1864, %v1858, %v1527
        %v1892 = vsel %vm1864, %v1859, %v1529
        %v1893 = vsel %vm1864, %v1860, %v1531
        %v1894 = vsel %vm1864, %v1861, %v1533
        %v1895 = vsel %vm1864, %v1862, %v1535
        %v1896 = vsel %vm1864, %v1863, %v1537
        %vm1897 = vcmask 195584
        %v1898 = vsel %vm1897, %v1865, %v1571
        %v1899 = vsel %vm1897, %v1866, %v1573
        %v1900 = vsel %vm1897, %v1867, %v1575
        %v1901 = vsel %vm1897, %v1868, %v1577
        %v1902 = vsel %vm1897, %v1869, %v1579
        %v1903 = vsel %vm1897, %v1870, %v1581
        %v1904 = vsel %vm1897, %v1871, %v1583
        %v1905 = vsel %vm1897, %v1872, %v1585
        %v1906 = vsel %vm1897, %v1873, %v1587
        %v1907 = vsel %vm1897, %v1874, %v1589
        %v1908 = vsel %vm1897, %v1875, %v1591
        %v1909 = vsel %vm1897, %v1876, %v1593
        %v1910 = vsel %vm1897, %v1877, %v1595
        %v1911 = vsel %vm1897, %v1878, %v1597
        %v1912 = vsel %vm1897, %v1879, %v1599
        %v1913 = vsel %vm1897, %v1880, %v1601
        %v1914 = vsel %vm1897, %v1881, %v1603
        %v1915 = vsel %vm1897, %v1882, %v1605
        %v1916 = vsel %vm1897, %v1883, %v1607
        %v1917 = vsel %vm1897, %v1884, %v1609
        %v1918 = vsel %vm1897, %v1885, %v1611
        %v1919 = vsel %vm1897, %v1886, %v1613
        %v1920 = vsel %vm1897, %v1887, %v1615
        %v1921 = vsel %vm1897, %v1888, %v1617
        %v1922 = vsel %vm1897, %v1889, %v1619
        %v1923 = vsel %vm1897, %v1890, %v1621
        %v1924 = vsel %vm1897, %v1891, %v1623
        %v1925 = vsel %vm1897, %v1892, %v1625
        %v1926 = vsel %vm1897, %v1893, %v1627
        %v1927 = vsel %vm1897, %v1894, %v1629
        %v1928 = vsel %vm1897, %v1895, %v1631
        %v1929 = vsel %vm1897, %v1896, %v1633
        %v1930 = vpack.c.bf16 %v1899, %v1898
        %v1931 = vpack.c.bf16 %v1901, %v1900
        %v1932 = vpack.c.bf16 %v1903, %v1902
        %v1933 = vpack.c.bf16 %v1905, %v1904
        %v1934 = vpack.c.bf16 %v1907, %v1906
        %v1935 = vpack.c.bf16 %v1909, %v1908
        %v1936 = vpack.c.bf16 %v1911, %v1910
        %v1937 = vpack.c.bf16 %v1913, %v1912
        %v1938 = vpack.c.bf16 %v1915, %v1914
        %v1939 = vpack.c.bf16 %v1917, %v1916
        %v1940 = vpack.c.bf16 %v1919, %v1918
        %v1941 = vpack.c.bf16 %v1921, %v1920
        %v1942 = vpack.c.bf16 %v1923, %v1922
        %v1943 = vpack.c.bf16 %v1925, %v1924
        %v1944 = vpack.c.bf16 %v1927, %v1926
        %v1945 = vpack.c.bf16 %v1929, %v1928
        %v1946 = vld [vmem:[%s1] sm:$0xf]
        %v1947 = vld [vmem:[%s1 + $0x4] sm:$0xf]
        %v1948 = vld [vmem:[%s1 + $0x8] sm:$0xf]
        %v1949 = vld [vmem:[%s1 + $0xc] sm:$0x3]
        %v1954 = vunpack.c.l.b16 %v1946
        %v1955 = vunpack.c.l.b16 %v1947
        %v1956 = vunpack.c.l.b16 %v1948
        %v1957 = vunpack.c.l.b16 %v1949
        %v1958 = vpack.c.b16 %v1955, %v1954
        %v1959 = vpack.c.b16 %v1957, %v1956
        %vm1961 = vcmask 220160
        %v1963 = vsel %vm1961, %v1930, 0
        %v1966 = vsel %vm1961, %v1931, 0
        %v1969 = vsel %vm1961, %v1932, 0
        %v1972 = vsel %vm1961, %v1933, 0
        %v1975 = vsel %vm1961, %v1934, 0
        %v1978 = vsel %vm1961, %v1935, 0
        %v1981 = vsel %vm1961, %v1936, 0
        %v1984 = vsel %vm1961, %v1937, 0
        %v1987 = vsel %vm1961, %v1938, 0
        %v1990 = vsel %vm1961, %v1939, 0
        %v1993 = vsel %vm1961, %v1940, 0
        %v1996 = vsel %vm1961, %v1941, 0
        %v1999 = vsel %vm1961, %v1942, 0
        %v2002 = vsel %vm1961, %v1943, 0
        %v2005 = vsel %vm1961, %v1944, 0
        %v2008 = vsel %vm1961, %v1945, 0
        %vm2010 = vcmask 1044480
        %v2011 = vsel %vm2010, 4294967295, 65535
        %v2012 = vsel %vm901, %v2011, 0
        %v2014 = vand.u32 %v1959, %v2012
        %2016 = vmatprep.subr.bf16.mxu0 0
        %2017 = vmatpush1.bf16.msra.mxu0 %v1958
        %2018 = vmatprep.subr.bf16.mxu0 0
        %2019 = vmatpush1.bf16.msra.mxu0 %v2014
        %2020 = vmatprep.subr.bf16.mxu0 0
        %2021 = vmatpush1.bf16.msra.mxu0 0
        %2022 = vmatprep.subr.bf16.mxu0 0
        %2023 = vmatpush1.bf16.msra.mxu0 0
        %2024 = vmatprep.subr.bf16.mxu0 0
        %2025 = vmatpush1.bf16.msra.mxu0 0
        %2026 = vmatprep.subr.bf16.mxu0 0
        %2027 = vmatpush1.bf16.msra.mxu0 0
        %2028 = vmatprep.subr.bf16.mxu0 0
        %2029 = vmatpush1.bf16.msra.mxu0 0
        %2030 = vmatprep.subr.bf16.mxu0 0
        %2031 = vmatpush1.bf16.msra.mxu0 0
        %2032 = vmatprep.subr.bf16.mxu0 0
        %2033 = vmatpush1.bf16.msra.mxu0 0
        %2034 = vmatprep.subr.bf16.mxu0 0
        %2035 = vmatpush1.bf16.msra.mxu0 0
        %2036 = vmatprep.subr.bf16.mxu0 0
        %2037 = vmatpush1.bf16.msra.mxu0 0
        %2038 = vmatprep.subr.bf16.mxu0 0
        %2039 = vmatpush1.bf16.msra.mxu0 0
        %2040 = vmatprep.subr.bf16.mxu0 0
        %2041 = vmatpush1.bf16.msra.mxu0 0
        %2042 = vmatprep.subr.bf16.mxu0 0
        %2043 = vmatpush1.bf16.msra.mxu0 0
        %2044 = vmatprep.subr.bf16.mxu0 0
        %2045 = vmatpush1.bf16.msra.mxu0 0
        %2046 = vmatprep.subr.bf16.mxu0 0
        %2047 = vmatpush1.bf16.msra.mxu0 0
        %2048 = vmatprep.mubr.bf16.mxu0 0
        %2049 = vmatmul.mubr.bf16.gmra.mrb[0].mxu0 %v1963
        %v2050 = vpop.f32.mrb[0].mxu0
        %v2051 = vadd.f32 0.0, %v2050
        %v2052 = vpop.f32.mrb[0].mxu0
        %v2053 = vpop.f32.mrb[0].mxu0
        %v2054 = vadd.f32 0.0, %v2053
        %v2055 = vpop.f32.mrb[0].mxu0
        %2056 = vmatprep.mubr.bf16.mxu0 0
        %2057 = vmatmul.mubr.bf16.gmra.mrb[0].mxu0 %v1966
        %v2058 = vpop.f32.mrb[0].mxu0
        %v2059 = vadd.f32 0.0, %v2058
        %v2060 = vpop.f32.mrb[0].mxu0
        %v2061 = vpop.f32.mrb[0].mxu0
        %v2062 = vadd.f32 0.0, %v2061
        %v2063 = vpop.f32.mrb[0].mxu0
        %2064 = vmatprep.mubr.bf16.mxu0 0
        %2065 = vmatmul.mubr.bf16.gmra.mrb[0].mxu0 %v1969
        %v2066 = vpop.f32.mrb[0].mxu0
        %v2067 = vadd.f32 0.0, %v2066
        %v2068 = vpop.f32.mrb[0].mxu0
        %v2069 = vpop.f32.mrb[0].mxu0
        %v2070 = vadd.f32 0.0, %v2069
        %v2071 = vpop.f32.mrb[0].mxu0
        %2072 = vmatprep.mubr.bf16.mxu0 0
        %2073 = vmatmul.mubr.bf16.gmra.mrb[0].mxu0 %v1972
        %v2074 = vpop.f32.mrb[0].mxu0
        %v2075 = vadd.f32 0.0, %v2074
        %v2076 = vpop.f32.mrb[0].mxu0
        %v2077 = vpop.f32.mrb[0].mxu0
        %v2078 = vadd.f32 0.0, %v2077
        %v2079 = vpop.f32.mrb[0].mxu0
        %2080 = vmatprep.mubr.bf16.mxu0 0
        %2081 = vmatmul.mubr.bf16.gmra.mrb[0].mxu0 %v1975
        %v2082 = vpop.f32.mrb[0].mxu0
        %v2083 = vadd.f32 0.0, %v2082
        %v2084 = vpop.f32.mrb[0].mxu0
        %v2085 = vpop.f32.mrb[0].mxu0
        %v2086 = vadd.f32 0.0, %v2085
        %v2087 = vpop.f32.mrb[0].mxu0
        %2088 = vmatprep.mubr.bf16.mxu0 0
        %2089 = vmatmul.mubr.bf16.gmra.mrb[0].mxu0 %v1978
        %v2090 = vpop.f32.mrb[0].mxu0
        %v2091 = vadd.f32 0.0, %v2090
        %v2092 = vpop.f32.mrb[0].mxu0
        %v2093 = vpop.f32.mrb[0].mxu0
        %v2094 = vadd.f32 0.0, %v2093
        %v2095 = vpop.f32.mrb[0].mxu0
        %2096 = vmatprep.mubr.bf16.mxu0 0
        %2097 = vmatmul.mubr.bf16.gmra.mrb[0].mxu0 %v1981
        %v2098 = vpop.f32.mrb[0].mxu0
        %v2099 = vadd.f32 0.0, %v2098
        %v2100 = vpop.f32.mrb[0].mxu0
        %v2101 = vpop.f32.mrb[0].mxu0
        %v2102 = vadd.f32 0.0, %v2101
        %v2103 = vpop.f32.mrb[0].mxu0
        %2104 = vmatprep.mubr.bf16.mxu0 0
        %2105 = vmatmul.mubr.bf16.gmra.mrb[0].mxu0 %v1984
        %v2106 = vpop.f32.mrb[0].mxu0
        %v2107 = vadd.f32 0.0, %v2106
        %v2108 = vpop.f32.mrb[0].mxu0
        %v2109 = vpop.f32.mrb[0].mxu0
        %v2110 = vadd.f32 0.0, %v2109
        %v2111 = vpop.f32.mrb[0].mxu0
        %2112 = vmatprep.mubr.bf16.mxu0 0
        %2113 = vmatmul.mubr.bf16.gmra.mrb[0].mxu0 %v1987
        %v2114 = vpop.f32.mrb[0].mxu0
        %v2115 = vadd.f32 0.0, %v2114
        %v2116 = vpop.f32.mrb[0].mxu0
        %v2117 = vpop.f32.mrb[0].mxu0
        %v2118 = vadd.f32 0.0, %v2117
        %v2119 = vpop.f32.mrb[0].mxu0
        %2120 = vmatprep.mubr.bf16.mxu0 0
        %2121 = vmatmul.mubr.bf16.gmra.mrb[0].mxu0 %v1990
        %v2122 = vpop.f32.mrb[0].mxu0
        %v2123 = vadd.f32 0.0, %v2122
        %v2124 = vpop.f32.mrb[0].mxu0
        %v2125 = vpop.f32.mrb[0].mxu0
        %v2126 = vadd.f32 0.0, %v2125
        %v2127 = vpop.f32.mrb[0].mxu0
        %2128 = vmatprep.mubr.bf16.mxu0 0
        %2129 = vmatmul.mubr.bf16.gmra.mrb[0].mxu0 %v1993
        %v2130 = vpop.f32.mrb[0].mxu0
        %v2131 = vadd.f32 0.0, %v2130
        %v2132 = vpop.f32.mrb[0].mxu0
        %v2133 = vpop.f32.mrb[0].mxu0
        %v2134 = vadd.f32 0.0, %v2133
        %v2135 = vpop.f32.mrb[0].mxu0
        %2136 = vmatprep.mubr.bf16.mxu0 0
        %2137 = vmatmul.mubr.bf16.gmra.mrb[0].mxu0 %v1996
        %v2138 = vpop.f32.mrb[0].mxu0
        %v2139 = vadd.f32 0.0, %v2138
        %v2140 = vpop.f32.mrb[0].mxu0
        %v2141 = vpop.f32.mrb[0].mxu0
        %v2142 = vadd.f32 0.0, %v2141
        %v2143 = vpop.f32.mrb[0].mxu0
        %2144 = vmatprep.mubr.bf16.mxu0 0
        %2145 = vmatmul.mubr.bf16.gmra.mrb[0].mxu0 %v1999
        %v2146 = vpop.f32.mrb[0].mxu0
        %v2147 = vadd.f32 0.0, %v2146
        %v2148 = vpop.f32.mrb[0].mxu0
        %v2149 = vpop.f32.mrb[0].mxu0
        %v2150 = vadd.f32 0.0, %v2149
        %v2151 = vpop.f32.mrb[0].mxu0
        %2152 = vmatprep.mubr.bf16.mxu0 0
        %2153 = vmatmul.mubr.bf16.gmra.mrb[0].mxu0 %v2002
        %v2154 = vpop.f32.mrb[0].mxu0
        %v2155 = vadd.f32 0.0, %v2154
        %v2156 = vpop.f32.mrb[0].mxu0
        %v2157 = vpop.f32.mrb[0].mxu0
        %v2158 = vadd.f32 0.0, %v2157
        %v2159 = vpop.f32.mrb[0].mxu0
        %2160 = vmatprep.mubr.bf16.mxu0 0
        %2161 = vmatmul.mubr.bf16.gmra.mrb[0].mxu0 %v2005
        %v2162 = vpop.f32.mrb[0].mxu0
        %v2163 = vadd.f32 0.0, %v2162
        %v2164 = vpop.f32.mrb[0].mxu0
        %v2165 = vpop.f32.mrb[0].mxu0
        %v2166 = vadd.f32 0.0, %v2165
        %v2167 = vpop.f32.mrb[0].mxu0
        %2168 = vmatprep.mubr.bf16.mxu0 0
        %2169 = vmatmul.mubr.bf16.gmra.mrb[0].mxu0 %v2008
        %v2170 = vpop.f32.mrb[0].mxu0
        %v2171 = vadd.f32 0.0, %v2170
        %v2172 = vpop.f32.mrb[0].mxu0
        %v2173 = vpop.f32.mrb[0].mxu0
        %v2174 = vadd.f32 0.0, %v2173
        %v2175 = vpop.f32.mrb[0].mxu0
        %2176 = vdwg.mxu0
        %v2177 = vld [vmem:[%s2] sm:$0x1]
        %v2179 = vlaneseq
        %v2180 = vshrl.u32 %v2179, 7
        %v2181 = vsub.s32 0, %v2180
        %v2182 = vrot.slane %v2177, %v2181
        %v2184 = vmul.f32 %v2051, %v2182
        %v2185 = vmul.f32 %v2054, %v2182
        %v2186 = vmul.f32 %v2059, %v2182
        %v2187 = vmul.f32 %v2062, %v2182
        %v2188 = vmul.f32 %v2067, %v2182
        %v2189 = vmul.f32 %v2070, %v2182
        %v2190 = vmul.f32 %v2075, %v2182
        %v2191 = vmul.f32 %v2078, %v2182
        %v2192 = vmul.f32 %v2083, %v2182
        %v2193 = vmul.f32 %v2086, %v2182
        %v2194 = vmul.f32 %v2091, %v2182
        %v2195 = vmul.f32 %v2094, %v2182
        %v2196 = vmul.f32 %v2099, %v2182
        %v2197 = vmul.f32 %v2102, %v2182
        %v2198 = vmul.f32 %v2107, %v2182
        %v2199 = vmul.f32 %v2110, %v2182
        %v2200 = vmul.f32 %v2115, %v2182
        %v2201 = vmul.f32 %v2118, %v2182
        %v2202 = vmul.f32 %v2123, %v2182
        %v2203 = vmul.f32 %v2126, %v2182
        %v2204 = vmul.f32 %v2131, %v2182
        %v2205 = vmul.f32 %v2134, %v2182
        %v2206 = vmul.f32 %v2139, %v2182
        %v2207 = vmul.f32 %v2142, %v2182
        %v2208 = vmul.f32 %v2147, %v2182
        %v2209 = vmul.f32 %v2150, %v2182
        %v2210 = vmul.f32 %v2155, %v2182
        %v2211 = vmul.f32 %v2158, %v2182
        %v2212 = vmul.f32 %v2163, %v2182
        %v2213 = vmul.f32 %v2166, %v2182
        %v2214 = vmul.f32 %v2171, %v2182
        %v2215 = vmul.f32 %v2174, %v2182
        %v2216 = vld [vmem:[%s3] sm:$0x1]
        %v2218 = vlaneseq
        %v2219 = vshrl.u32 %v2218, 7
        %v2220 = vsub.s32 0, %v2219
        %v2221 = vrot.slane %v2216, %v2220
        %v2223 = vadd.f32 %v2184, %v2221
        %v2224 = vadd.f32 %v2185, %v2221
        %v2225 = vadd.f32 %v2186, %v2221
        %v2226 = vadd.f32 %v2187, %v2221
        %v2227 = vadd.f32 %v2188, %v2221
        %v2228 = vadd.f32 %v2189, %v2221
        %v2229 = vadd.f32 %v2190, %v2221
        %v2230 = vadd.f32 %v2191, %v2221
        %v2231 = vadd.f32 %v2192, %v2221
        %v2232 = vadd.f32 %v2193, %v2221
        %v2233 = vadd.f32 %v2194, %v2221
        %v2234 = vadd.f32 %v2195, %v2221
        %v2235 = vadd.f32 %v2196, %v2221
        %v2236 = vadd.f32 %v2197, %v2221
        %v2237 = vadd.f32 %v2198, %v2221
        %v2238 = vadd.f32 %v2199, %v2221
        %v2239 = vadd.f32 %v2200, %v2221
        %v2240 = vadd.f32 %v2201, %v2221
        %v2241 = vadd.f32 %v2202, %v2221
        %v2242 = vadd.f32 %v2203, %v2221
        %v2243 = vadd.f32 %v2204, %v2221
        %v2244 = vadd.f32 %v2205, %v2221
        %v2245 = vadd.f32 %v2206, %v2221
        %v2246 = vadd.f32 %v2207, %v2221
        %v2247 = vadd.f32 %v2208, %v2221
        %v2248 = vadd.f32 %v2209, %v2221
        %v2249 = vadd.f32 %v2210, %v2221
        %v2250 = vadd.f32 %v2211, %v2221
        %v2251 = vadd.f32 %v2212, %v2221
        %v2252 = vadd.f32 %v2213, %v2221
        %v2253 = vadd.f32 %v2214, %v2221
        %v2254 = vadd.f32 %v2215, %v2221
        %v2255 = vmax.f32 %v2223, 0.0
        %v2256 = vmax.f32 %v2224, 0.0
        %v2257 = vmax.f32 %v2225, 0.0
        %v2258 = vmax.f32 %v2226, 0.0
        %v2259 = vmax.f32 %v2227, 0.0
        %v2260 = vmax.f32 %v2228, 0.0
        %v2261 = vmax.f32 %v2229, 0.0
        %v2262 = vmax.f32 %v2230, 0.0
        %v2263 = vmax.f32 %v2231, 0.0
        %v2264 = vmax.f32 %v2232, 0.0
        %v2265 = vmax.f32 %v2233, 0.0
        %v2266 = vmax.f32 %v2234, 0.0
        %v2267 = vmax.f32 %v2235, 0.0
        %v2268 = vmax.f32 %v2236, 0.0
        %v2269 = vmax.f32 %v2237, 0.0
        %v2270 = vmax.f32 %v2238, 0.0
        %v2271 = vmax.f32 %v2239, 0.0
        %v2272 = vmax.f32 %v2240, 0.0
        %v2273 = vmax.f32 %v2241, 0.0
        %v2274 = vmax.f32 %v2242, 0.0
        %v2275 = vmax.f32 %v2243, 0.0
        %v2276 = vmax.f32 %v2244, 0.0
        %v2277 = vmax.f32 %v2245, 0.0
        %v2278 = vmax.f32 %v2246, 0.0
        %v2279 = vmax.f32 %v2247, 0.0
        %v2280 = vmax.f32 %v2248, 0.0
        %v2281 = vmax.f32 %v2249, 0.0
        %v2282 = vmax.f32 %v2250, 0.0
        %v2283 = vmax.f32 %v2251, 0.0
        %v2284 = vmax.f32 %v2252, 0.0
        %v2285 = vmax.f32 %v2253, 0.0
        %v2286 = vmax.f32 %v2254, 0.0
        %v2319 = vcombine.high %v2255, %v2255
        %v2321 = vunpack.c.l.s4 1983009808
        %v2322 = vunpack.c.0.s8 %v2321
        %v2323 = vlaneseq
        %v2324 = vshrl.u32 %v2323, 7
        %v2325 = vsub.s32 %v2322, %v2324
        %v2326 = vrot.slane %v2255, %v2325
        %v2328 = vunpack.c.l.s4 1983009808
        %v2329 = vunpack.c.0.s8 %v2328
        %v2330 = vlaneseq
        %v2331 = vshrl.u32 %v2330, 7
        %v2332 = vsub.s32 %v2329, %v2331
        %v2333 = vrot.slane %v2319, %v2332
        %v2334 = vcombine.high %v2326, %v2326
        %v2335 = vcombine.high %v2333, %v2333
        %v2336 = vcombine.high %v2256, %v2256
        %v2338 = vunpack.c.l.s4 1983009808
        %v2339 = vunpack.c.0.s8 %v2338
        %v2340 = vlaneseq
        %v2341 = vshrl.u32 %v2340, 7
        %v2342 = vsub.s32 %v2339, %v2341
        %v2343 = vrot.slane %v2256, %v2342
        %v2345 = vunpack.c.l.s4 1983009808
        %v2346 = vunpack.c.0.s8 %v2345
        %v2347 = vlaneseq
        %v2348 = vshrl.u32 %v2347, 7
        %v2349 = vsub.s32 %v2346, %v2348
        %v2350 = vrot.slane %v2336, %v2349
        %v2351 = vcombine.high %v2343, %v2343
        %v2352 = vcombine.high %v2350, %v2350
        %v2353 = vcombine.high %v2257, %v2257
        %v2355 = vunpack.c.l.s4 1983009808
        %v2356 = vunpack.c.0.s8 %v2355
        %v2357 = vlaneseq
        %v2358 = vshrl.u32 %v2357, 7
        %v2359 = vsub.s32 %v2356, %v2358
        %v2360 = vrot.slane %v2257, %v2359
        %v2362 = vunpack.c.l.s4 1983009808
        %v2363 = vunpack.c.0.s8 %v2362
        %v2364 = vlaneseq
        %v2365 = vshrl.u32 %v2364, 7
        %v2366 = vsub.s32 %v2363, %v2365
        %v2367 = vrot.slane %v2353, %v2366
        %v2368 = vcombine.high %v2360, %v2360
        %v2369 = vcombine.high %v2367, %v2367
        %v2370 = vcombine.high %v2258, %v2258
        %v2372 = vunpack.c.l.s4 1983009808
        %v2373 = vunpack.c.0.s8 %v2372
        %v2374 = vlaneseq
        %v2375 = vshrl.u32 %v2374, 7
        %v2376 = vsub.s32 %v2373, %v2375
        %v2377 = vrot.slane %v2258, %v2376
        %v2379 = vunpack.c.l.s4 1983009808
        %v2380 = vunpack.c.0.s8 %v2379
        %v2381 = vlaneseq
        %v2382 = vshrl.u32 %v2381, 7
        %v2383 = vsub.s32 %v2380, %v2382
        %v2384 = vrot.slane %v2370, %v2383
        %v2385 = vcombine.high %v2377, %v2377
        %v2386 = vcombine.high %v2384, %v2384
        %v2387 = vcombine.high %v2259, %v2259
        %v2389 = vunpack.c.l.s4 1983009808
        %v2390 = vunpack.c.0.s8 %v2389
        %v2391 = vlaneseq
        %v2392 = vshrl.u32 %v2391, 7
        %v2393 = vsub.s32 %v2390, %v2392
        %v2394 = vrot.slane %v2259, %v2393
        %v2396 = vunpack.c.l.s4 1983009808
        %v2397 = vunpack.c.0.s8 %v2396
        %v2398 = vlaneseq
        %v2399 = vshrl.u32 %v2398, 7
        %v2400 = vsub.s32 %v2397, %v2399
        %v2401 = vrot.slane %v2387, %v2400
        %v2402 = vcombine.high %v2394, %v2394
        %v2403 = vcombine.high %v2401, %v2401
        %v2404 = vcombine.high %v2260, %v2260
        %v2406 = vunpack.c.l.s4 1983009808
        %v2407 = vunpack.c.0.s8 %v2406
        %v2408 = vlaneseq
        %v2409 = vshrl.u32 %v2408, 7
        %v2410 = vsub.s32 %v2407, %v2409
        %v2411 = vrot.slane %v2260, %v2410
        %v2413 = vunpack.c.l.s4 1983009808
        %v2414 = vunpack.c.0.s8 %v2413
        %v2415 = vlaneseq
        %v2416 = vshrl.u32 %v2415, 7
        %v2417 = vsub.s32 %v2414, %v2416
        %v2418 = vrot.slane %v2404, %v2417
        %v2419 = vcombine.high %v2411, %v2411
        %v2420 = vcombine.high %v2418, %v2418
        %v2421 = vcombine.high %v2261, %v2261
        %v2423 = vunpack.c.l.s4 1983009808
        %v2424 = vunpack.c.0.s8 %v2423
        %v2425 = vlaneseq
        %v2426 = vshrl.u32 %v2425, 7
        %v2427 = vsub.s32 %v2424, %v2426
        %v2428 = vrot.slane %v2261, %v2427
        %v2430 = vunpack.c.l.s4 1983009808
        %v2431 = vunpack.c.0.s8 %v2430
        %v2432 = vlaneseq
        %v2433 = vshrl.u32 %v2432, 7
        %v2434 = vsub.s32 %v2431, %v2433
        %v2435 = vrot.slane %v2421, %v2434
        %v2436 = vcombine.high %v2428, %v2428
        %v2437 = vcombine.high %v2435, %v2435
        %v2438 = vcombine.high %v2262, %v2262
        %v2440 = vunpack.c.l.s4 1983009808
        %v2441 = vunpack.c.0.s8 %v2440
        %v2442 = vlaneseq
        %v2443 = vshrl.u32 %v2442, 7
        %v2444 = vsub.s32 %v2441, %v2443
        %v2445 = vrot.slane %v2262, %v2444
        %v2447 = vunpack.c.l.s4 1983009808
        %v2448 = vunpack.c.0.s8 %v2447
        %v2449 = vlaneseq
        %v2450 = vshrl.u32 %v2449, 7
        %v2451 = vsub.s32 %v2448, %v2450
        %v2452 = vrot.slane %v2438, %v2451
        %v2453 = vcombine.high %v2445, %v2445
        %v2454 = vcombine.high %v2452, %v2452
        %v2455 = vcombine.high %v2263, %v2263
        %v2457 = vunpack.c.l.s4 1983009808
        %v2458 = vunpack.c.0.s8 %v2457
        %v2459 = vlaneseq
        %v2460 = vshrl.u32 %v2459, 7
        %v2461 = vsub.s32 %v2458, %v2460
        %v2462 = vrot.slane %v2263, %v2461
        %v2464 = vunpack.c.l.s4 1983009808
        %v2465 = vunpack.c.0.s8 %v2464
        %v2466 = vlaneseq
        %v2467 = vshrl.u32 %v2466, 7
        %v2468 = vsub.s32 %v2465, %v2467
        %v2469 = vrot.slane %v2455, %v2468
        %v2470 = vcombine.high %v2462, %v2462
        %v2471 = vcombine.high %v2469, %v2469
        %v2472 = vcombine.high %v2264, %v2264
        %v2474 = vunpack.c.l.s4 1983009808
        %v2475 = vunpack.c.0.s8 %v2474
        %v2476 = vlaneseq
        %v2477 = vshrl.u32 %v2476, 7
        %v2478 = vsub.s32 %v2475, %v2477
        %v2479 = vrot.slane %v2264, %v2478
        %v2481 = vunpack.c.l.s4 1983009808
        %v2482 = vunpack.c.0.s8 %v2481
        %v2483 = vlaneseq
        %v2484 = vshrl.u32 %v2483, 7
        %v2485 = vsub.s32 %v2482, %v2484
        %v2486 = vrot.slane %v2472, %v2485
        %v2487 = vcombine.high %v2479, %v2479
        %v2488 = vcombine.high %v2486, %v2486
        %v2489 = vcombine.high %v2265, %v2265
        %v2491 = vunpack.c.l.s4 1983009808
        %v2492 = vunpack.c.0.s8 %v2491
        %v2493 = vlaneseq
        %v2494 = vshrl.u32 %v2493, 7
        %v2495 = vsub.s32 %v2492, %v2494
        %v2496 = vrot.slane %v2265, %v2495
        %v2498 = vunpack.c.l.s4 1983009808
        %v2499 = vunpack.c.0.s8 %v2498
        %v2500 = vlaneseq
        %v2501 = vshrl.u32 %v2500, 7
        %v2502 = vsub.s32 %v2499, %v2501
        %v2503 = vrot.slane %v2489, %v2502
        %v2504 = vcombine.high %v2496, %v2496
        %v2505 = vcombine.high %v2503, %v2503
        %v2506 = vcombine.high %v2266, %v2266
        %v2508 = vunpack.c.l.s4 1983009808
        %v2509 = vunpack.c.0.s8 %v2508
        %v2510 = vlaneseq
        %v2511 = vshrl.u32 %v2510, 7
        %v2512 = vsub.s32 %v2509, %v2511
        %v2513 = vrot.slane %v2266, %v2512
        %v2515 = vunpack.c.l.s4 1983009808
        %v2516 = vunpack.c.0.s8 %v2515
        %v2517 = vlaneseq
        %v2518 = vshrl.u32 %v2517, 7
        %v2519 = vsub.s32 %v2516, %v2518
        %v2520 = vrot.slane %v2506, %v2519
        %v2521 = vcombine.high %v2513, %v2513
        %v2522 = vcombine.high %v2520, %v2520
        %v2523 = vcombine.high %v2267, %v2267
        %v2525 = vunpack.c.l.s4 1983009808
        %v2526 = vunpack.c.0.s8 %v2525
        %v2527 = vlaneseq
        %v2528 = vshrl.u32 %v2527, 7
        %v2529 = vsub.s32 %v2526, %v2528
        %v2530 = vrot.slane %v2267, %v2529
        %v2532 = vunpack.c.l.s4 1983009808
        %v2533 = vunpack.c.0.s8 %v2532
        %v2534 = vlaneseq
        %v2535 = vshrl.u32 %v2534, 7
        %v2536 = vsub.s32 %v2533, %v2535
        %v2537 = vrot.slane %v2523, %v2536
        %v2538 = vcombine.high %v2530, %v2530
        %v2539 = vcombine.high %v2537, %v2537
        %v2540 = vcombine.high %v2268, %v2268
        %v2542 = vunpack.c.l.s4 1983009808
        %v2543 = vunpack.c.0.s8 %v2542
        %v2544 = vlaneseq
        %v2545 = vshrl.u32 %v2544, 7
        %v2546 = vsub.s32 %v2543, %v2545
        %v2547 = vrot.slane %v2268, %v2546
        %v2549 = vunpack.c.l.s4 1983009808
        %v2550 = vunpack.c.0.s8 %v2549
        %v2551 = vlaneseq
        %v2552 = vshrl.u32 %v2551, 7
        %v2553 = vsub.s32 %v2550, %v2552
        %v2554 = vrot.slane %v2540, %v2553
        %v2555 = vcombine.high %v2547, %v2547
        %v2556 = vcombine.high %v2554, %v2554
        %v2557 = vcombine.high %v2269, %v2269
        %v2559 = vunpack.c.l.s4 1983009808
        %v2560 = vunpack.c.0.s8 %v2559
        %v2561 = vlaneseq
        %v2562 = vshrl.u32 %v2561, 7
        %v2563 = vsub.s32 %v2560, %v2562
        %v2564 = vrot.slane %v2269, %v2563
        %v2566 = vunpack.c.l.s4 1983009808
        %v2567 = vunpack.c.0.s8 %v2566
        %v2568 = vlaneseq
        %v2569 = vshrl.u32 %v2568, 7
        %v2570 = vsub.s32 %v2567, %v2569
        %v2571 = vrot.slane %v2557, %v2570
        %v2572 = vcombine.high %v2564, %v2564
        %v2573 = vcombine.high %v2571, %v2571
        %v2574 = vcombine.high %v2270, %v2270
        %v2576 = vunpack.c.l.s4 1983009808
        %v2577 = vunpack.c.0.s8 %v2576
        %v2578 = vlaneseq
        %v2579 = vshrl.u32 %v2578, 7
        %v2580 = vsub.s32 %v2577, %v2579
        %v2581 = vrot.slane %v2270, %v2580
        %v2583 = vunpack.c.l.s4 1983009808
        %v2584 = vunpack.c.0.s8 %v2583
        %v2585 = vlaneseq
        %v2586 = vshrl.u32 %v2585, 7
        %v2587 = vsub.s32 %v2584, %v2586
        %v2588 = vrot.slane %v2574, %v2587
        %v2589 = vcombine.high %v2581, %v2581
        %v2590 = vcombine.high %v2588, %v2588
        %v2591 = vcombine.high %v2271, %v2271
        %v2593 = vunpack.c.l.s4 1983009808
        %v2594 = vunpack.c.0.s8 %v2593
        %v2595 = vlaneseq
        %v2596 = vshrl.u32 %v2595, 7
        %v2597 = vsub.s32 %v2594, %v2596
        %v2598 = vrot.slane %v2271, %v2597
        %v2600 = vunpack.c.l.s4 1983009808
        %v2601 = vunpack.c.0.s8 %v2600
        %v2602 = vlaneseq
        %v2603 = vshrl.u32 %v2602, 7
        %v2604 = vsub.s32 %v2601, %v2603
        %v2605 = vrot.slane %v2591, %v2604
        %v2606 = vcombine.high %v2598, %v2598
        %v2607 = vcombine.high %v2605, %v2605
        %v2608 = vcombine.high %v2272, %v2272
        %v2610 = vunpack.c.l.s4 1983009808
        %v2611 = vunpack.c.0.s8 %v2610
        %v2612 = vlaneseq
        %v2613 = vshrl.u32 %v2612, 7
        %v2614 = vsub.s32 %v2611, %v2613
        %v2615 = vrot.slane %v2272, %v2614
        %v2617 = vunpack.c.l.s4 1983009808
        %v2618 = vunpack.c.0.s8 %v2617
        %v2619 = vlaneseq
        %v2620 = vshrl.u32 %v2619, 7
        %v2621 = vsub.s32 %v2618, %v2620
        %v2622 = vrot.slane %v2608, %v2621
        %v2623 = vcombine.high %v2615, %v2615
        %v2624 = vcombine.high %v2622, %v2622
        %v2625 = vcombine.high %v2273, %v2273
        %v2627 = vunpack.c.l.s4 1983009808
        %v2628 = vunpack.c.0.s8 %v2627
        %v2629 = vlaneseq
        %v2630 = vshrl.u32 %v2629, 7
        %v2631 = vsub.s32 %v2628, %v2630
        %v2632 = vrot.slane %v2273, %v2631
        %v2634 = vunpack.c.l.s4 1983009808
        %v2635 = vunpack.c.0.s8 %v2634
        %v2636 = vlaneseq
        %v2637 = vshrl.u32 %v2636, 7
        %v2638 = vsub.s32 %v2635, %v2637
        %v2639 = vrot.slane %v2625, %v2638
        %v2640 = vcombine.high %v2632, %v2632
        %v2641 = vcombine.high %v2639, %v2639
        %v2642 = vcombine.high %v2274, %v2274
        %v2644 = vunpack.c.l.s4 1983009808
        %v2645 = vunpack.c.0.s8 %v2644
        %v2646 = vlaneseq
        %v2647 = vshrl.u32 %v2646, 7
        %v2648 = vsub.s32 %v2645, %v2647
        %v2649 = vrot.slane %v2274, %v2648
        %v2651 = vunpack.c.l.s4 1983009808
        %v2652 = vunpack.c.0.s8 %v2651
        %v2653 = vlaneseq
        %v2654 = vshrl.u32 %v2653, 7
        %v2655 = vsub.s32 %v2652, %v2654
        %v2656 = vrot.slane %v2642, %v2655
        %v2657 = vcombine.high %v2649, %v2649
        %v2658 = vcombine.high %v2656, %v2656
        %v2659 = vcombine.high %v2275, %v2275
        %v2661 = vunpack.c.l.s4 1983009808
        %v2662 = vunpack.c.0.s8 %v2661
        %v2663 = vlaneseq
        %v2664 = vshrl.u32 %v2663, 7
        %v2665 = vsub.s32 %v2662, %v2664
        %v2666 = vrot.slane %v2275, %v2665
        %v2668 = vunpack.c.l.s4 1983009808
        %v2669 = vunpack.c.0.s8 %v2668
        %v2670 = vlaneseq
        %v2671 = vshrl.u32 %v2670, 7
        %v2672 = vsub.s32 %v2669, %v2671
        %v2673 = vrot.slane %v2659, %v2672
        %v2674 = vcombine.high %v2666, %v2666
        %v2675 = vcombine.high %v2673, %v2673
        %v2676 = vcombine.high %v2276, %v2276
        %v2678 = vunpack.c.l.s4 1983009808
        %v2679 = vunpack.c.0.s8 %v2678
        %v2680 = vlaneseq
        %v2681 = vshrl.u32 %v2680, 7
        %v2682 = vsub.s32 %v2679, %v2681
        %v2683 = vrot.slane %v2276, %v2682
        %v2685 = vunpack.c.l.s4 1983009808
        %v2686 = vunpack.c.0.s8 %v2685
        %v2687 = vlaneseq
        %v2688 = vshrl.u32 %v2687, 7
        %v2689 = vsub.s32 %v2686, %v2688
        %v2690 = vrot.slane %v2676, %v2689
        %v2691 = vcombine.high %v2683, %v2683
        %v2692 = vcombine.high %v2690, %v2690
        %v2693 = vcombine.high %v2277, %v2277
        %v2695 = vunpack.c.l.s4 1983009808
        %v2696 = vunpack.c.0.s8 %v2695
        %v2697 = vlaneseq
        %v2698 = vshrl.u32 %v2697, 7
        %v2699 = vsub.s32 %v2696, %v2698
        %v2700 = vrot.slane %v2277, %v2699
        %v2702 = vunpack.c.l.s4 1983009808
        %v2703 = vunpack.c.0.s8 %v2702
        %v2704 = vlaneseq
        %v2705 = vshrl.u32 %v2704, 7
        %v2706 = vsub.s32 %v2703, %v2705
        %v2707 = vrot.slane %v2693, %v2706
        %v2708 = vcombine.high %v2700, %v2700
        %v2709 = vcombine.high %v2707, %v2707
        %v2710 = vcombine.high %v2278, %v2278
        %v2712 = vunpack.c.l.s4 1983009808
        %v2713 = vunpack.c.0.s8 %v2712
        %v2714 = vlaneseq
        %v2715 = vshrl.u32 %v2714, 7
        %v2716 = vsub.s32 %v2713, %v2715
        %v2717 = vrot.slane %v2278, %v2716
        %v2719 = vunpack.c.l.s4 1983009808
        %v2720 = vunpack.c.0.s8 %v2719
        %v2721 = vlaneseq
        %v2722 = vshrl.u32 %v2721, 7
        %v2723 = vsub.s32 %v2720, %v2722
        %v2724 = vrot.slane %v2710, %v2723
        %v2725 = vcombine.high %v2717, %v2717
        %v2726 = vcombine.high %v2724, %v2724
        %v2727 = vcombine.high %v2279, %v2279
        %v2729 = vunpack.c.l.s4 1983009808
        %v2730 = vunpack.c.0.s8 %v2729
        %v2731 = vlaneseq
        %v2732 = vshrl.u32 %v2731, 7
        %v2733 = vsub.s32 %v2730, %v2732
        %v2734 = vrot.slane %v2279, %v2733
        %v2736 = vunpack.c.l.s4 1983009808
        %v2737 = vunpack.c.0.s8 %v2736
        %v2738 = vlaneseq
        %v2739 = vshrl.u32 %v2738, 7
        %v2740 = vsub.s32 %v2737, %v2739
        %v2741 = vrot.slane %v2727, %v2740
        %v2742 = vcombine.high %v2734, %v2734
        %v2743 = vcombine.high %v2741, %v2741
        %v2744 = vcombine.high %v2280, %v2280
        %v2746 = vunpack.c.l.s4 1983009808
        %v2747 = vunpack.c.0.s8 %v2746
        %v2748 = vlaneseq
        %v2749 = vshrl.u32 %v2748, 7
        %v2750 = vsub.s32 %v2747, %v2749
        %v2751 = vrot.slane %v2280, %v2750
        %v2753 = vunpack.c.l.s4 1983009808
        %v2754 = vunpack.c.0.s8 %v2753
        %v2755 = vlaneseq
        %v2756 = vshrl.u32 %v2755, 7
        %v2757 = vsub.s32 %v2754, %v2756
        %v2758 = vrot.slane %v2744, %v2757
        %v2759 = vcombine.high %v2751, %v2751
        %v2760 = vcombine.high %v2758, %v2758
        %v2761 = vcombine.high %v2281, %v2281
        %v2763 = vunpack.c.l.s4 1983009808
        %v2764 = vunpack.c.0.s8 %v2763
        %v2765 = vlaneseq
        %v2766 = vshrl.u32 %v2765, 7
        %v2767 = vsub.s32 %v2764, %v2766
        %v2768 = vrot.slane %v2281, %v2767
        %v2770 = vunpack.c.l.s4 1983009808
        %v2771 = vunpack.c.0.s8 %v2770
        %v2772 = vlaneseq
        %v2773 = vshrl.u32 %v2772, 7
        %v2774 = vsub.s32 %v2771, %v2773
        %v2775 = vrot.slane %v2761, %v2774
        %v2776 = vcombine.high %v2768, %v2768
        %v2777 = vcombine.high %v2775, %v2775
        %v2778 = vcombine.high %v2282, %v2282
        %v2780 = vunpack.c.l.s4 1983009808
        %v2781 = vunpack.c.0.s8 %v2780
        %v2782 = vlaneseq
        %v2783 = vshrl.u32 %v2782, 7
        %v2784 = vsub.s32 %v2781, %v2783
        %v2785 = vrot.slane %v2282, %v2784
        %v2787 = vunpack.c.l.s4 1983009808
        %v2788 = vunpack.c.0.s8 %v2787
        %v2789 = vlaneseq
        %v2790 = vshrl.u32 %v2789, 7
        %v2791 = vsub.s32 %v2788, %v2790
        %v2792 = vrot.slane %v2778, %v2791
        %v2793 = vcombine.high %v2785, %v2785
        %v2794 = vcombine.high %v2792, %v2792
        %v2795 = vcombine.high %v2283, %v2283
        %v2797 = vunpack.c.l.s4 1983009808
        %v2798 = vunpack.c.0.s8 %v2797
        %v2799 = vlaneseq
        %v2800 = vshrl.u32 %v2799, 7
        %v2801 = vsub.s32 %v2798, %v2800
        %v2802 = vrot.slane %v2283, %v2801
        %v2804 = vunpack.c.l.s4 1983009808
        %v2805 = vunpack.c.0.s8 %v2804
        %v2806 = vlaneseq
        %v2807 = vshrl.u32 %v2806, 7
        %v2808 = vsub.s32 %v2805, %v2807
        %v2809 = vrot.slane %v2795, %v2808
        %v2810 = vcombine.high %v2802, %v2802
        %v2811 = vcombine.high %v2809, %v2809
        %v2812 = vcombine.high %v2284, %v2284
        %v2814 = vunpack.c.l.s4 1983009808
        %v2815 = vunpack.c.0.s8 %v2814
        %v2816 = vlaneseq
        %v2817 = vshrl.u32 %v2816, 7
        %v2818 = vsub.s32 %v2815, %v2817
        %v2819 = vrot.slane %v2284, %v2818
        %v2821 = vunpack.c.l.s4 1983009808
        %v2822 = vunpack.c.0.s8 %v2821
        %v2823 = vlaneseq
        %v2824 = vshrl.u32 %v2823, 7
        %v2825 = vsub.s32 %v2822, %v2824
        %v2826 = vrot.slane %v2812, %v2825
        %v2827 = vcombine.high %v2819, %v2819
        %v2828 = vcombine.high %v2826, %v2826
        %v2829 = vcombine.high %v2285, %v2285
        %v2831 = vunpack.c.l.s4 1983009808
        %v2832 = vunpack.c.0.s8 %v2831
        %v2833 = vlaneseq
        %v2834 = vshrl.u32 %v2833, 7
        %v2835 = vsub.s32 %v2832, %v2834
        %v2836 = vrot.slane %v2285, %v2835
        %v2838 = vunpack.c.l.s4 1983009808
        %v2839 = vunpack.c.0.s8 %v2838
        %v2840 = vlaneseq
        %v2841 = vshrl.u32 %v2840, 7
        %v2842 = vsub.s32 %v2839, %v2841
        %v2843 = vrot.slane %v2829, %v2842
        %v2844 = vcombine.high %v2836, %v2836
        %v2845 = vcombine.high %v2843, %v2843
        %v2846 = vcombine.high %v2286, %v2286
        %v2848 = vunpack.c.l.s4 1983009808
        %v2849 = vunpack.c.0.s8 %v2848
        %v2850 = vlaneseq
        %v2851 = vshrl.u32 %v2850, 7
        %v2852 = vsub.s32 %v2849, %v2851
        %v2853 = vrot.slane %v2286, %v2852
        %v2855 = vunpack.c.l.s4 1983009808
        %v2856 = vunpack.c.0.s8 %v2855
        %v2857 = vlaneseq
        %v2858 = vshrl.u32 %v2857, 7
        %v2859 = vsub.s32 %v2856, %v2858
        %v2860 = vrot.slane %v2846, %v2859
        %v2861 = vcombine.high %v2853, %v2853
        %v2862 = vcombine.high %v2860, %v2860
        %vm2991 = vcmask 254976
        %v2992 = vsel %vm2991, %v2326, -inf
        %v2993 = vrot.slane %v2992, 4
        %v2994 = vmax.f32 %v2992, %v2993
        %v2995 = vrot.slane %v2994, 2
        %v2996 = vmax.f32 %v2994, %v2995
        %v2997 = vrot.slane %v2996, 1
        %v2998 = vmax.f32 %v2996, %v2997
        %v2999 = vsel %vm2991, %v2334, -inf
        %v3000 = vrot.slane %v2999, 4
        %v3001 = vmax.f32 %v2999, %v3000
        %v3002 = vrot.slane %v3001, 2
        %v3003 = vmax.f32 %v3001, %v3002
        %v3004 = vrot.slane %v3003, 1
        %v3005 = vmax.f32 %v3003, %v3004
        %v3006 = vsel %vm2991, %v2333, -inf
        %v3007 = vrot.slane %v3006, 4
        %v3008 = vmax.f32 %v3006, %v3007
        %v3009 = vrot.slane %v3008, 2
        %v3010 = vmax.f32 %v3008, %v3009
        %v3011 = vrot.slane %v3010, 1
        %v3012 = vmax.f32 %v3010, %v3011
        %v3013 = vsel %vm2991, %v2335, -inf
        %v3014 = vrot.slane %v3013, 4
        %v3015 = vmax.f32 %v3013, %v3014
        %v3016 = vrot.slane %v3015, 2
        %v3017 = vmax.f32 %v3015, %v3016
        %v3018 = vrot.slane %v3017, 1
        %v3019 = vmax.f32 %v3017, %v3018
        %v3020 = vsel %vm2991, %v2343, -inf
        %v3021 = vrot.slane %v3020, 4
        %v3022 = vmax.f32 %v3020, %v3021
        %v3023 = vrot.slane %v3022, 2
        %v3024 = vmax.f32 %v3022, %v3023
        %v3025 = vrot.slane %v3024, 1
        %v3026 = vmax.f32 %v3024, %v3025
        %v3027 = vsel %vm2991, %v2351, -inf
        %v3028 = vrot.slane %v3027, 4
        %v3029 = vmax.f32 %v3027, %v3028
        %v3030 = vrot.slane %v3029, 2
        %v3031 = vmax.f32 %v3029, %v3030
        %v3032 = vrot.slane %v3031, 1
        %v3033 = vmax.f32 %v3031, %v3032
        %v3034 = vsel %vm2991, %v2350, -inf
        %v3035 = vrot.slane %v3034, 4
        %v3036 = vmax.f32 %v3034, %v3035
        %v3037 = vrot.slane %v3036, 2
        %v3038 = vmax.f32 %v3036, %v3037
        %v3039 = vrot.slane %v3038, 1
        %v3040 = vmax.f32 %v3038, %v3039
        %v3041 = vsel %vm2991, %v2352, -inf
        %v3042 = vrot.slane %v3041, 4
        %v3043 = vmax.f32 %v3041, %v3042
        %v3044 = vrot.slane %v3043, 2
        %v3045 = vmax.f32 %v3043, %v3044
        %v3046 = vrot.slane %v3045, 1
        %v3047 = vmax.f32 %v3045, %v3046
        %v3048 = vsel %vm2991, %v2360, -inf
        %v3049 = vrot.slane %v3048, 4
        %v3050 = vmax.f32 %v3048, %v3049
        %v3051 = vrot.slane %v3050, 2
        %v3052 = vmax.f32 %v3050, %v3051
        %v3053 = vrot.slane %v3052, 1
        %v3054 = vmax.f32 %v3052, %v3053
        %v3055 = vsel %vm2991, %v2368, -inf
        %v3056 = vrot.slane %v3055, 4
        %v3057 = vmax.f32 %v3055, %v3056
        %v3058 = vrot.slane %v3057, 2
        %v3059 = vmax.f32 %v3057, %v3058
        %v3060 = vrot.slane %v3059, 1
        %v3061 = vmax.f32 %v3059, %v3060
        %v3062 = vsel %vm2991, %v2367, -inf
        %v3063 = vrot.slane %v3062, 4
        %v3064 = vmax.f32 %v3062, %v3063
        %v3065 = vrot.slane %v3064, 2
        %v3066 = vmax.f32 %v3064, %v3065
        %v3067 = vrot.slane %v3066, 1
        %v3068 = vmax.f32 %v3066, %v3067
        %v3069 = vsel %vm2991, %v2369, -inf
        %v3070 = vrot.slane %v3069, 4
        %v3071 = vmax.f32 %v3069, %v3070
        %v3072 = vrot.slane %v3071, 2
        %v3073 = vmax.f32 %v3071, %v3072
        %v3074 = vrot.slane %v3073, 1
        %v3075 = vmax.f32 %v3073, %v3074
        %v3076 = vsel %vm2991, %v2377, -inf
        %v3077 = vrot.slane %v3076, 4
        %v3078 = vmax.f32 %v3076, %v3077
        %v3079 = vrot.slane %v3078, 2
        %v3080 = vmax.f32 %v3078, %v3079
        %v3081 = vrot.slane %v3080, 1
        %v3082 = vmax.f32 %v3080, %v3081
        %v3083 = vsel %vm2991, %v2385, -inf
        %v3084 = vrot.slane %v3083, 4
        %v3085 = vmax.f32 %v3083, %v3084
        %v3086 = vrot.slane %v3085, 2
        %v3087 = vmax.f32 %v3085, %v3086
        %v3088 = vrot.slane %v3087, 1
        %v3089 = vmax.f32 %v3087, %v3088
        %v3090 = vsel %vm2991, %v2384, -inf
        %v3091 = vrot.slane %v3090, 4
        %v3092 = vmax.f32 %v3090, %v3091
        %v3093 = vrot.slane %v3092, 2
        %v3094 = vmax.f32 %v3092, %v3093
        %v3095 = vrot.slane %v3094, 1
        %v3096 = vmax.f32 %v3094, %v3095
        %v3097 = vsel %vm2991, %v2386, -inf
        %v3098 = vrot.slane %v3097, 4
        %v3099 = vmax.f32 %v3097, %v3098
        %v3100 = vrot.slane %v3099, 2
        %v3101 = vmax.f32 %v3099, %v3100
        %v3102 = vrot.slane %v3101, 1
        %v3103 = vmax.f32 %v3101, %v3102
        %v3104 = vsel %vm2991, %v2394, -inf
        %v3105 = vrot.slane %v3104, 4
        %v3106 = vmax.f32 %v3104, %v3105
        %v3107 = vrot.slane %v3106, 2
        %v3108 = vmax.f32 %v3106, %v3107
        %v3109 = vrot.slane %v3108, 1
        %v3110 = vmax.f32 %v3108, %v3109
        %v3111 = vsel %vm2991, %v2402, -inf
        %v3112 = vrot.slane %v3111, 4
        %v3113 = vmax.f32 %v3111, %v3112
        %v3114 = vrot.slane %v3113, 2
        %v3115 = vmax.f32 %v3113, %v3114
        %v3116 = vrot.slane %v3115, 1
        %v3117 = vmax.f32 %v3115, %v3116
        %v3118 = vsel %vm2991, %v2401, -inf
        %v3119 = vrot.slane %v3118, 4
        %v3120 = vmax.f32 %v3118, %v3119
        %v3121 = vrot.slane %v3120, 2
        %v3122 = vmax.f32 %v3120, %v3121
        %v3123 = vrot.slane %v3122, 1
        %v3124 = vmax.f32 %v3122, %v3123
        %v3125 = vsel %vm2991, %v2403, -inf
        %v3126 = vrot.slane %v3125, 4
        %v3127 = vmax.f32 %v3125, %v3126
        %v3128 = vrot.slane %v3127, 2
        %v3129 = vmax.f32 %v3127, %v3128
        %v3130 = vrot.slane %v3129, 1
        %v3131 = vmax.f32 %v3129, %v3130
        %v3132 = vsel %vm2991, %v2411, -inf
        %v3133 = vrot.slane %v3132, 4
        %v3134 = vmax.f32 %v3132, %v3133
        %v3135 = vrot.slane %v3134, 2
        %v3136 = vmax.f32 %v3134, %v3135
        %v3137 = vrot.slane %v3136, 1
        %v3138 = vmax.f32 %v3136, %v3137
        %v3139 = vsel %vm2991, %v2419, -inf
        %v3140 = vrot.slane %v3139, 4
        %v3141 = vmax.f32 %v3139, %v3140
        %v3142 = vrot.slane %v3141, 2
        %v3143 = vmax.f32 %v3141, %v3142
        %v3144 = vrot.slane %v3143, 1
        %v3145 = vmax.f32 %v3143, %v3144
        %v3146 = vsel %vm2991, %v2418, -inf
        %v3147 = vrot.slane %v3146, 4
        %v3148 = vmax.f32 %v3146, %v3147
        %v3149 = vrot.slane %v3148, 2
        %v3150 = vmax.f32 %v3148, %v3149
        %v3151 = vrot.slane %v3150, 1
        %v3152 = vmax.f32 %v3150, %v3151
        %v3153 = vsel %vm2991, %v2420, -inf
        %v3154 = vrot.slane %v3153, 4
        %v3155 = vmax.f32 %v3153, %v3154
        %v3156 = vrot.slane %v3155, 2
        %v3157 = vmax.f32 %v3155, %v3156
        %v3158 = vrot.slane %v3157, 1
        %v3159 = vmax.f32 %v3157, %v3158
        %v3160 = vsel %vm2991, %v2428, -inf
        %v3161 = vrot.slane %v3160, 4
        %v3162 = vmax.f32 %v3160, %v3161
        %v3163 = vrot.slane %v3162, 2
        %v3164 = vmax.f32 %v3162, %v3163
        %v3165 = vrot.slane %v3164, 1
        %v3166 = vmax.f32 %v3164, %v3165
        %v3167 = vsel %vm2991, %v2436, -inf
        %v3168 = vrot.slane %v3167, 4
        %v3169 = vmax.f32 %v3167, %v3168
        %v3170 = vrot.slane %v3169, 2
        %v3171 = vmax.f32 %v3169, %v3170
        %v3172 = vrot.slane %v3171, 1
        %v3173 = vmax.f32 %v3171, %v3172
        %v3174 = vsel %vm2991, %v2435, -inf
        %v3175 = vrot.slane %v3174, 4
        %v3176 = vmax.f32 %v3174, %v3175
        %v3177 = vrot.slane %v3176, 2
        %v3178 = vmax.f32 %v3176, %v3177
        %v3179 = vrot.slane %v3178, 1
        %v3180 = vmax.f32 %v3178, %v3179
        %v3181 = vsel %vm2991, %v2437, -inf
        %v3182 = vrot.slane %v3181, 4
        %v3183 = vmax.f32 %v3181, %v3182
        %v3184 = vrot.slane %v3183, 2
        %v3185 = vmax.f32 %v3183, %v3184
        %v3186 = vrot.slane %v3185, 1
        %v3187 = vmax.f32 %v3185, %v3186
        %v3188 = vsel %vm2991, %v2445, -inf
        %v3189 = vrot.slane %v3188, 4
        %v3190 = vmax.f32 %v3188, %v3189
        %v3191 = vrot.slane %v3190, 2
        %v3192 = vmax.f32 %v3190, %v3191
        %v3193 = vrot.slane %v3192, 1
        %v3194 = vmax.f32 %v3192, %v3193
        %v3195 = vsel %vm2991, %v2453, -inf
        %v3196 = vrot.slane %v3195, 4
        %v3197 = vmax.f32 %v3195, %v3196
        %v3198 = vrot.slane %v3197, 2
        %v3199 = vmax.f32 %v3197, %v3198
        %v3200 = vrot.slane %v3199, 1
        %v3201 = vmax.f32 %v3199, %v3200
        %v3202 = vsel %vm2991, %v2452, -inf
        %v3203 = vrot.slane %v3202, 4
        %v3204 = vmax.f32 %v3202, %v3203
        %v3205 = vrot.slane %v3204, 2
        %v3206 = vmax.f32 %v3204, %v3205
        %v3207 = vrot.slane %v3206, 1
        %v3208 = vmax.f32 %v3206, %v3207
        %v3209 = vsel %vm2991, %v2454, -inf
        %v3210 = vrot.slane %v3209, 4
        %v3211 = vmax.f32 %v3209, %v3210
        %v3212 = vrot.slane %v3211, 2
        %v3213 = vmax.f32 %v3211, %v3212
        %v3214 = vrot.slane %v3213, 1
        %v3215 = vmax.f32 %v3213, %v3214
        %v3216 = vsel %vm2991, %v2462, -inf
        %v3217 = vrot.slane %v3216, 4
        %v3218 = vmax.f32 %v3216, %v3217
        %v3219 = vrot.slane %v3218, 2
        %v3220 = vmax.f32 %v3218, %v3219
        %v3221 = vrot.slane %v3220, 1
        %v3222 = vmax.f32 %v3220, %v3221
        %v3223 = vsel %vm2991, %v2470, -inf
        %v3224 = vrot.slane %v3223, 4
        %v3225 = vmax.f32 %v3223, %v3224
        %v3226 = vrot.slane %v3225, 2
        %v3227 = vmax.f32 %v3225, %v3226
        %v3228 = vrot.slane %v3227, 1
        %v3229 = vmax.f32 %v3227, %v3228
        %v3230 = vsel %vm2991, %v2469, -inf
        %v3231 = vrot.slane %v3230, 4
        %v3232 = vmax.f32 %v3230, %v3231
        %v3233 = vrot.slane %v3232, 2
        %v3234 = vmax.f32 %v3232, %v3233
        %v3235 = vrot.slane %v3234, 1
        %v3236 = vmax.f32 %v3234, %v3235
        %v3237 = vsel %vm2991, %v2471, -inf
        %v3238 = vrot.slane %v3237, 4
        %v3239 = vmax.f32 %v3237, %v3238
        %v3240 = vrot.slane %v3239, 2
        %v3241 = vmax.f32 %v3239, %v3240
        %v3242 = vrot.slane %v3241, 1
        %v3243 = vmax.f32 %v3241, %v3242
        %v3244 = vsel %vm2991, %v2479, -inf
        %v3245 = vrot.slane %v3244, 4
        %v3246 = vmax.f32 %v3244, %v3245
        %v3247 = vrot.slane %v3246, 2
        %v3248 = vmax.f32 %v3246, %v3247
        %v3249 = vrot.slane %v3248, 1
        %v3250 = vmax.f32 %v3248, %v3249
        %v3251 = vsel %vm2991, %v2487, -inf
        %v3252 = vrot.slane %v3251, 4
        %v3253 = vmax.f32 %v3251, %v3252
        %v3254 = vrot.slane %v3253, 2
        %v3255 = vmax.f32 %v3253, %v3254
        %v3256 = vrot.slane %v3255, 1
        %v3257 = vmax.f32 %v3255, %v3256
        %v3258 = vsel %vm2991, %v2486, -inf
        %v3259 = vrot.slane %v3258, 4
        %v3260 = vmax.f32 %v3258, %v3259
        %v3261 = vrot.slane %v3260, 2
        %v3262 = vmax.f32 %v3260, %v3261
        %v3263 = vrot.slane %v3262, 1
        %v3264 = vmax.f32 %v3262, %v3263
        %v3265 = vsel %vm2991, %v2488, -inf
        %v3266 = vrot.slane %v3265, 4
        %v3267 = vmax.f32 %v3265, %v3266
        %v3268 = vrot.slane %v3267, 2
        %v3269 = vmax.f32 %v3267, %v3268
        %v3270 = vrot.slane %v3269, 1
        %v3271 = vmax.f32 %v3269, %v3270
        %v3272 = vsel %vm2991, %v2496, -inf
        %v3273 = vrot.slane %v3272, 4
        %v3274 = vmax.f32 %v3272, %v3273
        %v3275 = vrot.slane %v3274, 2
        %v3276 = vmax.f32 %v3274, %v3275
        %v3277 = vrot.slane %v3276, 1
        %v3278 = vmax.f32 %v3276, %v3277
        %v3279 = vsel %vm2991, %v2504, -inf
        %v3280 = vrot.slane %v3279, 4
        %v3281 = vmax.f32 %v3279, %v3280
        %v3282 = vrot.slane %v3281, 2
        %v3283 = vmax.f32 %v3281, %v3282
        %v3284 = vrot.slane %v3283, 1
        %v3285 = vmax.f32 %v3283, %v3284
        %v3286 = vsel %vm2991, %v2503, -inf
        %v3287 = vrot.slane %v3286, 4
        %v3288 = vmax.f32 %v3286, %v3287
        %v3289 = vrot.slane %v3288, 2
        %v3290 = vmax.f32 %v3288, %v3289
        %v3291 = vrot.slane %v3290, 1
        %v3292 = vmax.f32 %v3290, %v3291
        %v3293 = vsel %vm2991, %v2505, -inf
        %v3294 = vrot.slane %v3293, 4
        %v3295 = vmax.f32 %v3293, %v3294
        %v3296 = vrot.slane %v3295, 2
        %v3297 = vmax.f32 %v3295, %v3296
        %v3298 = vrot.slane %v3297, 1
        %v3299 = vmax.f32 %v3297, %v3298
        %v3300 = vsel %vm2991, %v2513, -inf
        %v3301 = vrot.slane %v3300, 4
        %v3302 = vmax.f32 %v3300, %v3301
        %v3303 = vrot.slane %v3302, 2
        %v3304 = vmax.f32 %v3302, %v3303
        %v3305 = vrot.slane %v3304, 1
        %v3306 = vmax.f32 %v3304, %v3305
        %v3307 = vsel %vm2991, %v2521, -inf
        %v3308 = vrot.slane %v3307, 4
        %v3309 = vmax.f32 %v3307, %v3308
        %v3310 = vrot.slane %v3309, 2
        %v3311 = vmax.f32 %v3309, %v3310
        %v3312 = vrot.slane %v3311, 1
        %v3313 = vmax.f32 %v3311, %v3312
        %v3314 = vsel %vm2991, %v2520, -inf
        %v3315 = vrot.slane %v3314, 4
        %v3316 = vmax.f32 %v3314, %v3315
        %v3317 = vrot.slane %v3316, 2
        %v3318 = vmax.f32 %v3316, %v3317
        %v3319 = vrot.slane %v3318, 1
        %v3320 = vmax.f32 %v3318, %v3319
        %v3321 = vsel %vm2991, %v2522, -inf
        %v3322 = vrot.slane %v3321, 4
        %v3323 = vmax.f32 %v3321, %v3322
        %v3324 = vrot.slane %v3323, 2
        %v3325 = vmax.f32 %v3323, %v3324
        %v3326 = vrot.slane %v3325, 1
        %v3327 = vmax.f32 %v3325, %v3326
        %v3328 = vsel %vm2991, %v2530, -inf
        %v3329 = vrot.slane %v3328, 4
        %v3330 = vmax.f32 %v3328, %v3329
        %v3331 = vrot.slane %v3330, 2
        %v3332 = vmax.f32 %v3330, %v3331
        %v3333 = vrot.slane %v3332, 1
        %v3334 = vmax.f32 %v3332, %v3333
        %v3335 = vsel %vm2991, %v2538, -inf
        %v3336 = vrot.slane %v3335, 4
        %v3337 = vmax.f32 %v3335, %v3336
        %v3338 = vrot.slane %v3337, 2
        %v3339 = vmax.f32 %v3337, %v3338
        %v3340 = vrot.slane %v3339, 1
        %v3341 = vmax.f32 %v3339, %v3340
        %v3342 = vsel %vm2991, %v2537, -inf
        %v3343 = vrot.slane %v3342, 4
        %v3344 = vmax.f32 %v3342, %v3343
        %v3345 = vrot.slane %v3344, 2
        %v3346 = vmax.f32 %v3344, %v3345
        %v3347 = vrot.slane %v3346, 1
        %v3348 = vmax.f32 %v3346, %v3347
        %v3349 = vsel %vm2991, %v2539, -inf
        %v3350 = vrot.slane %v3349, 4
        %v3351 = vmax.f32 %v3349, %v3350
        %v3352 = vrot.slane %v3351, 2
        %v3353 = vmax.f32 %v3351, %v3352
        %v3354 = vrot.slane %v3353, 1
        %v3355 = vmax.f32 %v3353, %v3354
        %v3356 = vsel %vm2991, %v2547, -inf
        %v3357 = vrot.slane %v3356, 4
        %v3358 = vmax.f32 %v3356, %v3357
        %v3359 = vrot.slane %v3358, 2
        %v3360 = vmax.f32 %v3358, %v3359
        %v3361 = vrot.slane %v3360, 1
        %v3362 = vmax.f32 %v3360, %v3361
        %v3363 = vsel %vm2991, %v2555, -inf
        %v3364 = vrot.slane %v3363, 4
        %v3365 = vmax.f32 %v3363, %v3364
        %v3366 = vrot.slane %v3365, 2
        %v3367 = vmax.f32 %v3365, %v3366
        %v3368 = vrot.slane %v3367, 1
        %v3369 = vmax.f32 %v3367, %v3368
        %v3370 = vsel %vm2991, %v2554, -inf
        %v3371 = vrot.slane %v3370, 4
        %v3372 = vmax.f32 %v3370, %v3371
        %v3373 = vrot.slane %v3372, 2
        %v3374 = vmax.f32 %v3372, %v3373
        %v3375 = vrot.slane %v3374, 1
        %v3376 = vmax.f32 %v3374, %v3375
        %v3377 = vsel %vm2991, %v2556, -inf
        %v3378 = vrot.slane %v3377, 4
        %v3379 = vmax.f32 %v3377, %v3378
        %v3380 = vrot.slane %v3379, 2
        %v3381 = vmax.f32 %v3379, %v3380
        %v3382 = vrot.slane %v3381, 1
        %v3383 = vmax.f32 %v3381, %v3382
        %v3384 = vsel %vm2991, %v2564, -inf
        %v3385 = vrot.slane %v3384, 4
        %v3386 = vmax.f32 %v3384, %v3385
        %v3387 = vrot.slane %v3386, 2
        %v3388 = vmax.f32 %v3386, %v3387
        %v3389 = vrot.slane %v3388, 1
        %v3390 = vmax.f32 %v3388, %v3389
        %v3391 = vsel %vm2991, %v2572, -inf
        %v3392 = vrot.slane %v3391, 4
        %v3393 = vmax.f32 %v3391, %v3392
        %v3394 = vrot.slane %v3393, 2
        %v3395 = vmax.f32 %v3393, %v3394
        %v3396 = vrot.slane %v3395, 1
        %v3397 = vmax.f32 %v3395, %v3396
        %v3398 = vsel %vm2991, %v2571, -inf
        %v3399 = vrot.slane %v3398, 4
        %v3400 = vmax.f32 %v3398, %v3399
        %v3401 = vrot.slane %v3400, 2
        %v3402 = vmax.f32 %v3400, %v3401
        %v3403 = vrot.slane %v3402, 1
        %v3404 = vmax.f32 %v3402, %v3403
        %v3405 = vsel %vm2991, %v2573, -inf
        %v3406 = vrot.slane %v3405, 4
        %v3407 = vmax.f32 %v3405, %v3406
        %v3408 = vrot.slane %v3407, 2
        %v3409 = vmax.f32 %v3407, %v3408
        %v3410 = vrot.slane %v3409, 1
        %v3411 = vmax.f32 %v3409, %v3410
        %v3412 = vsel %vm2991, %v2581, -inf
        %v3413 = vrot.slane %v3412, 4
        %v3414 = vmax.f32 %v3412, %v3413
        %v3415 = vrot.slane %v3414, 2
        %v3416 = vmax.f32 %v3414, %v3415
        %v3417 = vrot.slane %v3416, 1
        %v3418 = vmax.f32 %v3416, %v3417
        %v3419 = vsel %vm2991, %v2589, -inf
        %v3420 = vrot.slane %v3419, 4
        %v3421 = vmax.f32 %v3419, %v3420
        %v3422 = vrot.slane %v3421, 2
        %v3423 = vmax.f32 %v3421, %v3422
        %v3424 = vrot.slane %v3423, 1
        %v3425 = vmax.f32 %v3423, %v3424
        %v3426 = vsel %vm2991, %v2588, -inf
        %v3427 = vrot.slane %v3426, 4
        %v3428 = vmax.f32 %v3426, %v3427
        %v3429 = vrot.slane %v3428, 2
        %v3430 = vmax.f32 %v3428, %v3429
        %v3431 = vrot.slane %v3430, 1
        %v3432 = vmax.f32 %v3430, %v3431
        %v3433 = vsel %vm2991, %v2590, -inf
        %v3434 = vrot.slane %v3433, 4
        %v3435 = vmax.f32 %v3433, %v3434
        %v3436 = vrot.slane %v3435, 2
        %v3437 = vmax.f32 %v3435, %v3436
        %v3438 = vrot.slane %v3437, 1
        %v3439 = vmax.f32 %v3437, %v3438
        %v3440 = vsel %vm2991, %v2598, -inf
        %v3441 = vrot.slane %v3440, 4
        %v3442 = vmax.f32 %v3440, %v3441
        %v3443 = vrot.slane %v3442, 2
        %v3444 = vmax.f32 %v3442, %v3443
        %v3445 = vrot.slane %v3444, 1
        %v3446 = vmax.f32 %v3444, %v3445
        %v3447 = vsel %vm2991, %v2606, -inf
        %v3448 = vrot.slane %v3447, 4
        %v3449 = vmax.f32 %v3447, %v3448
        %v3450 = vrot.slane %v3449, 2
        %v3451 = vmax.f32 %v3449, %v3450
        %v3452 = vrot.slane %v3451, 1
        %v3453 = vmax.f32 %v3451, %v3452
        %v3454 = vsel %vm2991, %v2605, -inf
        %v3455 = vrot.slane %v3454, 4
        %v3456 = vmax.f32 %v3454, %v3455
        %v3457 = vrot.slane %v3456, 2
        %v3458 = vmax.f32 %v3456, %v3457
        %v3459 = vrot.slane %v3458, 1
        %v3460 = vmax.f32 %v3458, %v3459
        %v3461 = vsel %vm2991, %v2607, -inf
        %v3462 = vrot.slane %v3461, 4
        %v3463 = vmax.f32 %v3461, %v3462
        %v3464 = vrot.slane %v3463, 2
        %v3465 = vmax.f32 %v3463, %v3464
        %v3466 = vrot.slane %v3465, 1
        %v3467 = vmax.f32 %v3465, %v3466
        %v3468 = vsel %vm2991, %v2615, -inf
        %v3469 = vrot.slane %v3468, 4
        %v3470 = vmax.f32 %v3468, %v3469
        %v3471 = vrot.slane %v3470, 2
        %v3472 = vmax.f32 %v3470, %v3471
        %v3473 = vrot.slane %v3472, 1
        %v3474 = vmax.f32 %v3472, %v3473
        %v3475 = vsel %vm2991, %v2623, -inf
        %v3476 = vrot.slane %v3475, 4
        %v3477 = vmax.f32 %v3475, %v3476
        %v3478 = vrot.slane %v3477, 2
        %v3479 = vmax.f32 %v3477, %v3478
        %v3480 = vrot.slane %v3479, 1
        %v3481 = vmax.f32 %v3479, %v3480
        %v3482 = vsel %vm2991, %v2622, -inf
        %v3483 = vrot.slane %v3482, 4
        %v3484 = vmax.f32 %v3482, %v3483
        %v3485 = vrot.slane %v3484, 2
        %v3486 = vmax.f32 %v3484, %v3485
        %v3487 = vrot.slane %v3486, 1
        %v3488 = vmax.f32 %v3486, %v3487
        %v3489 = vsel %vm2991, %v2624, -inf
        %v3490 = vrot.slane %v3489, 4
        %v3491 = vmax.f32 %v3489, %v3490
        %v3492 = vrot.slane %v3491, 2
        %v3493 = vmax.f32 %v3491, %v3492
        %v3494 = vrot.slane %v3493, 1
        %v3495 = vmax.f32 %v3493, %v3494
        %v3496 = vsel %vm2991, %v2632, -inf
        %v3497 = vrot.slane %v3496, 4
        %v3498 = vmax.f32 %v3496, %v3497
        %v3499 = vrot.slane %v3498, 2
        %v3500 = vmax.f32 %v3498, %v3499
        %v3501 = vrot.slane %v3500, 1
        %v3502 = vmax.f32 %v3500, %v3501
        %v3503 = vsel %vm2991, %v2640, -inf
        %v3504 = vrot.slane %v3503, 4
        %v3505 = vmax.f32 %v3503, %v3504
        %v3506 = vrot.slane %v3505, 2
        %v3507 = vmax.f32 %v3505, %v3506
        %v3508 = vrot.slane %v3507, 1
        %v3509 = vmax.f32 %v3507, %v3508
        %v3510 = vsel %vm2991, %v2639, -inf
        %v3511 = vrot.slane %v3510, 4
        %v3512 = vmax.f32 %v3510, %v3511
        %v3513 = vrot.slane %v3512, 2
        %v3514 = vmax.f32 %v3512, %v3513
        %v3515 = vrot.slane %v3514, 1
        %v3516 = vmax.f32 %v3514, %v3515
        %v3517 = vsel %vm2991, %v2641, -inf
        %v3518 = vrot.slane %v3517, 4
        %v3519 = vmax.f32 %v3517, %v3518
        %v3520 = vrot.slane %v3519, 2
        %v3521 = vmax.f32 %v3519, %v3520
        %v3522 = vrot.slane %v3521, 1
        %v3523 = vmax.f32 %v3521, %v3522
        %v3524 = vsel %vm2991, %v2649, -inf
        %v3525 = vrot.slane %v3524, 4
        %v3526 = vmax.f32 %v3524, %v3525
        %v3527 = vrot.slane %v3526, 2
        %v3528 = vmax.f32 %v3526, %v3527
        %v3529 = vrot.slane %v3528, 1
        %v3530 = vmax.f32 %v3528, %v3529
        %v3531 = vsel %vm2991, %v2657, -inf
        %v3532 = vrot.slane %v3531, 4
        %v3533 = vmax.f32 %v3531, %v3532
        %v3534 = vrot.slane %v3533, 2
        %v3535 = vmax.f32 %v3533, %v3534
        %v3536 = vrot.slane %v3535, 1
        %v3537 = vmax.f32 %v3535, %v3536
        %v3538 = vsel %vm2991, %v2656, -inf
        %v3539 = vrot.slane %v3538, 4
        %v3540 = vmax.f32 %v3538, %v3539
        %v3541 = vrot.slane %v3540, 2
        %v3542 = vmax.f32 %v3540, %v3541
        %v3543 = vrot.slane %v3542, 1
        %v3544 = vmax.f32 %v3542, %v3543
        %v3545 = vsel %vm2991, %v2658, -inf
        %v3546 = vrot.slane %v3545, 4
        %v3547 = vmax.f32 %v3545, %v3546
        %v3548 = vrot.slane %v3547, 2
        %v3549 = vmax.f32 %v3547, %v3548
        %v3550 = vrot.slane %v3549, 1
        %v3551 = vmax.f32 %v3549, %v3550
        %v3552 = vsel %vm2991, %v2666, -inf
        %v3553 = vrot.slane %v3552, 4
        %v3554 = vmax.f32 %v3552, %v3553
        %v3555 = vrot.slane %v3554, 2
        %v3556 = vmax.f32 %v3554, %v3555
        %v3557 = vrot.slane %v3556, 1
        %v3558 = vmax.f32 %v3556, %v3557
        %v3559 = vsel %vm2991, %v2674, -inf
        %v3560 = vrot.slane %v3559, 4
        %v3561 = vmax.f32 %v3559, %v3560
        %v3562 = vrot.slane %v3561, 2
        %v3563 = vmax.f32 %v3561, %v3562
        %v3564 = vrot.slane %v3563, 1
        %v3565 = vmax.f32 %v3563, %v3564
        %v3566 = vsel %vm2991, %v2673, -inf
        %v3567 = vrot.slane %v3566, 4
        %v3568 = vmax.f32 %v3566, %v3567
        %v3569 = vrot.slane %v3568, 2
        %v3570 = vmax.f32 %v3568, %v3569
        %v3571 = vrot.slane %v3570, 1
        %v3572 = vmax.f32 %v3570, %v3571
        %v3573 = vsel %vm2991, %v2675, -inf
        %v3574 = vrot.slane %v3573, 4
        %v3575 = vmax.f32 %v3573, %v3574
        %v3576 = vrot.slane %v3575, 2
        %v3577 = vmax.f32 %v3575, %v3576
        %v3578 = vrot.slane %v3577, 1
        %v3579 = vmax.f32 %v3577, %v3578
        %v3580 = vsel %vm2991, %v2683, -inf
        %v3581 = vrot.slane %v3580, 4
        %v3582 = vmax.f32 %v3580, %v3581
        %v3583 = vrot.slane %v3582, 2
        %v3584 = vmax.f32 %v3582, %v3583
        %v3585 = vrot.slane %v3584, 1
        %v3586 = vmax.f32 %v3584, %v3585
        %v3587 = vsel %vm2991, %v2691, -inf
        %v3588 = vrot.slane %v3587, 4
        %v3589 = vmax.f32 %v3587, %v3588
        %v3590 = vrot.slane %v3589, 2
        %v3591 = vmax.f32 %v3589, %v3590
        %v3592 = vrot.slane %v3591, 1
        %v3593 = vmax.f32 %v3591, %v3592
        %v3594 = vsel %vm2991, %v2690, -inf
        %v3595 = vrot.slane %v3594, 4
        %v3596 = vmax.f32 %v3594, %v3595
        %v3597 = vrot.slane %v3596, 2
        %v3598 = vmax.f32 %v3596, %v3597
        %v3599 = vrot.slane %v3598, 1
        %v3600 = vmax.f32 %v3598, %v3599
        %v3601 = vsel %vm2991, %v2692, -inf
        %v3602 = vrot.slane %v3601, 4
        %v3603 = vmax.f32 %v3601, %v3602
        %v3604 = vrot.slane %v3603, 2
        %v3605 = vmax.f32 %v3603, %v3604
        %v3606 = vrot.slane %v3605, 1
        %v3607 = vmax.f32 %v3605, %v3606
        %v3608 = vsel %vm2991, %v2700, -inf
        %v3609 = vrot.slane %v3608, 4
        %v3610 = vmax.f32 %v3608, %v3609
        %v3611 = vrot.slane %v3610, 2
        %v3612 = vmax.f32 %v3610, %v3611
        %v3613 = vrot.slane %v3612, 1
        %v3614 = vmax.f32 %v3612, %v3613
        %v3615 = vsel %vm2991, %v2708, -inf
        %v3616 = vrot.slane %v3615, 4
        %v3617 = vmax.f32 %v3615, %v3616
        %v3618 = vrot.slane %v3617, 2
        %v3619 = vmax.f32 %v3617, %v3618
        %v3620 = vrot.slane %v3619, 1
        %v3621 = vmax.f32 %v3619, %v3620
        %v3622 = vsel %vm2991, %v2707, -inf
        %v3623 = vrot.slane %v3622, 4
        %v3624 = vmax.f32 %v3622, %v3623
        %v3625 = vrot.slane %v3624, 2
        %v3626 = vmax.f32 %v3624, %v3625
        %v3627 = vrot.slane %v3626, 1
        %v3628 = vmax.f32 %v3626, %v3627
        %v3629 = vsel %vm2991, %v2709, -inf
        %v3630 = vrot.slane %v3629, 4
        %v3631 = vmax.f32 %v3629, %v3630
        %v3632 = vrot.slane %v3631, 2
        %v3633 = vmax.f32 %v3631, %v3632
        %v3634 = vrot.slane %v3633, 1
        %v3635 = vmax.f32 %v3633, %v3634
        %v3636 = vsel %vm2991, %v2717, -inf
        %v3637 = vrot.slane %v3636, 4
        %v3638 = vmax.f32 %v3636, %v3637
        %v3639 = vrot.slane %v3638, 2
        %v3640 = vmax.f32 %v3638, %v3639
        %v3641 = vrot.slane %v3640, 1
        %v3642 = vmax.f32 %v3640, %v3641
        %v3643 = vsel %vm2991, %v2725, -inf
        %v3644 = vrot.slane %v3643, 4
        %v3645 = vmax.f32 %v3643, %v3644
        %v3646 = vrot.slane %v3645, 2
        %v3647 = vmax.f32 %v3645, %v3646
        %v3648 = vrot.slane %v3647, 1
        %v3649 = vmax.f32 %v3647, %v3648
        %v3650 = vsel %vm2991, %v2724, -inf
        %v3651 = vrot.slane %v3650, 4
        %v3652 = vmax.f32 %v3650, %v3651
        %v3653 = vrot.slane %v3652, 2
        %v3654 = vmax.f32 %v3652, %v3653
        %v3655 = vrot.slane %v3654, 1
        %v3656 = vmax.f32 %v3654, %v3655
        %v3657 = vsel %vm2991, %v2726, -inf
        %v3658 = vrot.slane %v3657, 4
        %v3659 = vmax.f32 %v3657, %v3658
        %v3660 = vrot.slane %v3659, 2
        %v3661 = vmax.f32 %v3659, %v3660
        %v3662 = vrot.slane %v3661, 1
        %v3663 = vmax.f32 %v3661, %v3662
        %v3664 = vsel %vm2991, %v2734, -inf
        %v3665 = vrot.slane %v3664, 4
        %v3666 = vmax.f32 %v3664, %v3665
        %v3667 = vrot.slane %v3666, 2
        %v3668 = vmax.f32 %v3666, %v3667
        %v3669 = vrot.slane %v3668, 1
        %v3670 = vmax.f32 %v3668, %v3669
        %v3671 = vsel %vm2991, %v2742, -inf
        %v3672 = vrot.slane %v3671, 4
        %v3673 = vmax.f32 %v3671, %v3672
        %v3674 = vrot.slane %v3673, 2
        %v3675 = vmax.f32 %v3673, %v3674
        %v3676 = vrot.slane %v3675, 1
        %v3677 = vmax.f32 %v3675, %v3676
        %v3678 = vsel %vm2991, %v2741, -inf
        %v3679 = vrot.slane %v3678, 4
        %v3680 = vmax.f32 %v3678, %v3679
        %v3681 = vrot.slane %v3680, 2
        %v3682 = vmax.f32 %v3680, %v3681
        %v3683 = vrot.slane %v3682, 1
        %v3684 = vmax.f32 %v3682, %v3683
        %v3685 = vsel %vm2991, %v2743, -inf
        %v3686 = vrot.slane %v3685, 4
        %v3687 = vmax.f32 %v3685, %v3686
        %v3688 = vrot.slane %v3687, 2
        %v3689 = vmax.f32 %v3687, %v3688
        %v3690 = vrot.slane %v3689, 1
        %v3691 = vmax.f32 %v3689, %v3690
        %v3692 = vsel %vm2991, %v2751, -inf
        %v3693 = vrot.slane %v3692, 4
        %v3694 = vmax.f32 %v3692, %v3693
        %v3695 = vrot.slane %v3694, 2
        %v3696 = vmax.f32 %v3694, %v3695
        %v3697 = vrot.slane %v3696, 1
        %v3698 = vmax.f32 %v3696, %v3697
        %v3699 = vsel %vm2991, %v2759, -inf
        %v3700 = vrot.slane %v3699, 4
        %v3701 = vmax.f32 %v3699, %v3700
        %v3702 = vrot.slane %v3701, 2
        %v3703 = vmax.f32 %v3701, %v3702
        %v3704 = vrot.slane %v3703, 1
        %v3705 = vmax.f32 %v3703, %v3704
        %v3706 = vsel %vm2991, %v2758, -inf
        %v3707 = vrot.slane %v3706, 4
        %v3708 = vmax.f32 %v3706, %v3707
        %v3709 = vrot.slane %v3708, 2
        %v3710 = vmax.f32 %v3708, %v3709
        %v3711 = vrot.slane %v3710, 1
        %v3712 = vmax.f32 %v3710, %v3711
        %v3713 = vsel %vm2991, %v2760, -inf
        %v3714 = vrot.slane %v3713, 4
        %v3715 = vmax.f32 %v3713, %v3714
        %v3716 = vrot.slane %v3715, 2
        %v3717 = vmax.f32 %v3715, %v3716
        %v3718 = vrot.slane %v3717, 1
        %v3719 = vmax.f32 %v3717, %v3718
        %v3720 = vsel %vm2991, %v2768, -inf
        %v3721 = vrot.slane %v3720, 4
        %v3722 = vmax.f32 %v3720, %v3721
        %v3723 = vrot.slane %v3722, 2
        %v3724 = vmax.f32 %v3722, %v3723
        %v3725 = vrot.slane %v3724, 1
        %v3726 = vmax.f32 %v3724, %v3725
        %v3727 = vsel %vm2991, %v2776, -inf
        %v3728 = vrot.slane %v3727, 4
        %v3729 = vmax.f32 %v3727, %v3728
        %v3730 = vrot.slane %v3729, 2
        %v3731 = vmax.f32 %v3729, %v3730
        %v3732 = vrot.slane %v3731, 1
        %v3733 = vmax.f32 %v3731, %v3732
        %v3734 = vsel %vm2991, %v2775, -inf
        %v3735 = vrot.slane %v3734, 4
        %v3736 = vmax.f32 %v3734, %v3735
        %v3737 = vrot.slane %v3736, 2
        %v3738 = vmax.f32 %v3736, %v3737
        %v3739 = vrot.slane %v3738, 1
        %v3740 = vmax.f32 %v3738, %v3739
        %v3741 = vsel %vm2991, %v2777, -inf
        %v3742 = vrot.slane %v3741, 4
        %v3743 = vmax.f32 %v3741, %v3742
        %v3744 = vrot.slane %v3743, 2
        %v3745 = vmax.f32 %v3743, %v3744
        %v3746 = vrot.slane %v3745, 1
        %v3747 = vmax.f32 %v3745, %v3746
        %v3748 = vsel %vm2991, %v2785, -inf
        %v3749 = vrot.slane %v3748, 4
        %v3750 = vmax.f32 %v3748, %v3749
        %v3751 = vrot.slane %v3750, 2
        %v3752 = vmax.f32 %v3750, %v3751
        %v3753 = vrot.slane %v3752, 1
        %v3754 = vmax.f32 %v3752, %v3753
        %v3755 = vsel %vm2991, %v2793, -inf
        %v3756 = vrot.slane %v3755, 4
        %v3757 = vmax.f32 %v3755, %v3756
        %v3758 = vrot.slane %v3757, 2
        %v3759 = vmax.f32 %v3757, %v3758
        %v3760 = vrot.slane %v3759, 1
        %v3761 = vmax.f32 %v3759, %v3760
        %v3762 = vsel %vm2991, %v2792, -inf
        %v3763 = vrot.slane %v3762, 4
        %v3764 = vmax.f32 %v3762, %v3763
        %v3765 = vrot.slane %v3764, 2
        %v3766 = vmax.f32 %v3764, %v3765
        %v3767 = vrot.slane %v3766, 1
        %v3768 = vmax.f32 %v3766, %v3767
        %v3769 = vsel %vm2991, %v2794, -inf
        %v3770 = vrot.slane %v3769, 4
        %v3771 = vmax.f32 %v3769, %v3770
        %v3772 = vrot.slane %v3771, 2
        %v3773 = vmax.f32 %v3771, %v3772
        %v3774 = vrot.slane %v3773, 1
        %v3775 = vmax.f32 %v3773, %v3774
        %v3776 = vsel %vm2991, %v2802, -inf
        %v3777 = vrot.slane %v3776, 4
        %v3778 = vmax.f32 %v3776, %v3777
        %v3779 = vrot.slane %v3778, 2
        %v3780 = vmax.f32 %v3778, %v3779
        %v3781 = vrot.slane %v3780, 1
        %v3782 = vmax.f32 %v3780, %v3781
        %v3783 = vsel %vm2991, %v2810, -inf
        %v3784 = vrot.slane %v3783, 4
        %v3785 = vmax.f32 %v3783, %v3784
        %v3786 = vrot.slane %v3785, 2
        %v3787 = vmax.f32 %v3785, %v3786
        %v3788 = vrot.slane %v3787, 1
        %v3789 = vmax.f32 %v3787, %v3788
        %v3790 = vsel %vm2991, %v2809, -inf
        %v3791 = vrot.slane %v3790, 4
        %v3792 = vmax.f32 %v3790, %v3791
        %v3793 = vrot.slane %v3792, 2
        %v3794 = vmax.f32 %v3792, %v3793
        %v3795 = vrot.slane %v3794, 1
        %v3796 = vmax.f32 %v3794, %v3795
        %v3797 = vsel %vm2991, %v2811, -inf
        %v3798 = vrot.slane %v3797, 4
        %v3799 = vmax.f32 %v3797, %v3798
        %v3800 = vrot.slane %v3799, 2
        %v3801 = vmax.f32 %v3799, %v3800
        %v3802 = vrot.slane %v3801, 1
        %v3803 = vmax.f32 %v3801, %v3802
        %v3804 = vsel %vm2991, %v2819, -inf
        %v3805 = vrot.slane %v3804, 4
        %v3806 = vmax.f32 %v3804, %v3805
        %v3807 = vrot.slane %v3806, 2
        %v3808 = vmax.f32 %v3806, %v3807
        %v3809 = vrot.slane %v3808, 1
        %v3810 = vmax.f32 %v3808, %v3809
        %v3811 = vsel %vm2991, %v2827, -inf
        %v3812 = vrot.slane %v3811, 4
        %v3813 = vmax.f32 %v3811, %v3812
        %v3814 = vrot.slane %v3813, 2
        %v3815 = vmax.f32 %v3813, %v3814
        %v3816 = vrot.slane %v3815, 1
        %v3817 = vmax.f32 %v3815, %v3816
        %v3818 = vsel %vm2991, %v2826, -inf
        %v3819 = vrot.slane %v3818, 4
        %v3820 = vmax.f32 %v3818, %v3819
        %v3821 = vrot.slane %v3820, 2
        %v3822 = vmax.f32 %v3820, %v3821
        %v3823 = vrot.slane %v3822, 1
        %v3824 = vmax.f32 %v3822, %v3823
        %v3825 = vsel %vm2991, %v2828, -inf
        %v3826 = vrot.slane %v3825, 4
        %v3827 = vmax.f32 %v3825, %v3826
        %v3828 = vrot.slane %v3827, 2
        %v3829 = vmax.f32 %v3827, %v3828
        %v3830 = vrot.slane %v3829, 1
        %v3831 = vmax.f32 %v3829, %v3830
        %v3832 = vsel %vm2991, %v2836, -inf
        %v3833 = vrot.slane %v3832, 4
        %v3834 = vmax.f32 %v3832, %v3833
        %v3835 = vrot.slane %v3834, 2
        %v3836 = vmax.f32 %v3834, %v3835
        %v3837 = vrot.slane %v3836, 1
        %v3838 = vmax.f32 %v3836, %v3837
        %v3839 = vsel %vm2991, %v2844, -inf
        %v3840 = vrot.slane %v3839, 4
        %v3841 = vmax.f32 %v3839, %v3840
        %v3842 = vrot.slane %v3841, 2
        %v3843 = vmax.f32 %v3841, %v3842
        %v3844 = vrot.slane %v3843, 1
        %v3845 = vmax.f32 %v3843, %v3844
        %v3846 = vsel %vm2991, %v2843, -inf
        %v3847 = vrot.slane %v3846, 4
        %v3848 = vmax.f32 %v3846, %v3847
        %v3849 = vrot.slane %v3848, 2
        %v3850 = vmax.f32 %v3848, %v3849
        %v3851 = vrot.slane %v3850, 1
        %v3852 = vmax.f32 %v3850, %v3851
        %v3853 = vsel %vm2991, %v2845, -inf
        %v3854 = vrot.slane %v3853, 4
        %v3855 = vmax.f32 %v3853, %v3854
        %v3856 = vrot.slane %v3855, 2
        %v3857 = vmax.f32 %v3855, %v3856
        %v3858 = vrot.slane %v3857, 1
        %v3859 = vmax.f32 %v3857, %v3858
        %v3860 = vsel %vm2991, %v2853, -inf
        %v3861 = vrot.slane %v3860, 4
        %v3862 = vmax.f32 %v3860, %v3861
        %v3863 = vrot.slane %v3862, 2
        %v3864 = vmax.f32 %v3862, %v3863
        %v3865 = vrot.slane %v3864, 1
        %v3866 = vmax.f32 %v3864, %v3865
        %v3867 = vsel %vm2991, %v2861, -inf
        %v3868 = vrot.slane %v3867, 4
        %v3869 = vmax.f32 %v3867, %v3868
        %v3870 = vrot.slane %v3869, 2
        %v3871 = vmax.f32 %v3869, %v3870
        %v3872 = vrot.slane %v3871, 1
        %v3873 = vmax.f32 %v3871, %v3872
        %v3874 = vsel %vm2991, %v2860, -inf
        %v3875 = vrot.slane %v3874, 4
        %v3876 = vmax.f32 %v3874, %v3875
        %v3877 = vrot.slane %v3876, 2
        %v3878 = vmax.f32 %v3876, %v3877
        %v3879 = vrot.slane %v3878, 1
        %v3880 = vmax.f32 %v3878, %v3879
        %v3881 = vsel %vm2991, %v2862, -inf
        %v3882 = vrot.slane %v3881, 4
        %v3883 = vmax.f32 %v3881, %v3882
        %v3884 = vrot.slane %v3883, 2
        %v3885 = vmax.f32 %v3883, %v3884
        %v3886 = vrot.slane %v3885, 1
        %v3887 = vmax.f32 %v3885, %v3886
        %vm3888 = vcmask 261120
        %v3889 = vsel %vm3888, %v2998, -inf
        %v3890 = vsel %vm3888, %v3054, -inf
        %v3891 = vmax.f32 %v3889, %v3890
        %v3892 = vsel %vm3888, %v3005, -inf
        %v3893 = vsel %vm3888, %v3061, -inf
        %v3894 = vmax.f32 %v3892, %v3893
        %v3895 = vsel %vm3888, %v3012, -inf
        %v3896 = vsel %vm3888, %v3068, -inf
        %v3897 = vmax.f32 %v3895, %v3896
        %v3898 = vsel %vm3888, %v3019, -inf
        %v3899 = vsel %vm3888, %v3075, -inf
        %v3900 = vmax.f32 %v3898, %v3899
        %v3901 = vsel %vm3888, %v3026, -inf
        %v3902 = vsel %vm3888, %v3082, -inf
        %v3903 = vmax.f32 %v3901, %v3902
        %v3904 = vsel %vm3888, %v3033, -inf
        %v3905 = vsel %vm3888, %v3089, -inf
        %v3906 = vmax.f32 %v3904, %v3905
        %v3907 = vsel %vm3888, %v3040, -inf
        %v3908 = vsel %vm3888, %v3096, -inf
        %v3909 = vmax.f32 %v3907, %v3908
        %v3910 = vsel %vm3888, %v3047, -inf
        %v3911 = vsel %vm3888, %v3103, -inf
        %v3912 = vmax.f32 %v3910, %v3911
        %v3913 = vsel %vm3888, %v3110, -inf
        %v3914 = vsel %vm3888, %v3166, -inf
        %v3915 = vmax.f32 %v3913, %v3914
        %v3916 = vsel %vm3888, %v3117, -inf
        %v3917 = vsel %vm3888, %v3173, -inf
        %v3918 = vmax.f32 %v3916, %v3917
        %v3919 = vsel %vm3888, %v3124, -inf
        %v3920 = vsel %vm3888, %v3180, -inf
        %v3921 = vmax.f32 %v3919, %v3920
        %v3922 = vsel %vm3888, %v3131, -inf
        %v3923 = vsel %vm3888, %v3187, -inf
        %v3924 = vmax.f32 %v3922, %v3923
        %v3925 = vsel %vm3888, %v3138, -inf
        %v3926 = vsel %vm3888, %v3194, -inf
        %v3927 = vmax.f32 %v3925, %v3926
        %v3928 = vsel %vm3888, %v3145, -inf
        %v3929 = vsel %vm3888, %v3201, -inf
        %v3930 = vmax.f32 %v3928, %v3929
        %v3931 = vsel %vm3888, %v3152, -inf
        %v3932 = vsel %vm3888, %v3208, -inf
        %v3933 = vmax.f32 %v3931, %v3932
        %v3934 = vsel %vm3888, %v3159, -inf
        %v3935 = vsel %vm3888, %v3215, -inf
        %v3936 = vmax.f32 %v3934, %v3935
        %v3937 = vsel %vm3888, %v3222, -inf
        %v3938 = vsel %vm3888, %v3278, -inf
        %v3939 = vmax.f32 %v3937, %v3938
        %v3940 = vsel %vm3888, %v3229, -inf
        %v3941 = vsel %vm3888, %v3285, -inf
        %v3942 = vmax.f32 %v3940, %v3941
        %v3943 = vsel %vm3888, %v3236, -inf
        %v3944 = vsel %vm3888, %v3292, -inf
        %v3945 = vmax.f32 %v3943, %v3944
        %v3946 = vsel %vm3888, %v3243, -inf
        %v3947 = vsel %vm3888, %v3299, -inf
        %v3948 = vmax.f32 %v3946, %v3947
        %v3949 = vsel %vm3888, %v3250, -inf
        %v3950 = vsel %vm3888, %v3306, -inf
        %v3951 = vmax.f32 %v3949, %v3950
        %v3952 = vsel %vm3888, %v3257, -inf
        %v3953 = vsel %vm3888, %v3313, -inf
        %v3954 = vmax.f32 %v3952, %v3953
        %v3955 = vsel %vm3888, %v3264, -inf
        %v3956 = vsel %vm3888, %v3320, -inf
        %v3957 = vmax.f32 %v3955, %v3956
        %v3958 = vsel %vm3888, %v3271, -inf
        %v3959 = vsel %vm3888, %v3327, -inf
        %v3960 = vmax.f32 %v3958, %v3959
        %v3961 = vsel %vm3888, %v3334, -inf
        %v3962 = vsel %vm3888, %v3390, -inf
        %v3963 = vmax.f32 %v3961, %v3962
        %v3964 = vsel %vm3888, %v3341, -inf
        %v3965 = vsel %vm3888, %v3397, -inf
        %v3966 = vmax.f32 %v3964, %v3965
        %v3967 = vsel %vm3888, %v3348, -inf
        %v3968 = vsel %vm3888, %v3404, -inf
        %v3969 = vmax.f32 %v3967, %v3968
        %v3970 = vsel %vm3888, %v3355, -inf
        %v3971 = vsel %vm3888, %v3411, -inf
        %v3972 = vmax.f32 %v3970, %v3971
        %v3973 = vsel %vm3888, %v3362, -inf
        %v3974 = vsel %vm3888, %v3418, -inf
        %v3975 = vmax.f32 %v3973, %v3974
        %v3976 = vsel %vm3888, %v3369, -inf
        %v3977 = vsel %vm3888, %v3425, -inf
        %v3978 = vmax.f32 %v3976, %v3977
        %v3979 = vsel %vm3888, %v3376, -inf
        %v3980 = vsel %vm3888, %v3432, -inf
        %v3981 = vmax.f32 %v3979, %v3980
        %v3982 = vsel %vm3888, %v3383, -inf
        %v3983 = vsel %vm3888, %v3439, -inf
        %v3984 = vmax.f32 %v3982, %v3983
        %v3985 = vsel %vm3888, %v3446, -inf
        %v3986 = vsel %vm3888, %v3502, -inf
        %v3987 = vmax.f32 %v3985, %v3986
        %v3988 = vsel %vm3888, %v3453, -inf
        %v3989 = vsel %vm3888, %v3509, -inf
        %v3990 = vmax.f32 %v3988, %v3989
        %v3991 = vsel %vm3888, %v3460, -inf
        %v3992 = vsel %vm3888, %v3516, -inf
        %v3993 = vmax.f32 %v3991, %v3992
        %v3994 = vsel %vm3888, %v3467, -inf
        %v3995 = vsel %vm3888, %v3523, -inf
        %v3996 = vmax.f32 %v3994, %v3995
        %v3997 = vsel %vm3888, %v3474, -inf
        %v3998 = vsel %vm3888, %v3530, -inf
        %v3999 = vmax.f32 %v3997, %v3998
        %v4000 = vsel %vm3888, %v3481, -inf
        %v4001 = vsel %vm3888, %v3537, -inf
        %v4002 = vmax.f32 %v4000, %v4001
        %v4003 = vsel %vm3888, %v3488, -inf
        %v4004 = vsel %vm3888, %v3544, -inf
        %v4005 = vmax.f32 %v4003, %v4004
        %v4006 = vsel %vm3888, %v3495, -inf
        %v4007 = vsel %vm3888, %v3551, -inf
        %v4008 = vmax.f32 %v4006, %v4007
        %v4009 = vsel %vm3888, %v3558, -inf
        %v4010 = vsel %vm3888, %v3614, -inf
        %v4011 = vmax.f32 %v4009, %v4010
        %v4012 = vsel %vm3888, %v3565, -inf
        %v4013 = vsel %vm3888, %v3621, -inf
        %v4014 = vmax.f32 %v4012, %v4013
        %v4015 = vsel %vm3888, %v3572, -inf
        %v4016 = vsel %vm3888, %v3628, -inf
        %v4017 = vmax.f32 %v4015, %v4016
        %v4018 = vsel %vm3888, %v3579, -inf
        %v4019 = vsel %vm3888, %v3635, -inf
        %v4020 = vmax.f32 %v4018, %v4019
        %v4021 = vsel %vm3888, %v3586, -inf
        %v4022 = vsel %vm3888, %v3642, -inf
        %v4023 = vmax.f32 %v4021, %v4022
        %v4024 = vsel %vm3888, %v3593, -inf
        %v4025 = vsel %vm3888, %v3649, -inf
        %v4026 = vmax.f32 %v4024, %v4025
        %v4027 = vsel %vm3888, %v3600, -inf
        %v4028 = vsel %vm3888, %v3656, -inf
        %v4029 = vmax.f32 %v4027, %v4028
        %v4030 = vsel %vm3888, %v3607, -inf
        %v4031 = vsel %vm3888, %v3663, -inf
        %v4032 = vmax.f32 %v4030, %v4031
        %v4033 = vsel %vm3888, %v3670, -inf
        %v4034 = vsel %vm3888, %v3726, -inf
        %v4035 = vmax.f32 %v4033, %v4034
        %v4036 = vsel %vm3888, %v3677, -inf
        %v4037 = vsel %vm3888, %v3733, -inf
        %v4038 = vmax.f32 %v4036, %v4037
        %v4039 = vsel %vm3888, %v3684, -inf
        %v4040 = vsel %vm3888, %v3740, -inf
        %v4041 = vmax.f32 %v4039, %v4040
        %v4042 = vsel %vm3888, %v3691, -inf
        %v4043 = vsel %vm3888, %v3747, -inf
        %v4044 = vmax.f32 %v4042, %v4043
        %v4045 = vsel %vm3888, %v3698, -inf
        %v4046 = vsel %vm3888, %v3754, -inf
        %v4047 = vmax.f32 %v4045, %v4046
        %v4048 = vsel %vm3888, %v3705, -inf
        %v4049 = vsel %vm3888, %v3761, -inf
        %v4050 = vmax.f32 %v4048, %v4049
        %v4051 = vsel %vm3888, %v3712, -inf
        %v4052 = vsel %vm3888, %v3768, -inf
        %v4053 = vmax.f32 %v4051, %v4052
        %v4054 = vsel %vm3888, %v3719, -inf
        %v4055 = vsel %vm3888, %v3775, -inf
        %v4056 = vmax.f32 %v4054, %v4055
        %v4057 = vsel %vm3888, %v3782, -inf
        %v4058 = vsel %vm3888, %v3838, -inf
        %v4059 = vmax.f32 %v4057, %v4058
        %v4060 = vsel %vm3888, %v3789, -inf
        %v4061 = vsel %vm3888, %v3845, -inf
        %v4062 = vmax.f32 %v4060, %v4061
        %v4063 = vsel %vm3888, %v3796, -inf
        %v4064 = vsel %vm3888, %v3852, -inf
        %v4065 = vmax.f32 %v4063, %v4064
        %v4066 = vsel %vm3888, %v3803, -inf
        %v4067 = vsel %vm3888, %v3859, -inf
        %v4068 = vmax.f32 %v4066, %v4067
        %v4069 = vsel %vm3888, %v3810, -inf
        %v4070 = vsel %vm3888, %v3866, -inf
        %v4071 = vmax.f32 %v4069, %v4070
        %v4072 = vsel %vm3888, %v3817, -inf
        %v4073 = vsel %vm3888, %v3873, -inf
        %v4074 = vmax.f32 %v4072, %v4073
        %v4075 = vsel %vm3888, %v3824, -inf
        %v4076 = vsel %vm3888, %v3880, -inf
        %v4077 = vmax.f32 %v4075, %v4076
        %v4078 = vsel %vm3888, %v3831, -inf
        %v4079 = vsel %vm3888, %v3887, -inf
        %v4080 = vmax.f32 %v4078, %v4079
        %vm4145 = vcmask 1041409
        %v4146 = vsel %vm4145, %v3894, %v3891
        %vm4147 = vcmask 1042434
        %v4148 = vsel %vm4147, %v3897, %v4146
        %vm4149 = vcmask 1043459
        %v4150 = vsel %vm4149, %v3900, %v4148
        %vm4151 = vcmask 1044484
        %v4152 = vsel %vm4151, %v3903, %v4150
        %vm4153 = vcmask 1045509
        %v4154 = vsel %vm4153, %v3906, %v4152
        %vm4155 = vcmask 1046534
        %v4156 = vsel %vm4155, %v3909, %v4154
        %vm4157 = vcmask 1047559
        %v4158 = vsel %vm4157, %v3912, %v4156
        %v4159 = vsel %vm4145, %v3918, %v3915
        %v4160 = vsel %vm4147, %v3921, %v4159
        %v4161 = vsel %vm4149, %v3924, %v4160
        %v4162 = vsel %vm4151, %v3927, %v4161
        %v4163 = vsel %vm4153, %v3930, %v4162
        %v4164 = vsel %vm4155, %v3933, %v4163
        %v4165 = vsel %vm4157, %v3936, %v4164
        %v4166 = vsel %vm4145, %v3942, %v3939
        %v4167 = vsel %vm4147, %v3945, %v4166
        %v4168 = vsel %vm4149, %v3948, %v4167
        %v4169 = vsel %vm4151, %v3951, %v4168
        %v4170 = vsel %vm4153, %v3954, %v4169
        %v4171 = vsel %vm4155, %v3957, %v4170
        %v4172 = vsel %vm4157, %v3960, %v4171
        %v4173 = vsel %vm4145, %v3966, %v3963
        %v4174 = vsel %vm4147, %v3969, %v4173
        %v4175 = vsel %vm4149, %v3972, %v4174
        %v4176 = vsel %vm4151, %v3975, %v4175
        %v4177 = vsel %vm4153, %v3978, %v4176
        %v4178 = vsel %vm4155, %v3981, %v4177
        %v4179 = vsel %vm4157, %v3984, %v4178
        %v4180 = vsel %vm4145, %v3990, %v3987
        %v4181 = vsel %vm4147, %v3993, %v4180
        %v4182 = vsel %vm4149, %v3996, %v4181
        %v4183 = vsel %vm4151, %v3999, %v4182
        %v4184 = vsel %vm4153, %v4002, %v4183
        %v4185 = vsel %vm4155, %v4005, %v4184
        %v4186 = vsel %vm4157, %v4008, %v4185
        %v4187 = vsel %vm4145, %v4014, %v4011
        %v4188 = vsel %vm4147, %v4017, %v4187
        %v4189 = vsel %vm4149, %v4020, %v4188
        %v4190 = vsel %vm4151, %v4023, %v4189
        %v4191 = vsel %vm4153, %v4026, %v4190
        %v4192 = vsel %vm4155, %v4029, %v4191
        %v4193 = vsel %vm4157, %v4032, %v4192
        %v4194 = vsel %vm4145, %v4038, %v4035
        %v4195 = vsel %vm4147, %v4041, %v4194
        %v4196 = vsel %vm4149, %v4044, %v4195
        %v4197 = vsel %vm4151, %v4047, %v4196
        %v4198 = vsel %vm4153, %v4050, %v4197
        %v4199 = vsel %vm4155, %v4053, %v4198
        %v4200 = vsel %vm4157, %v4056, %v4199
        %v4201 = vsel %vm4145, %v4062, %v4059
        %v4202 = vsel %vm4147, %v4065, %v4201
        %v4203 = vsel %vm4149, %v4068, %v4202
        %v4204 = vsel %vm4151, %v4071, %v4203
        %v4205 = vsel %vm4153, %v4074, %v4204
        %v4206 = vsel %vm4155, %v4077, %v4205
        %v4207 = vsel %vm4157, %v4080, %v4206
        %v4208 = vrot.slane %v4158, 7
        %v4209 = vrot.slane %v4165, 7
        %v4210 = vrot.slane %v4172, 7
        %v4211 = vrot.slane %v4179, 7
        %v4212 = vrot.slane %v4186, 7
        %v4213 = vrot.slane %v4193, 7
        %v4214 = vrot.slane %v4200, 7
        %v4215 = vrot.slane %v4207, 7
        %v4224 = vsel %vm558, 0.0, %v4208
        %v4225 = vsel %vm558, 0.0, %v4209
        %v4226 = vsel %vm558, 0.0, %v4210
        %v4227 = vsel %vm558, 0.0, %v4211
        %v4228 = vsel %vm558, 0.0, %v4212
        %v4229 = vsel %vm558, 0.0, %v4213
        %v4230 = vsel %vm558, 0.0, %v4214
        %v4231 = vsel %vm558, 0.0, %v4215
        %v4232 = vsel %vm558, %v4208, 0.0
        %v4233 = vsel %vm558, %v4209, 0.0
        %v4234 = vsel %vm558, %v4210, 0.0
        %v4235 = vsel %vm558, %v4211, 0.0
        %v4236 = vsel %vm558, %v4212, 0.0
        %v4237 = vsel %vm558, %v4213, 0.0
        %v4238 = vsel %vm558, %v4214, 0.0
        %v4239 = vsel %vm558, %v4215, 0.0
        %v4254 = vsel %vm724, %v725, %v728
        %v4255 = vrot.slane %v4224, 1
        %v4256 = vrot.slane %v4232, 1
        %v4257 = vsel %vm724, %v4255, %v4256
        %v4258 = vrot.slane %v4225, 1
        %v4259 = vrot.slane %v4233, 1
        %v4260 = vsel %vm724, %v4258, %v4259
        %v4261 = vrot.slane %v4226, 1
        %v4262 = vrot.slane %v4234, 1
        %v4263 = vsel %vm724, %v4261, %v4262
        %v4264 = vrot.slane %v4227, 1
        %v4265 = vrot.slane %v4235, 1
        %v4266 = vsel %vm724, %v4264, %v4265
        %v4267 = vrot.slane %v4228, 1
        %v4268 = vrot.slane %v4236, 1
        %v4269 = vsel %vm724, %v4267, %v4268
        %v4270 = vrot.slane %v4229, 1
        %v4271 = vrot.slane %v4237, 1
        %v4272 = vsel %vm724, %v4270, %v4271
        %v4273 = vrot.slane %v4230, 1
        %v4274 = vrot.slane %v4238, 1
        %v4275 = vsel %vm724, %v4273, %v4274
        %4276 = vrot.lane.b32.xlu0 %v4254, 32
        %v4277 = vpop.permute.xlu0 %4276
        %4278 = vrot.lane.b32.xlu0 %v4257, 32
        %v4279 = vpop.permute.xlu0 %4278
        %4280 = vrot.lane.b32.xlu0 %v4260, 32
        %v4281 = vpop.permute.xlu0 %4280
        %4282 = vrot.lane.b32.xlu0 %v4263, 32
        %v4283 = vpop.permute.xlu0 %4282
        %4284 = vrot.lane.b32.xlu0 %v4266, 32
        %v4285 = vpop.permute.xlu0 %4284
        %4286 = vrot.lane.b32.xlu0 %v4269, 32
        %v4287 = vpop.permute.xlu0 %4286
        %4288 = vrot.lane.b32.xlu0 %v4272, 32
        %v4289 = vpop.permute.xlu0 %4288
        %4290 = vrot.lane.b32.xlu0 %v4275, 32
        %v4291 = vpop.permute.xlu0 %4290
        %v4300 = vsel %vm901, %v902, %v905
        %v4301 = vrot.slane %v4224, 2
        %v4302 = vrot.slane %v4232, 2
        %v4303 = vsel %vm901, %v4301, %v4302
        %v4304 = vrot.slane %v4225, 2
        %v4305 = vrot.slane %v4233, 2
        %v4306 = vsel %vm901, %v4304, %v4305
        %v4307 = vrot.slane %v4226, 2
        %v4308 = vrot.slane %v4234, 2
        %v4309 = vsel %vm901, %v4307, %v4308
        %v4310 = vrot.slane %v4227, 2
        %v4311 = vrot.slane %v4235, 2
        %v4312 = vsel %vm901, %v4310, %v4311
        %v4313 = vrot.slane %v4228, 2
        %v4314 = vrot.slane %v4236, 2
        %v4315 = vsel %vm901, %v4313, %v4314
        %v4316 = vrot.slane %v4229, 2
        %v4317 = vrot.slane %v4237, 2
        %v4318 = vsel %vm901, %v4316, %v4317
        %v4319 = vrot.slane %v4230, 2
        %v4320 = vrot.slane %v4238, 2
        %v4321 = vsel %vm901, %v4319, %v4320
        %4322 = vrot.lane.b32.xlu0 %v4300, 64
        %v4323 = vpop.permute.xlu0 %4322
        %4324 = vrot.lane.b32.xlu0 %v4303, 64
        %v4325 = vpop.permute.xlu0 %4324
        %4326 = vrot.lane.b32.xlu0 %v4306, 64
        %v4327 = vpop.permute.xlu0 %4326
        %4328 = vrot.lane.b32.xlu0 %v4309, 64
        %v4329 = vpop.permute.xlu0 %4328
        %4330 = vrot.lane.b32.xlu0 %v4312, 64
        %v4331 = vpop.permute.xlu0 %4330
        %4332 = vrot.lane.b32.xlu0 %v4315, 64
        %v4333 = vpop.permute.xlu0 %4332
        %4334 = vrot.lane.b32.xlu0 %v4318, 64
        %v4335 = vpop.permute.xlu0 %4334
        %4336 = vrot.lane.b32.xlu0 %v4321, 64
        %v4337 = vpop.permute.xlu0 %4336
        %4347 = vrot.lane.b32.xlu0 %v4224, 96
        %v4348 = vpop.permute.xlu0 %4347
        %4349 = vrot.lane.b32.xlu0 %v4225, 96
        %v4350 = vpop.permute.xlu0 %4349
        %4351 = vrot.lane.b32.xlu0 %v4226, 96
        %v4352 = vpop.permute.xlu0 %4351
        %4353 = vrot.lane.b32.xlu0 %v4227, 96
        %v4354 = vpop.permute.xlu0 %4353
        %4355 = vrot.lane.b32.xlu0 %v4228, 96
        %v4356 = vpop.permute.xlu0 %4355
        %4357 = vrot.lane.b32.xlu0 %v4229, 96
        %v4358 = vpop.permute.xlu0 %4357
        %4359 = vrot.lane.b32.xlu0 %v4230, 96
        %v4360 = vpop.permute.xlu0 %4359
        %4361 = vrot.lane.b32.xlu0 %v4231, 96
        %v4362 = vpop.permute.xlu0 %4361
        %v4372 = vrot.slane %v4231, 1
        %v4373 = vrot.slane %v4239, 1
        %v4374 = vsel %vm724, %v4372, %v4373
        %v4383 = vrot.slane %v4231, 2
        %v4384 = vrot.slane %v4239, 2
        %v4385 = vsel %vm901, %v4383, %v4384
        %4386 = vrot.lane.b32.xlu0 %v4303, 32
        %v4387 = vpop.permute.xlu0 %4386
        %4388 = vrot.lane.b32.xlu0 %v4306, 32
        %v4389 = vpop.permute.xlu0 %4388
        %4390 = vrot.lane.b32.xlu0 %v4309, 32
        %v4391 = vpop.permute.xlu0 %4390
        %4392 = vrot.lane.b32.xlu0 %v4312, 32
        %v4393 = vpop.permute.xlu0 %4392
        %4394 = vrot.lane.b32.xlu0 %v4315, 32
        %v4395 = vpop.permute.xlu0 %4394
        %4396 = vrot.lane.b32.xlu0 %v4318, 32
        %v4397 = vpop.permute.xlu0 %4396
        %4398 = vrot.lane.b32.xlu0 %v4321, 32
        %v4399 = vpop.permute.xlu0 %4398
        %4400 = vrot.lane.b32.xlu0 %v4385, 32
        %v4401 = vpop.permute.xlu0 %4400
        %4410 = vrot.lane.b32.xlu0 %v4225, 64
        %v4411 = vpop.permute.xlu0 %4410
        %4412 = vrot.lane.b32.xlu0 %v4226, 64
        %v4413 = vpop.permute.xlu0 %4412
        %4414 = vrot.lane.b32.xlu0 %v4227, 64
        %v4415 = vpop.permute.xlu0 %4414
        %4416 = vrot.lane.b32.xlu0 %v4228, 64
        %v4417 = vpop.permute.xlu0 %4416
        %4418 = vrot.lane.b32.xlu0 %v4229, 64
        %v4419 = vpop.permute.xlu0 %4418
        %4420 = vrot.lane.b32.xlu0 %v4230, 64
        %v4421 = vpop.permute.xlu0 %4420
        %4422 = vrot.lane.b32.xlu0 %v4231, 64
        %v4423 = vpop.permute.xlu0 %4422
        %4424 = vrot.lane.b32.xlu0 %v658, 64
        %v4425 = vpop.permute.xlu0 %4424
        %4434 = vrot.lane.b32.xlu0 %v4260, 96
        %v4435 = vpop.permute.xlu0 %4434
        %4436 = vrot.lane.b32.xlu0 %v4263, 96
        %v4437 = vpop.permute.xlu0 %4436
        %4438 = vrot.lane.b32.xlu0 %v4266, 96
        %v4439 = vpop.permute.xlu0 %4438
        %4440 = vrot.lane.b32.xlu0 %v4269, 96
        %v4441 = vpop.permute.xlu0 %4440
        %4442 = vrot.lane.b32.xlu0 %v4272, 96
        %v4443 = vpop.permute.xlu0 %4442
        %4444 = vrot.lane.b32.xlu0 %v4275, 96
        %v4445 = vpop.permute.xlu0 %4444
        %4446 = vrot.lane.b32.xlu0 %v4374, 96
        %v4447 = vpop.permute.xlu0 %4446
        %4448 = vrot.lane.b32.xlu0 %v4254, 96
        %v4449 = vpop.permute.xlu0 %4448
        %v4466 = vsel %vm3888, %v658, %v4277
        %v4467 = vsel %vm3888, %v4224, %v4279
        %v4468 = vsel %vm3888, %v4225, %v4281
        %v4469 = vsel %vm3888, %v4226, %v4283
        %v4470 = vsel %vm3888, %v4227, %v4285
        %v4471 = vsel %vm3888, %v4228, %v4287
        %v4472 = vsel %vm3888, %v4229, %v4289
        %v4473 = vsel %vm3888, %v4230, %v4291
        %vm4474 = vcmask 523264
        %v4475 = vsel %vm4474, %v4466, %v4323
        %v4476 = vsel %vm4474, %v4467, %v4325
        %v4477 = vsel %vm4474, %v4468, %v4327
        %v4478 = vsel %vm4474, %v4469, %v4329
        %v4479 = vsel %vm4474, %v4470, %v4331
        %v4480 = vsel %vm4474, %v4471, %v4333
        %v4481 = vsel %vm4474, %v4472, %v4335
        %v4482 = vsel %vm4474, %v4473, %v4337
        %vm4483 = vcmask 785408
        %v4484 = vsel %vm4483, %v4475, %v4348
        %v4485 = vsel %vm4483, %v4476, %v4350
        %v4486 = vsel %vm4483, %v4477, %v4352
        %v4487 = vsel %vm4483, %v4478, %v4354
        %v4488 = vsel %vm4483, %v4479, %v4356
        %v4489 = vsel %vm4483, %v4480, %v4358
        %v4490 = vsel %vm4483, %v4481, %v4360
        %v4491 = vsel %vm4483, %v4482, %v4362
        %v4492 = vsel %vm3888, %v4257, %v4387
        %v4493 = vsel %vm3888, %v4260, %v4389
        %v4494 = vsel %vm3888, %v4263, %v4391
        %v4495 = vsel %vm3888, %v4266, %v4393
        %v4496 = vsel %vm3888, %v4269, %v4395
        %v4497 = vsel %vm3888, %v4272, %v4397
        %v4498 = vsel %vm3888, %v4275, %v4399
        %v4499 = vsel %vm3888, %v4374, %v4401
        %v4500 = vsel %vm4474, %v4492, %v4411
        %v4501 = vsel %vm4474, %v4493, %v4413
        %v4502 = vsel %vm4474, %v4494, %v4415
        %v4503 = vsel %vm4474, %v4495, %v4417
        %v4504 = vsel %vm4474, %v4496, %v4419
        %v4505 = vsel %vm4474, %v4497, %v4421
        %v4506 = vsel %vm4474, %v4498, %v4423
        %v4507 = vsel %vm4474, %v4499, %v4425
        %v4508 = vsel %vm4483, %v4500, %v4435
        %v4509 = vsel %vm4483, %v4501, %v4437
        %v4510 = vsel %vm4483, %v4502, %v4439
        %v4511 = vsel %vm4483, %v4503, %v4441
        %v4512 = vsel %vm4483, %v4504, %v4443
        %v4513 = vsel %vm4483, %v4505, %v4445
        %v4514 = vsel %vm4483, %v4506, %v4447
        %v4515 = vsel %vm4483, %v4507, %v4449
        %v4516 = vpack.c.bf16 %v4485, %v4484
        %v4517 = vpack.c.bf16 %v4509, %v4508
        %v4518 = vpack.c.bf16 %v4309, %v4306
        %v4519 = vpack.c.bf16 %v4487, %v4486
        %v4520 = vpack.c.bf16 %v4511, %v4510
        %v4521 = vpack.c.bf16 %v4315, %v4312
        %v4522 = vpack.c.bf16 %v4489, %v4488
        %v4523 = vpack.c.bf16 %v4513, %v4512
        %v4524 = vpack.c.bf16 %v4321, %v4318
        %v4525 = vpack.c.bf16 %v4491, %v4490
        %v4526 = vpack.c.bf16 %v4515, %v4514
        %v4527 = vpack.c.bf16 %v4300, %v4385
        %v4528 = vld [vmem:[%s4] sm:$0xf]
        %v4529 = vld [vmem:[%s4 + $0x4] sm:$0xf]
        %v4530 = vld [vmem:[%s4 + $0x8] sm:$0xf]
        %v4531 = vld [vmem:[%s4 + $0xc] sm:$0xf]
        %v4532 = vld [vmem:[%s4 + $0x10] sm:$0xf]
        %v4533 = vld [vmem:[%s4 + $0x14] sm:$0xf]
        %v4534 = vld [vmem:[%s4 + $0x18] sm:$0xf]
        %v4535 = vld [vmem:[%s4 + $0x1c] sm:$0xf]
        %v4536 = vld [vmem:[%s4 + $0x20] sm:$0xf]
        %v4537 = vld [vmem:[%s4 + $0x24] sm:$0xf]
        %v4538 = vld [vmem:[%s4 + $0x28] sm:$0xf]
        %v4539 = vld [vmem:[%s4 + $0x2c] sm:$0xf]
        %v4540 = vld [vmem:[%s4 + $0x30] sm:$0xf]
        %v4541 = vld [vmem:[%s4 + $0x34] sm:$0xf]
        %v4542 = vld [vmem:[%s4 + $0x38] sm:$0xf]
        %v4543 = vld [vmem:[%s4 + $0x3c] sm:$0xf]
        %v4544 = vld [vmem:[%s4 + $0x40] sm:$0xf]
        %v4545 = vld [vmem:[%s4 + $0x44] sm:$0xf]
        %v4546 = vld [vmem:[%s4 + $0x48] sm:$0xf]
        %v4547 = vld [vmem:[%s4 + $0x4c] sm:$0xf]
        %v4548 = vld [vmem:[%s4 + $0x50] sm:$0xf]
        %v4549 = vld [vmem:[%s4 + $0x54] sm:$0xf]
        %v4550 = vld [vmem:[%s4 + $0x58] sm:$0xf]
        %v4551 = vld [vmem:[%s4 + $0x5c] sm:$0xf]
        %v4552 = vld [vmem:[%s4 + $0x60] sm:$0xf]
        %v4553 = vld [vmem:[%s4 + $0x64] sm:$0xf]
        %v4554 = vld [vmem:[%s4 + $0x68] sm:$0xf]
        %v4555 = vld [vmem:[%s4 + $0x6c] sm:$0xf]
        %v4556 = vld [vmem:[%s4 + $0x70] sm:$0xf]
        %v4557 = vld [vmem:[%s4 + $0x74] sm:$0xf]
        %v4558 = vld [vmem:[%s4 + $0x78] sm:$0xf]
        %v4559 = vld [vmem:[%s4 + $0x7c] sm:$0xf]
        %v4560 = vld [vmem:[%s4 + $0x80] sm:$0xf]
        %v4561 = vld [vmem:[%s4 + $0x84] sm:$0xf]
        %v4562 = vld [vmem:[%s4 + $0x88] sm:$0xf]
        %v4563 = vld [vmem:[%s4 + $0x8c] sm:$0xf]
        %v4600 = vunpack.c.l.b16 %v4528
        %v4601 = vunpack.c.l.b16 %v4529
        %v4602 = vunpack.c.l.b16 %v4530
        %v4603 = vunpack.c.l.b16 %v4531
        %v4604 = vunpack.c.l.b16 %v4532
        %v4605 = vunpack.c.l.b16 %v4533
        %v4606 = vunpack.c.l.b16 %v4534
        %v4607 = vunpack.c.l.b16 %v4535
        %v4608 = vunpack.c.l.b16 %v4536
        %v4609 = vunpack.c.l.b16 %v4537
        %v4610 = vunpack.c.l.b16 %v4538
        %v4611 = vunpack.c.l.b16 %v4539
        %v4612 = vunpack.c.l.b16 %v4540
        %v4613 = vunpack.c.l.b16 %v4541
        %v4614 = vunpack.c.l.b16 %v4542
        %v4615 = vunpack.c.l.b16 %v4543
        %v4616 = vunpack.c.l.b16 %v4544
        %v4617 = vunpack.c.l.b16 %v4545
        %v4618 = vunpack.c.l.b16 %v4546
        %v4619 = vunpack.c.l.b16 %v4547
        %v4620 = vunpack.c.l.b16 %v4548
        %v4621 = vunpack.c.l.b16 %v4549
        %v4622 = vunpack.c.l.b16 %v4550
        %v4623 = vunpack.c.l.b16 %v4551
        %v4624 = vunpack.c.l.b16 %v4552
        %v4625 = vunpack.c.l.b16 %v4553
        %v4626 = vunpack.c.l.b16 %v4554
        %v4627 = vunpack.c.l.b16 %v4555
        %v4628 = vunpack.c.l.b16 %v4556
        %v4629 = vunpack.c.l.b16 %v4557
        %v4630 = vunpack.c.l.b16 %v4558
        %v4631 = vunpack.c.l.b16 %v4559
        %v4632 = vunpack.c.l.b16 %v4560
        %v4633 = vunpack.c.l.b16 %v4561
        %v4634 = vunpack.c.l.b16 %v4562
        %v4635 = vunpack.c.l.b16 %v4563
        %v4636 = vpack.c.b16 %v4601, %v4600
        %v4637 = vpack.c.b16 %v4603, %v4602
        %v4638 = vpack.c.b16 %v4605, %v4604
        %v4639 = vpack.c.b16 %v4607, %v4606
        %v4640 = vpack.c.b16 %v4609, %v4608
        %v4641 = vpack.c.b16 %v4611, %v4610
        %v4642 = vpack.c.b16 %v4613, %v4612
        %v4643 = vpack.c.b16 %v4615, %v4614
        %v4644 = vpack.c.b16 %v4617, %v4616
        %v4645 = vpack.c.b16 %v4619, %v4618
        %v4646 = vpack.c.b16 %v4621, %v4620
        %v4647 = vpack.c.b16 %v4623, %v4622
        %v4648 = vpack.c.b16 %v4625, %v4624
        %v4649 = vpack.c.b16 %v4627, %v4626
        %v4650 = vpack.c.b16 %v4629, %v4628
        %v4651 = vpack.c.b16 %v4631, %v4630
        %v4652 = vpack.c.b16 %v4633, %v4632
        %v4653 = vpack.c.b16 %v4635, %v4634
        %v4673 = vsel %vm3888, %v4518, 0
        %v4676 = vsel %vm3888, %v4521, 0
        %v4679 = vsel %vm3888, %v4524, 0
        %v4682 = vsel %vm3888, %v4527, 0
        %4684 = vmatprep.subr.bf16.mxu0 0
        %4685 = vmatpush1.bf16.msra.mxu0 %v4636
        %4686 = vmatprep.subr.bf16.mxu0 0
        %4687 = vmatpush1.bf16.msra.mxu0 %v4637
        %4688 = vmatprep.subr.bf16.mxu0 0
        %4689 = vmatpush1.bf16.msra.mxu0 %v4638
        %4690 = vmatprep.subr.bf16.mxu0 0
        %4691 = vmatpush1.bf16.msra.mxu0 %v4639
        %4692 = vmatprep.subr.bf16.mxu0 0
        %4693 = vmatpush1.bf16.msra.mxu0 %v4640
        %4694 = vmatprep.subr.bf16.mxu0 0
        %4695 = vmatpush1.bf16.msra.mxu0 %v4641
        %4696 = vmatprep.subr.bf16.mxu0 0
        %4697 = vmatpush1.bf16.msra.mxu0 %v4642
        %4698 = vmatprep.subr.bf16.mxu0 0
        %4699 = vmatpush1.bf16.msra.mxu0 %v4643
        %4700 = vmatprep.subr.bf16.mxu0 0
        %4701 = vmatpush1.bf16.msra.mxu0 %v4644
        %4702 = vmatprep.subr.bf16.mxu0 0
        %4703 = vmatpush1.bf16.msra.mxu0 %v4645
        %4704 = vmatprep.subr.bf16.mxu0 0
        %4705 = vmatpush1.bf16.msra.mxu0 %v4646
        %4706 = vmatprep.subr.bf16.mxu0 0
        %4707 = vmatpush1.bf16.msra.mxu0 %v4647
        %4708 = vmatprep.subr.bf16.mxu0 0
        %4709 = vmatpush1.bf16.msra.mxu0 %v4648
        %4710 = vmatprep.subr.bf16.mxu0 0
        %4711 = vmatpush1.bf16.msra.mxu0 %v4649
        %4712 = vmatprep.subr.bf16.mxu0 0
        %4713 = vmatpush1.bf16.msra.mxu0 %v4650
        %4714 = vmatprep.subr.bf16.mxu0 0
        %4715 = vmatpush1.bf16.msra.mxu0 %v4651
        %4716 = vmatprep.mubr.bf16.mxu0 %v4517
        %4717 = vmatmul.mubr.bf16.gmra.mrb[0].mxu0 %v4516
        %v4718 = vpop.f32.mrb[0].mxu0
        %v4719 = vadd.f32 0.0, %v4718
        %v4720 = vpop.f32.mrb[0].mxu0
        %v4721 = vpop.f32.mrb[0].mxu0
        %v4722 = vadd.f32 0.0, %v4721
        %v4723 = vpop.f32.mrb[0].mxu0
        %4724 = vmatprep.mubr.bf16.mxu0 %v4520
        %4725 = vmatmul.mubr.bf16.gmra.mrb[0].mxu0 %v4519
        %v4726 = vpop.f32.mrb[0].mxu0
        %v4727 = vadd.f32 0.0, %v4726
        %v4728 = vpop.f32.mrb[0].mxu0
        %v4729 = vpop.f32.mrb[0].mxu0
        %v4730 = vadd.f32 0.0, %v4729
        %v4731 = vpop.f32.mrb[0].mxu0
        %4732 = vmatprep.mubr.bf16.mxu0 %v4523
        %4733 = vmatmul.mubr.bf16.gmra.mrb[0].mxu0 %v4522
        %v4734 = vpop.f32.mrb[0].mxu0
        %v4735 = vadd.f32 0.0, %v4734
        %v4736 = vpop.f32.mrb[0].mxu0
        %v4737 = vpop.f32.mrb[0].mxu0
        %v4738 = vadd.f32 0.0, %v4737
        %v4739 = vpop.f32.mrb[0].mxu0
        %4740 = vmatprep.mubr.bf16.mxu0 %v4526
        %4741 = vmatmul.mubr.bf16.gmra.mrb[0].mxu0 %v4525
        %v4742 = vpop.f32.mrb[0].mxu0
        %v4743 = vadd.f32 0.0, %v4742
        %v4744 = vpop.f32.mrb[0].mxu0
        %v4745 = vpop.f32.mrb[0].mxu0
        %v4746 = vadd.f32 0.0, %v4745
        %v4747 = vpop.f32.mrb[0].mxu0
        %4748 = vdwg.mxu0
        %4749 = vmatprep.subr.bf16.mxu0 0
        %4750 = vmatpush1.bf16.msra.mxu0 %v4652
        %4751 = vmatprep.subr.bf16.mxu0 0
        %4752 = vmatpush1.bf16.msra.mxu0 %v4653
        %4753 = vmatprep.subr.bf16.mxu0 0
        %4754 = vmatpush1.bf16.msra.mxu0 0
        %4755 = vmatprep.subr.bf16.mxu0 0
        %4756 = vmatpush1.bf16.msra.mxu0 0
        %4757 = vmatprep.subr.bf16.mxu0 0
        %4758 = vmatpush1.bf16.msra.mxu0 0
        %4759 = vmatprep.subr.bf16.mxu0 0
        %4760 = vmatpush1.bf16.msra.mxu0 0
        %4761 = vmatprep.subr.bf16.mxu0 0
        %4762 = vmatpush1.bf16.msra.mxu0 0
        %4763 = vmatprep.subr.bf16.mxu0 0
        %4764 = vmatpush1.bf16.msra.mxu0 0
        %4765 = vmatprep.subr.bf16.mxu0 0
        %4766 = vmatpush1.bf16.msra.mxu0 0
        %4767 = vmatprep.subr.bf16.mxu0 0
        %4768 = vmatpush1.bf16.msra.mxu0 0
        %4769 = vmatprep.subr.bf16.mxu0 0
        %4770 = vmatpush1.bf16.msra.mxu0 0
        %4771 = vmatprep.subr.bf16.mxu0 0
        %4772 = vmatpush1.bf16.msra.mxu0 0
        %4773 = vmatprep.subr.bf16.mxu0 0
        %4774 = vmatpush1.bf16.msra.mxu0 0
        %4775 = vmatprep.subr.bf16.mxu0 0
        %4776 = vmatpush1.bf16.msra.mxu0 0
        %4777 = vmatprep.subr.bf16.mxu0 0
        %4778 = vmatpush1.bf16.msra.mxu0 0
        %4779 = vmatprep.subr.bf16.mxu0 0
        %4780 = vmatpush1.bf16.msra.mxu0 0
        %4781 = vmatprep.mubr.bf16.mxu0 0
        %4782 = vmatmul.mubr.bf16.gmra.mrb[0].mxu0 %v4673
        %v4783 = vpop.f32.mrb[0].mxu0
        %v4784 = vadd.f32 %v4719, %v4783
        %v4785 = vpop.f32.mrb[0].mxu0
        %v4786 = vpop.f32.mrb[0].mxu0
        %v4787 = vadd.f32 %v4722, %v4786
        %v4788 = vpop.f32.mrb[0].mxu0
        %4789 = vmatprep.mubr.bf16.mxu0 0
        %4790 = vmatmul.mubr.bf16.gmra.mrb[0].mxu0 %v4676
        %v4791 = vpop.f32.mrb[0].mxu0
        %v4792 = vadd.f32 %v4727, %v4791
        %v4793 = vpop.f32.mrb[0].mxu0
        %v4794 = vpop.f32.mrb[0].mxu0
        %v4795 = vadd.f32 %v4730, %v4794
        %v4796 = vpop.f32.mrb[0].mxu0
        %4797 = vmatprep.mubr.bf16.mxu0 0
        %4798 = vmatmul.mubr.bf16.gmra.mrb[0].mxu0 %v4679
        %v4799 = vpop.f32.mrb[0].mxu0
        %v4800 = vadd.f32 %v4735, %v4799
        %v4801 = vpop.f32.mrb[0].mxu0
        %v4802 = vpop.f32.mrb[0].mxu0
        %v4803 = vadd.f32 %v4738, %v4802
        %v4804 = vpop.f32.mrb[0].mxu0
        %4805 = vmatprep.mubr.bf16.mxu0 0
        %4806 = vmatmul.mubr.bf16.gmra.mrb[0].mxu0 %v4682
        %v4807 = vpop.f32.mrb[0].mxu0
        %v4808 = vadd.f32 %v4743, %v4807
        %v4809 = vpop.f32.mrb[0].mxu0
        %v4810 = vpop.f32.mrb[0].mxu0
        %v4811 = vadd.f32 %v4746, %v4810
        %v4812 = vpop.f32.mrb[0].mxu0
        %4813 = vdwg.mxu0
        %v4814 = vld [vmem:[%s5] sm:$0x1]
        %v4816 = vlaneseq
        %v4817 = vshrl.u32 %v4816, 7
        %v4818 = vsub.s32 0, %v4817
        %v4819 = vrot.slane %v4814, %v4818
        %v4821 = vmul.f32 %v4784, %v4819
        %v4822 = vmul.f32 %v4787, %v4819
        %v4823 = vmul.f32 %v4792, %v4819
        %v4824 = vmul.f32 %v4795, %v4819
        %v4825 = vmul.f32 %v4800, %v4819
        %v4826 = vmul.f32 %v4803, %v4819
        %v4827 = vmul.f32 %v4808, %v4819
        %v4828 = vmul.f32 %v4811, %v4819
        %v4829 = vld [vmem:[%s6] sm:$0x1]
        %v4831 = vlaneseq
        %v4832 = vshrl.u32 %v4831, 7
        %v4833 = vsub.s32 0, %v4832
        %v4834 = vrot.slane %v4829, %v4833
        %v4836 = vadd.f32 %v4821, %v4834
        %v4837 = vadd.f32 %v4822, %v4834
        %v4838 = vadd.f32 %v4823, %v4834
        %v4839 = vadd.f32 %v4824, %v4834
        %v4840 = vadd.f32 %v4825, %v4834
        %v4841 = vadd.f32 %v4826, %v4834
        %v4842 = vadd.f32 %v4827, %v4834
        %v4843 = vadd.f32 %v4828, %v4834
        %v4844 = vmax.f32 %v4836, 0.0
        %v4845 = vmax.f32 %v4837, 0.0
        %v4846 = vmax.f32 %v4838, 0.0
        %v4847 = vmax.f32 %v4839, 0.0
        %v4848 = vmax.f32 %v4840, 0.0
        %v4849 = vmax.f32 %v4841, 0.0
        %v4850 = vmax.f32 %v4842, 0.0
        %v4851 = vmax.f32 %v4843, 0.0
        %v4860 = vcombine.high %v4844, %v4844
        %v4862 = vunpack.c.l.s4 1983009808
        %v4863 = vunpack.c.0.s8 %v4862
        %v4864 = vlaneseq
        %v4865 = vshrl.u32 %v4864, 7
        %v4866 = vsub.s32 %v4863, %v4865
        %v4867 = vrot.slane %v4844, %v4866
        %v4869 = vunpack.c.l.s4 1983009808
        %v4870 = vunpack.c.0.s8 %v4869
        %v4871 = vlaneseq
        %v4872 = vshrl.u32 %v4871, 7
        %v4873 = vsub.s32 %v4870, %v4872
        %v4874 = vrot.slane %v4860, %v4873
        %v4875 = vcombine.high %v4867, %v4867
        %v4876 = vcombine.high %v4874, %v4874
        %v4877 = vcombine.high %v4845, %v4845
        %v4879 = vunpack.c.l.s4 1983009808
        %v4880 = vunpack.c.0.s8 %v4879
        %v4881 = vlaneseq
        %v4882 = vshrl.u32 %v4881, 7
        %v4883 = vsub.s32 %v4880, %v4882
        %v4884 = vrot.slane %v4845, %v4883
        %v4886 = vunpack.c.l.s4 1983009808
        %v4887 = vunpack.c.0.s8 %v4886
        %v4888 = vlaneseq
        %v4889 = vshrl.u32 %v4888, 7
        %v4890 = vsub.s32 %v4887, %v4889
        %v4891 = vrot.slane %v4877, %v4890
        %v4892 = vcombine.high %v4884, %v4884
        %v4893 = vcombine.high %v4891, %v4891
        %v4894 = vcombine.high %v4846, %v4846
        %v4896 = vunpack.c.l.s4 1983009808
        %v4897 = vunpack.c.0.s8 %v4896
        %v4898 = vlaneseq
        %v4899 = vshrl.u32 %v4898, 7
        %v4900 = vsub.s32 %v4897, %v4899
        %v4901 = vrot.slane %v4846, %v4900
        %v4903 = vunpack.c.l.s4 1983009808
        %v4904 = vunpack.c.0.s8 %v4903
        %v4905 = vlaneseq
        %v4906 = vshrl.u32 %v4905, 7
        %v4907 = vsub.s32 %v4904, %v4906
        %v4908 = vrot.slane %v4894, %v4907
        %v4909 = vcombine.high %v4901, %v4901
        %v4910 = vcombine.high %v4908, %v4908
        %v4911 = vcombine.high %v4847, %v4847
        %v4913 = vunpack.c.l.s4 1983009808
        %v4914 = vunpack.c.0.s8 %v4913
        %v4915 = vlaneseq
        %v4916 = vshrl.u32 %v4915, 7
        %v4917 = vsub.s32 %v4914, %v4916
        %v4918 = vrot.slane %v4847, %v4917
        %v4920 = vunpack.c.l.s4 1983009808
        %v4921 = vunpack.c.0.s8 %v4920
        %v4922 = vlaneseq
        %v4923 = vshrl.u32 %v4922, 7
        %v4924 = vsub.s32 %v4921, %v4923
        %v4925 = vrot.slane %v4911, %v4924
        %v4926 = vcombine.high %v4918, %v4918
        %v4927 = vcombine.high %v4925, %v4925
        %v4928 = vcombine.high %v4848, %v4848
        %v4930 = vunpack.c.l.s4 1983009808
        %v4931 = vunpack.c.0.s8 %v4930
        %v4932 = vlaneseq
        %v4933 = vshrl.u32 %v4932, 7
        %v4934 = vsub.s32 %v4931, %v4933
        %v4935 = vrot.slane %v4848, %v4934
        %v4937 = vunpack.c.l.s4 1983009808
        %v4938 = vunpack.c.0.s8 %v4937
        %v4939 = vlaneseq
        %v4940 = vshrl.u32 %v4939, 7
        %v4941 = vsub.s32 %v4938, %v4940
        %v4942 = vrot.slane %v4928, %v4941
        %v4943 = vcombine.high %v4935, %v4935
        %v4944 = vcombine.high %v4942, %v4942
        %v4945 = vcombine.high %v4849, %v4849
        %v4947 = vunpack.c.l.s4 1983009808
        %v4948 = vunpack.c.0.s8 %v4947
        %v4949 = vlaneseq
        %v4950 = vshrl.u32 %v4949, 7
        %v4951 = vsub.s32 %v4948, %v4950
        %v4952 = vrot.slane %v4849, %v4951
        %v4954 = vunpack.c.l.s4 1983009808
        %v4955 = vunpack.c.0.s8 %v4954
        %v4956 = vlaneseq
        %v4957 = vshrl.u32 %v4956, 7
        %v4958 = vsub.s32 %v4955, %v4957
        %v4959 = vrot.slane %v4945, %v4958
        %v4960 = vcombine.high %v4952, %v4952
        %v4961 = vcombine.high %v4959, %v4959
        %v4962 = vcombine.high %v4850, %v4850
        %v4964 = vunpack.c.l.s4 1983009808
        %v4965 = vunpack.c.0.s8 %v4964
        %v4966 = vlaneseq
        %v4967 = vshrl.u32 %v4966, 7
        %v4968 = vsub.s32 %v4965, %v4967
        %v4969 = vrot.slane %v4850, %v4968
        %v4971 = vunpack.c.l.s4 1983009808
        %v4972 = vunpack.c.0.s8 %v4971
        %v4973 = vlaneseq
        %v4974 = vshrl.u32 %v4973, 7
        %v4975 = vsub.s32 %v4972, %v4974
        %v4976 = vrot.slane %v4962, %v4975
        %v4977 = vcombine.high %v4969, %v4969
        %v4978 = vcombine.high %v4976, %v4976
        %v4979 = vcombine.high %v4851, %v4851
        %v4981 = vunpack.c.l.s4 1983009808
        %v4982 = vunpack.c.0.s8 %v4981
        %v4983 = vlaneseq
        %v4984 = vshrl.u32 %v4983, 7
        %v4985 = vsub.s32 %v4982, %v4984
        %v4986 = vrot.slane %v4851, %v4985
        %v4988 = vunpack.c.l.s4 1983009808
        %v4989 = vunpack.c.0.s8 %v4988
        %v4990 = vlaneseq
        %v4991 = vshrl.u32 %v4990, 7
        %v4992 = vsub.s32 %v4989, %v4991
        %v4993 = vrot.slane %v4979, %v4992
        %v4994 = vcombine.high %v4986, %v4986
        %v4995 = vcombine.high %v4993, %v4993
        %v5028 = vsel %vm2991, %v4867, -inf
        %v5029 = vrot.slane %v5028, 4
        %v5030 = vmax.f32 %v5028, %v5029
        %v5031 = vrot.slane %v5030, 2
        %v5032 = vmax.f32 %v5030, %v5031
        %v5033 = vrot.slane %v5032, 1
        %v5034 = vmax.f32 %v5032, %v5033
        %v5035 = vsel %vm2991, %v4875, -inf
        %v5036 = vrot.slane %v5035, 4
        %v5037 = vmax.f32 %v5035, %v5036
        %v5038 = vrot.slane %v5037, 2
        %v5039 = vmax.f32 %v5037, %v5038
        %v5040 = vrot.slane %v5039, 1
        %v5041 = vmax.f32 %v5039, %v5040
        %v5042 = vsel %vm2991, %v4874, -inf
        %v5043 = vrot.slane %v5042, 4
        %v5044 = vmax.f32 %v5042, %v5043
        %v5045 = vrot.slane %v5044, 2
        %v5046 = vmax.f32 %v5044, %v5045
        %v5047 = vrot.slane %v5046, 1
        %v5048 = vmax.f32 %v5046, %v5047
        %v5049 = vsel %vm2991, %v4876, -inf
        %v5050 = vrot.slane %v5049, 4
        %v5051 = vmax.f32 %v5049, %v5050
        %v5052 = vrot.slane %v5051, 2
        %v5053 = vmax.f32 %v5051, %v5052
        %v5054 = vrot.slane %v5053, 1
        %v5055 = vmax.f32 %v5053, %v5054
        %v5056 = vsel %vm2991, %v4884, -inf
        %v5057 = vrot.slane %v5056, 4
        %v5058 = vmax.f32 %v5056, %v5057
        %v5059 = vrot.slane %v5058, 2
        %v5060 = vmax.f32 %v5058, %v5059
        %v5061 = vrot.slane %v5060, 1
        %v5062 = vmax.f32 %v5060, %v5061
        %v5063 = vsel %vm2991, %v4892, -inf
        %v5064 = vrot.slane %v5063, 4
        %v5065 = vmax.f32 %v5063, %v5064
        %v5066 = vrot.slane %v5065, 2
        %v5067 = vmax.f32 %v5065, %v5066
        %v5068 = vrot.slane %v5067, 1
        %v5069 = vmax.f32 %v5067, %v5068
        %v5070 = vsel %vm2991, %v4891, -inf
        %v5071 = vrot.slane %v5070, 4
        %v5072 = vmax.f32 %v5070, %v5071
        %v5073 = vrot.slane %v5072, 2
        %v5074 = vmax.f32 %v5072, %v5073
        %v5075 = vrot.slane %v5074, 1
        %v5076 = vmax.f32 %v5074, %v5075
        %v5077 = vsel %vm2991, %v4893, -inf
        %v5078 = vrot.slane %v5077, 4
        %v5079 = vmax.f32 %v5077, %v5078
        %v5080 = vrot.slane %v5079, 2
        %v5081 = vmax.f32 %v5079, %v5080
        %v5082 = vrot.slane %v5081, 1
        %v5083 = vmax.f32 %v5081, %v5082
        %v5084 = vsel %vm2991, %v4901, -inf
        %v5085 = vrot.slane %v5084, 4
        %v5086 = vmax.f32 %v5084, %v5085
        %v5087 = vrot.slane %v5086, 2
        %v5088 = vmax.f32 %v5086, %v5087
        %v5089 = vrot.slane %v5088, 1
        %v5090 = vmax.f32 %v5088, %v5089
        %v5091 = vsel %vm2991, %v4909, -inf
        %v5092 = vrot.slane %v5091, 4
        %v5093 = vmax.f32 %v5091, %v5092
        %v5094 = vrot.slane %v5093, 2
        %v5095 = vmax.f32 %v5093, %v5094
        %v5096 = vrot.slane %v5095, 1
        %v5097 = vmax.f32 %v5095, %v5096
        %v5098 = vsel %vm2991, %v4908, -inf
        %v5099 = vrot.slane %v5098, 4
        %v5100 = vmax.f32 %v5098, %v5099
        %v5101 = vrot.slane %v5100, 2
        %v5102 = vmax.f32 %v5100, %v5101
        %v5103 = vrot.slane %v5102, 1
        %v5104 = vmax.f32 %v5102, %v5103
        %v5105 = vsel %vm2991, %v4910, -inf
        %v5106 = vrot.slane %v5105, 4
        %v5107 = vmax.f32 %v5105, %v5106
        %v5108 = vrot.slane %v5107, 2
        %v5109 = vmax.f32 %v5107, %v5108
        %v5110 = vrot.slane %v5109, 1
        %v5111 = vmax.f32 %v5109, %v5110
        %v5112 = vsel %vm2991, %v4918, -inf
        %v5113 = vrot.slane %v5112, 4
        %v5114 = vmax.f32 %v5112, %v5113
        %v5115 = vrot.slane %v5114, 2
        %v5116 = vmax.f32 %v5114, %v5115
        %v5117 = vrot.slane %v5116, 1
        %v5118 = vmax.f32 %v5116, %v5117
        %v5119 = vsel %vm2991, %v4926, -inf
        %v5120 = vrot.slane %v5119, 4
        %v5121 = vmax.f32 %v5119, %v5120
        %v5122 = vrot.slane %v5121, 2
        %v5123 = vmax.f32 %v5121, %v5122
        %v5124 = vrot.slane %v5123, 1
        %v5125 = vmax.f32 %v5123, %v5124
        %v5126 = vsel %vm2991, %v4925, -inf
        %v5127 = vrot.slane %v5126, 4
        %v5128 = vmax.f32 %v5126, %v5127
        %v5129 = vrot.slane %v5128, 2
        %v5130 = vmax.f32 %v5128, %v5129
        %v5131 = vrot.slane %v5130, 1
        %v5132 = vmax.f32 %v5130, %v5131
        %v5133 = vsel %vm2991, %v4927, -inf
        %v5134 = vrot.slane %v5133, 4
        %v5135 = vmax.f32 %v5133, %v5134
        %v5136 = vrot.slane %v5135, 2
        %v5137 = vmax.f32 %v5135, %v5136
        %v5138 = vrot.slane %v5137, 1
        %v5139 = vmax.f32 %v5137, %v5138
        %v5140 = vsel %vm2991, %v4935, -inf
        %v5141 = vrot.slane %v5140, 4
        %v5142 = vmax.f32 %v5140, %v5141
        %v5143 = vrot.slane %v5142, 2
        %v5144 = vmax.f32 %v5142, %v5143
        %v5145 = vrot.slane %v5144, 1
        %v5146 = vmax.f32 %v5144, %v5145
        %v5147 = vsel %vm2991, %v4943, -inf
        %v5148 = vrot.slane %v5147, 4
        %v5149 = vmax.f32 %v5147, %v5148
        %v5150 = vrot.slane %v5149, 2
        %v5151 = vmax.f32 %v5149, %v5150
        %v5152 = vrot.slane %v5151, 1
        %v5153 = vmax.f32 %v5151, %v5152
        %v5154 = vsel %vm2991, %v4942, -inf
        %v5155 = vrot.slane %v5154, 4
        %v5156 = vmax.f32 %v5154, %v5155
        %v5157 = vrot.slane %v5156, 2
        %v5158 = vmax.f32 %v5156, %v5157
        %v5159 = vrot.slane %v5158, 1
        %v5160 = vmax.f32 %v5158, %v5159
        %v5161 = vsel %vm2991, %v4944, -inf
        %v5162 = vrot.slane %v5161, 4
        %v5163 = vmax.f32 %v5161, %v5162
        %v5164 = vrot.slane %v5163, 2
        %v5165 = vmax.f32 %v5163, %v5164
        %v5166 = vrot.slane %v5165, 1
        %v5167 = vmax.f32 %v5165, %v5166
        %v5168 = vsel %vm2991, %v4952, -inf
        %v5169 = vrot.slane %v5168, 4
        %v5170 = vmax.f32 %v5168, %v5169
        %v5171 = vrot.slane %v5170, 2
        %v5172 = vmax.f32 %v5170, %v5171
        %v5173 = vrot.slane %v5172, 1
        %v5174 = vmax.f32 %v5172, %v5173
        %v5175 = vsel %vm2991, %v4960, -inf
        %v5176 = vrot.slane %v5175, 4
        %v5177 = vmax.f32 %v5175, %v5176
        %v5178 = vrot.slane %v5177, 2
        %v5179 = vmax.f32 %v5177, %v5178
        %v5180 = vrot.slane %v5179, 1
        %v5181 = vmax.f32 %v5179, %v5180
        %v5182 = vsel %vm2991, %v4959, -inf
        %v5183 = vrot.slane %v5182, 4
        %v5184 = vmax.f32 %v5182, %v5183
        %v5185 = vrot.slane %v5184, 2
        %v5186 = vmax.f32 %v5184, %v5185
        %v5187 = vrot.slane %v5186, 1
        %v5188 = vmax.f32 %v5186, %v5187
        %v5189 = vsel %vm2991, %v4961, -inf
        %v5190 = vrot.slane %v5189, 4
        %v5191 = vmax.f32 %v5189, %v5190
        %v5192 = vrot.slane %v5191, 2
        %v5193 = vmax.f32 %v5191, %v5192
        %v5194 = vrot.slane %v5193, 1
        %v5195 = vmax.f32 %v5193, %v5194
        %v5196 = vsel %vm2991, %v4969, -inf
        %v5197 = vrot.slane %v5196, 4
        %v5198 = vmax.f32 %v5196, %v5197
        %v5199 = vrot.slane %v5198, 2
        %v5200 = vmax.f32 %v5198, %v5199
        %v5201 = vrot.slane %v5200, 1
        %v5202 = vmax.f32 %v5200, %v5201
        %v5203 = vsel %vm2991, %v4977, -inf
        %v5204 = vrot.slane %v5203, 4
        %v5205 = vmax.f32 %v5203, %v5204
        %v5206 = vrot.slane %v5205, 2
        %v5207 = vmax.f32 %v5205, %v5206
        %v5208 = vrot.slane %v5207, 1
        %v5209 = vmax.f32 %v5207, %v5208
        %v5210 = vsel %vm2991, %v4976, -inf
        %v5211 = vrot.slane %v5210, 4
        %v5212 = vmax.f32 %v5210, %v5211
        %v5213 = vrot.slane %v5212, 2
        %v5214 = vmax.f32 %v5212, %v5213
        %v5215 = vrot.slane %v5214, 1
        %v5216 = vmax.f32 %v5214, %v5215
        %v5217 = vsel %vm2991, %v4978, -inf
        %v5218 = vrot.slane %v5217, 4
        %v5219 = vmax.f32 %v5217, %v5218
        %v5220 = vrot.slane %v5219, 2
        %v5221 = vmax.f32 %v5219, %v5220
        %v5222 = vrot.slane %v5221, 1
        %v5223 = vmax.f32 %v5221, %v5222
        %v5224 = vsel %vm2991, %v4986, -inf
        %v5225 = vrot.slane %v5224, 4
        %v5226 = vmax.f32 %v5224, %v5225
        %v5227 = vrot.slane %v5226, 2
        %v5228 = vmax.f32 %v5226, %v5227
        %v5229 = vrot.slane %v5228, 1
        %v5230 = vmax.f32 %v5228, %v5229
        %v5231 = vsel %vm2991, %v4994, -inf
        %v5232 = vrot.slane %v5231, 4
        %v5233 = vmax.f32 %v5231, %v5232
        %v5234 = vrot.slane %v5233, 2
        %v5235 = vmax.f32 %v5233, %v5234
        %v5236 = vrot.slane %v5235, 1
        %v5237 = vmax.f32 %v5235, %v5236
        %v5238 = vsel %vm2991, %v4993, -inf
        %v5239 = vrot.slane %v5238, 4
        %v5240 = vmax.f32 %v5238, %v5239
        %v5241 = vrot.slane %v5240, 2
        %v5242 = vmax.f32 %v5240, %v5241
        %v5243 = vrot.slane %v5242, 1
        %v5244 = vmax.f32 %v5242, %v5243
        %v5245 = vsel %vm2991, %v4995, -inf
        %v5246 = vrot.slane %v5245, 4
        %v5247 = vmax.f32 %v5245, %v5246
        %v5248 = vrot.slane %v5247, 2
        %v5249 = vmax.f32 %v5247, %v5248
        %v5250 = vrot.slane %v5249, 1
        %v5251 = vmax.f32 %v5249, %v5250
        %v5252 = vsel %vm3888, %v5034, -inf
        %v5253 = vsel %vm3888, %v5062, -inf
        %v5254 = vmax.f32 %v5252, %v5253
        %v5255 = vsel %vm3888, %v5041, -inf
        %v5256 = vsel %vm3888, %v5069, -inf
        %v5257 = vmax.f32 %v5255, %v5256
        %v5258 = vsel %vm3888, %v5048, -inf
        %v5259 = vsel %vm3888, %v5076, -inf
        %v5260 = vmax.f32 %v5258, %v5259
        %v5261 = vsel %vm3888, %v5055, -inf
        %v5262 = vsel %vm3888, %v5083, -inf
        %v5263 = vmax.f32 %v5261, %v5262
        %v5264 = vsel %vm3888, %v5090, -inf
        %v5265 = vsel %vm3888, %v5118, -inf
        %v5266 = vmax.f32 %v5264, %v5265
        %v5267 = vsel %vm3888, %v5097, -inf
        %v5268 = vsel %vm3888, %v5125, -inf
        %v5269 = vmax.f32 %v5267, %v5268
        %v5270 = vsel %vm3888, %v5104, -inf
        %v5271 = vsel %vm3888, %v5132, -inf
        %v5272 = vmax.f32 %v5270, %v5271
        %v5273 = vsel %vm3888, %v5111, -inf
        %v5274 = vsel %vm3888, %v5139, -inf
        %v5275 = vmax.f32 %v5273, %v5274
        %v5276 = vsel %vm3888, %v5146, -inf
        %v5277 = vsel %vm3888, %v5174, -inf
        %v5278 = vmax.f32 %v5276, %v5277
        %v5279 = vsel %vm3888, %v5153, -inf
        %v5280 = vsel %vm3888, %v5181, -inf
        %v5281 = vmax.f32 %v5279, %v5280
        %v5282 = vsel %vm3888, %v5160, -inf
        %v5283 = vsel %vm3888, %v5188, -inf
        %v5284 = vmax.f32 %v5282, %v5283
        %v5285 = vsel %vm3888, %v5167, -inf
        %v5286 = vsel %vm3888, %v5195, -inf
        %v5287 = vmax.f32 %v5285, %v5286
        %v5288 = vsel %vm3888, %v5202, -inf
        %v5289 = vsel %vm3888, %v5230, -inf
        %v5290 = vmax.f32 %v5288, %v5289
        %v5291 = vsel %vm3888, %v5209, -inf
        %v5292 = vsel %vm3888, %v5237, -inf
        %v5293 = vmax.f32 %v5291, %v5292
        %v5294 = vsel %vm3888, %v5216, -inf
        %v5295 = vsel %vm3888, %v5244, -inf
        %v5296 = vmax.f32 %v5294, %v5295
        %v5297 = vsel %vm3888, %v5223, -inf
        %v5298 = vsel %vm3888, %v5251, -inf
        %v5299 = vmax.f32 %v5297, %v5298
        %v5316 = vsel %vm4145, %v5257, %v5254
        %v5317 = vsel %vm4147, %v5260, %v5316
        %v5318 = vsel %vm4149, %v5263, %v5317
        %v5319 = vsel %vm4145, %v5269, %v5266
        %v5320 = vsel %vm4147, %v5272, %v5319
        %v5321 = vsel %vm4149, %v5275, %v5320
        %v5322 = vsel %vm4145, %v5281, %v5278
        %v5323 = vsel %vm4147, %v5284, %v5322
        %v5324 = vsel %vm4149, %v5287, %v5323
        %v5325 = vsel %vm4145, %v5293, %v5290
        %v5326 = vsel %vm4147, %v5296, %v5325
        %v5327 = vsel %vm4149, %v5299, %v5326
        %v5328 = vrot.slane %v5318, 7
        %v5329 = vrot.slane %v5321, 7
        %v5330 = vrot.slane %v5324, 7
        %v5331 = vrot.slane %v5327, 7
        %v5336 = vsel %vm558, 0.0, %v5328
        %v5337 = vsel %vm558, 0.0, %v5329
        %v5338 = vsel %vm558, 0.0, %v5330
        %v5339 = vsel %vm558, 0.0, %v5331
        %v5340 = vsel %vm2010, %v658, 0.0
        %v5341 = vsel %vm2010, %v5336, 0.0
        %v5342 = vsel %vm2010, %v5337, 0.0
        %v5343 = vsel %vm2010, %v5338, 0.0
        %v5344 = vsel %vm2010, %v5339, 0.0
        %v5349 = vrot.slane %v5340, 1
        %v5350 = vrot.slane %v5341, 1
        %v5351 = vrot.slane %v5342, 1
        %v5352 = vrot.slane %v5343, 1
        %5353 = vrot.lane.b32.xlu0 %v5349, 32
        %v5354 = vpop.permute.xlu0 %5353
        %5355 = vrot.lane.b32.xlu0 %v5350, 32
        %v5356 = vpop.permute.xlu0 %5355
        %5357 = vrot.lane.b32.xlu0 %v5351, 32
        %v5358 = vpop.permute.xlu0 %5357
        %5359 = vrot.lane.b32.xlu0 %v5352, 32
        %v5360 = vpop.permute.xlu0 %5359
        %v5365 = vrot.slane %v5340, 2
        %v5366 = vrot.slane %v5341, 2
        %v5367 = vrot.slane %v5342, 2
        %v5368 = vrot.slane %v5343, 2
        %5369 = vrot.lane.b32.xlu0 %v5365, 64
        %v5370 = vpop.permute.xlu0 %5369
        %5371 = vrot.lane.b32.xlu0 %v5366, 64
        %v5372 = vpop.permute.xlu0 %5371
        %5373 = vrot.lane.b32.xlu0 %v5367, 64
        %v5374 = vpop.permute.xlu0 %5373
        %5375 = vrot.lane.b32.xlu0 %v5368, 64
        %v5376 = vpop.permute.xlu0 %5375
        %5382 = vrot.lane.b32.xlu0 %v5341, 96
        %v5383 = vpop.permute.xlu0 %5382
        %5384 = vrot.lane.b32.xlu0 %v5342, 96
        %v5385 = vpop.permute.xlu0 %5384
        %5386 = vrot.lane.b32.xlu0 %v5343, 96
        %v5387 = vpop.permute.xlu0 %5386
        %5388 = vrot.lane.b32.xlu0 %v5344, 96
        %v5389 = vpop.permute.xlu0 %5388
        %v5394 = vrot.slane %v5344, 1
        %v5399 = vrot.slane %v5344, 2
        %5400 = vrot.lane.b32.xlu0 %v5366, 32
        %v5401 = vpop.permute.xlu0 %5400
        %5402 = vrot.lane.b32.xlu0 %v5367, 32
        %v5403 = vpop.permute.xlu0 %5402
        %5404 = vrot.lane.b32.xlu0 %v5368, 32
        %v5405 = vpop.permute.xlu0 %5404
        %5406 = vrot.lane.b32.xlu0 %v5399, 32
        %v5407 = vpop.permute.xlu0 %5406
        %5412 = vrot.lane.b32.xlu0 %v5342, 64
        %v5413 = vpop.permute.xlu0 %5412
        %5414 = vrot.lane.b32.xlu0 %v5343, 64
        %v5415 = vpop.permute.xlu0 %5414
        %5416 = vrot.lane.b32.xlu0 %v5344, 64
        %v5417 = vpop.permute.xlu0 %5416
        %5418 = vrot.lane.b32.xlu0 %v5340, 64
        %v5419 = vpop.permute.xlu0 %5418
        %5424 = vrot.lane.b32.xlu0 %v5351, 96
        %v5425 = vpop.permute.xlu0 %5424
        %5426 = vrot.lane.b32.xlu0 %v5352, 96
        %v5427 = vpop.permute.xlu0 %5426
        %5428 = vrot.lane.b32.xlu0 %v5394, 96
        %v5429 = vpop.permute.xlu0 %5428
        %5430 = vrot.lane.b32.xlu0 %v5349, 96
        %v5431 = vpop.permute.xlu0 %5430
        %v5436 = vsel %vm3888, %v5340, %v5354
        %v5437 = vsel %vm3888, %v5341, %v5356
        %v5438 = vsel %vm3888, %v5342, %v5358
        %v5439 = vsel %vm3888, %v5343, %v5360
        %v5440 = vsel %vm4474, %v5436, %v5370
        %v5441 = vsel %vm4474, %v5437, %v5372
        %v5442 = vsel %vm4474, %v5438, %v5374
        %v5443 = vsel %vm4474, %v5439, %v5376
        %v5444 = vsel %vm4483, %v5440, %v5383
        %v5445 = vsel %vm4483, %v5441, %v5385
        %v5446 = vsel %vm4483, %v5442, %v5387
        %v5447 = vsel %vm4483, %v5443, %v5389
        %v5448 = vsel %vm3888, %v5350, %v5401
        %v5449 = vsel %vm3888, %v5351, %v5403
        %v5450 = vsel %vm3888, %v5352, %v5405
        %v5451 = vsel %vm3888, %v5394, %v5407
        %v5452 = vsel %vm4474, %v5448, %v5413
        %v5453 = vsel %vm4474, %v5449, %v5415
        %v5454 = vsel %vm4474, %v5450, %v5417
        %v5455 = vsel %vm4474, %v5451, %v5419
        %v5456 = vsel %vm4483, %v5452, %v5425
        %v5457 = vsel %vm4483, %v5453, %v5427
        %v5458 = vsel %vm4483, %v5454, %v5429
        %v5459 = vsel %vm4483, %v5455, %v5431
        %v5468 = vcombine.low %v5444, %v5456
        %v5469 = vcombine.low %v5445, %v5457
        %v5470 = vcombine.low %v5446, %v5458
        %v5471 = vcombine.low %v5447, %v5459
        %v5472 = vcombine.low %v5468, %v5469
        %v5473 = vcombine.high %v5468, %v5469
        %v5474 = vcombine.low %v5367, %v5368
        %v5475 = vcombine.low %v5470, %v5471
        %v5476 = vcombine.high %v5470, %v5471
        %v5477 = vcombine.low %v5399, %v5365
        %v5484 = vpack.c.bf16 %v5475, %v5472
        %v5485 = vpack.c.bf16 %v5476, %v5473
        %v5486 = vpack.c.bf16 %v5477, %v5474
        %v5487 = vld [vmem:[%s7] sm:$0xf]
        %v5488 = vld [vmem:[%s7 + $0x4] sm:$0xf]
        %v5489 = vld [vmem:[%s7 + $0x8] sm:$0xf]
        %v5490 = vld [vmem:[%s7 + $0xc] sm:$0xf]
        %v5491 = vld [vmem:[%s7 + $0x10] sm:$0xf]
        %v5492 = vld [vmem:[%s7 + $0x14] sm:$0xf]
        %v5493 = vld [vmem:[%s7 + $0x18] sm:$0xf]
        %v5494 = vld [vmem:[%s7 + $0x1c] sm:$0xf]
        %v5495 = vld [vmem:[%s7 + $0x20] sm:$0xf]
        %v5496 = vld [vmem:[%s7 + $0x24] sm:$0xf]
        %v5497 = vld [vmem:[%s7 + $0x28] sm:$0xf]
        %v5498 = vld [vmem:[%s7 + $0x2c] sm:$0xf]
        %v5499 = vld [vmem:[%s7 + $0x30] sm:$0xf]
        %v5500 = vld [vmem:[%s7 + $0x34] sm:$0xf]
        %v5501 = vld [vmem:[%s7 + $0x38] sm:$0xf]
        %v5502 = vld [vmem:[%s7 + $0x3c] sm:$0xf]
        %v5503 = vld [vmem:[%s7 + $0x40] sm:$0xf]
        %v5504 = vld [vmem:[%s7 + $0x44] sm:$0xf]
        %v5505 = vld [vmem:[%s7 + $0x48] sm:$0xf]
        %v5506 = vld [vmem:[%s7 + $0x4c] sm:$0xf]
        %v5507 = vld [vmem:[%s7 + $0x50] sm:$0xf]
        %v5508 = vld [vmem:[%s7 + $0x54] sm:$0xf]
        %v5509 = vld [vmem:[%s7 + $0x58] sm:$0xf]
        %v5510 = vld [vmem:[%s7 + $0x5c] sm:$0xf]
        %v5511 = vld [vmem:[%s7 + $0x60] sm:$0xf]
        %v5512 = vld [vmem:[%s7 + $0x64] sm:$0xf]
        %v5513 = vld [vmem:[%s7 + $0x68] sm:$0xf]
        %v5514 = vld [vmem:[%s7 + $0x6c] sm:$0xf]
        %v5515 = vld [vmem:[%s7 + $0x70] sm:$0xf]
        %v5516 = vld [vmem:[%s7 + $0x74] sm:$0xf]
        %v5517 = vld [vmem:[%s7 + $0x78] sm:$0xf]
        %v5518 = vld [vmem:[%s7 + $0x7c] sm:$0xf]
        %v5519 = vld [vmem:[%s7 + $0x80] sm:$0xf]
        %v5520 = vld [vmem:[%s7 + $0x84] sm:$0xf]
        %v5521 = vld [vmem:[%s7 + $0x88] sm:$0xf]
        %v5522 = vld [vmem:[%s7 + $0x8c] sm:$0xf]
        %v5559 = vunpack.c.l.b16 %v5487
        %v5560 = vunpack.c.l.b16 %v5488
        %v5561 = vunpack.c.l.b16 %v5489
        %v5562 = vunpack.c.l.b16 %v5490
        %v5563 = vunpack.c.l.b16 %v5491
        %v5564 = vunpack.c.l.b16 %v5492
        %v5565 = vunpack.c.l.b16 %v5493
        %v5566 = vunpack.c.l.b16 %v5494
        %v5567 = vunpack.c.l.b16 %v5495
        %v5568 = vunpack.c.l.b16 %v5496
        %v5569 = vunpack.c.l.b16 %v5497
        %v5570 = vunpack.c.l.b16 %v5498
        %v5571 = vunpack.c.l.b16 %v5499
        %v5572 = vunpack.c.l.b16 %v5500
        %v5573 = vunpack.c.l.b16 %v5501
        %v5574 = vunpack.c.l.b16 %v5502
        %v5575 = vunpack.c.l.b16 %v5503
        %v5576 = vunpack.c.l.b16 %v5504
        %v5577 = vunpack.c.l.b16 %v5505
        %v5578 = vunpack.c.l.b16 %v5506
        %v5579 = vunpack.c.l.b16 %v5507
        %v5580 = vunpack.c.l.b16 %v5508
        %v5581 = vunpack.c.l.b16 %v5509
        %v5582 = vunpack.c.l.b16 %v5510
        %v5583 = vunpack.c.l.b16 %v5511
        %v5584 = vunpack.c.l.b16 %v5512
        %v5585 = vunpack.c.l.b16 %v5513
        %v5586 = vunpack.c.l.b16 %v5514
        %v5587 = vunpack.c.l.b16 %v5515
        %v5588 = vunpack.c.l.b16 %v5516
        %v5589 = vunpack.c.l.b16 %v5517
        %v5590 = vunpack.c.l.b16 %v5518
        %v5591 = vunpack.c.l.b16 %v5519
        %v5592 = vunpack.c.l.b16 %v5520
        %v5593 = vunpack.c.l.b16 %v5521
        %v5594 = vunpack.c.l.b16 %v5522
        %v5595 = vpack.c.b16 %v5560, %v5559
        %v5596 = vpack.c.b16 %v5562, %v5561
        %v5597 = vpack.c.b16 %v5564, %v5563
        %v5598 = vpack.c.b16 %v5566, %v5565
        %v5599 = vpack.c.b16 %v5568, %v5567
        %v5600 = vpack.c.b16 %v5570, %v5569
        %v5601 = vpack.c.b16 %v5572, %v5571
        %v5602 = vpack.c.b16 %v5574, %v5573
        %v5603 = vpack.c.b16 %v5576, %v5575
        %v5604 = vpack.c.b16 %v5578, %v5577
        %v5605 = vpack.c.b16 %v5580, %v5579
        %v5606 = vpack.c.b16 %v5582, %v5581
        %v5607 = vpack.c.b16 %v5584, %v5583
        %v5608 = vpack.c.b16 %v5586, %v5585
        %v5609 = vpack.c.b16 %v5588, %v5587
        %v5610 = vpack.c.b16 %v5590, %v5589
        %v5611 = vpack.c.b16 %v5592, %v5591
        %v5612 = vpack.c.b16 %v5594, %v5593
        %v5632 = vsel %vm3888, %v5486, 0
        %5634 = vmatprep.subr.bf16.mxu0 0
        %5635 = vmatpush1.bf16.msra.mxu0 %v5595
        %5636 = vmatprep.subr.bf16.mxu0 0
        %5637 = vmatpush1.bf16.msra.mxu0 %v5596
        %5638 = vmatprep.subr.bf16.mxu0 0
        %5639 = vmatpush1.bf16.msra.mxu0 %v5597
        %5640 = vmatprep.subr.bf16.mxu0 0
        %5641 = vmatpush1.bf16.msra.mxu0 %v5598
        %5642 = vmatprep.subr.bf16.mxu0 0
        %5643 = vmatpush1.bf16.msra.mxu0 %v5599
        %5644 = vmatprep.subr.bf16.mxu0 0
        %5645 = vmatpush1.bf16.msra.mxu0 %v5600
        %5646 = vmatprep.subr.bf16.mxu0 0
        %5647 = vmatpush1.bf16.msra.mxu0 %v5601
        %5648 = vmatprep.subr.bf16.mxu0 0
        %5649 = vmatpush1.bf16.msra.mxu0 %v5602
        %5650 = vmatprep.subr.bf16.mxu0 0
        %5651 = vmatpush1.bf16.msra.mxu0 %v5603
        %5652 = vmatprep.subr.bf16.mxu0 0
        %5653 = vmatpush1.bf16.msra.mxu0 %v5604
        %5654 = vmatprep.subr.bf16.mxu0 0
        %5655 = vmatpush1.bf16.msra.mxu0 %v5605
        %5656 = vmatprep.subr.bf16.mxu0 0
        %5657 = vmatpush1.bf16.msra.mxu0 %v5606
        %5658 = vmatprep.subr.bf16.mxu0 0
        %5659 = vmatpush1.bf16.msra.mxu0 %v5607
        %5660 = vmatprep.subr.bf16.mxu0 0
        %5661 = vmatpush1.bf16.msra.mxu0 %v5608
        %5662 = vmatprep.subr.bf16.mxu0 0
        %5663 = vmatpush1.bf16.msra.mxu0 %v5609
        %5664 = vmatprep.subr.bf16.mxu0 0
        %5665 = vmatpush1.bf16.msra.mxu0 %v5610
        %5666 = vmatprep.mubr.bf16.mxu0 %v5485
        %5667 = vmatmul.mubr.bf16.gmra.mrb[0].mxu0 %v5484
        %v5668 = vpop.f32.mrb[0].mxu0
        %v5669 = vadd.f32 0.0, %v5668
        %v5670 = vpop.f32.mrb[0].mxu0
        %v5671 = vpop.f32.mrb[0].mxu0
        %v5672 = vadd.f32 0.0, %v5671
        %v5673 = vpop.f32.mrb[0].mxu0
        %5674 = vdwg.mxu0
        %5675 = vmatprep.subr.bf16.mxu0 0
        %5676 = vmatpush1.bf16.msra.mxu0 %v5611
        %5677 = vmatprep.subr.bf16.mxu0 0
        %5678 = vmatpush1.bf16.msra.mxu0 %v5612
        %5679 = vmatprep.subr.bf16.mxu0 0
        %5680 = vmatpush1.bf16.msra.mxu0 0
        %5681 = vmatprep.subr.bf16.mxu0 0
        %5682 = vmatpush1.bf16.msra.mxu0 0
        %5683 = vmatprep.subr.bf16.mxu0 0
        %5684 = vmatpush1.bf16.msra.mxu0 0
        %5685 = vmatprep.subr.bf16.mxu0 0
        %5686 = vmatpush1.bf16.msra.mxu0 0
        %5687 = vmatprep.subr.bf16.mxu0 0
        %5688 = vmatpush1.bf16.msra.mxu0 0
        %5689 = vmatprep.subr.bf16.mxu0 0
        %5690 = vmatpush1.bf16.msra.mxu0 0
        %5691 = vmatprep.subr.bf16.mxu0 0
        %5692 = vmatpush1.bf16.msra.mxu0 0
        %5693 = vmatprep.subr.bf16.mxu0 0
        %5694 = vmatpush1.bf16.msra.mxu0 0
        %5695 = vmatprep.subr.bf16.mxu0 0
        %5696 = vmatpush1.bf16.msra.mxu0 0
        %5697 = vmatprep.subr.bf16.mxu0 0
        %5698 = vmatpush1.bf16.msra.mxu0 0
        %5699 = vmatprep.subr.bf16.mxu0 0
        %5700 = vmatpush1.bf16.msra.mxu0 0
        %5701 = vmatprep.subr.bf16.mxu0 0
        %5702 = vmatpush1.bf16.msra.mxu0 0
        %5703 = vmatprep.subr.bf16.mxu0 0
        %5704 = vmatpush1.bf16.msra.mxu0 0
        %5705 = vmatprep.subr.bf16.mxu0 0
        %5706 = vmatpush1.bf16.msra.mxu0 0
        %5707 = vmatprep.mubr.bf16.mxu0 0
        %5708 = vmatmul.mubr.bf16.gmra.mrb[0].mxu0 %v5632
        %v5709 = vpop.f32.mrb[0].mxu0
        %v5710 = vadd.f32 %v5669, %v5709
        %v5711 = vpop.f32.mrb[0].mxu0
        %v5712 = vpop.f32.mrb[0].mxu0
        %v5713 = vadd.f32 %v5672, %v5712
        %v5714 = vpop.f32.mrb[0].mxu0
        %5715 = vdwg.mxu0
        %v5716 = vld [vmem:[%s8] sm:$0x1]
        %v5718 = vlaneseq
        %v5719 = vshrl.u32 %v5718, 7
        %v5720 = vsub.s32 0, %v5719
        %v5721 = vrot.slane %v5716, %v5720
        %v5723 = vmul.f32 %v5710, %v5721
        %v5724 = vmul.f32 %v5713, %v5721
        %v5725 = vld [vmem:[%s9] sm:$0x1]
        %v5727 = vlaneseq
        %v5728 = vshrl.u32 %v5727, 7
        %v5729 = vsub.s32 0, %v5728
        %v5730 = vrot.slane %v5725, %v5729
        %v5732 = vadd.f32 %v5723, %v5730
        %v5733 = vadd.f32 %v5724, %v5730
        %v5734 = vmax.f32 %v5732, 0.0
        %v5735 = vmax.f32 %v5733, 0.0
        %v5738 = vcombine.high %v5734, %v5734
        %v5740 = vunpack.c.l.s4 1983009808
        %v5741 = vunpack.c.0.s8 %v5740
        %v5742 = vlaneseq
        %v5743 = vshrl.u32 %v5742, 7
        %v5744 = vsub.s32 %v5741, %v5743
        %v5745 = vrot.slane %v5734, %v5744
        %v5747 = vunpack.c.l.s4 1983009808
        %v5748 = vunpack.c.0.s8 %v5747
        %v5749 = vlaneseq
        %v5750 = vshrl.u32 %v5749, 7
        %v5751 = vsub.s32 %v5748, %v5750
        %v5752 = vrot.slane %v5738, %v5751
        %v5753 = vcombine.high %v5745, %v5745
        %v5754 = vcombine.high %v5752, %v5752
        %v5755 = vcombine.high %v5735, %v5735
        %v5757 = vunpack.c.l.s4 1983009808
        %v5758 = vunpack.c.0.s8 %v5757
        %v5759 = vlaneseq
        %v5760 = vshrl.u32 %v5759, 7
        %v5761 = vsub.s32 %v5758, %v5760
        %v5762 = vrot.slane %v5735, %v5761
        %v5764 = vunpack.c.l.s4 1983009808
        %v5765 = vunpack.c.0.s8 %v5764
        %v5766 = vlaneseq
        %v5767 = vshrl.u32 %v5766, 7
        %v5768 = vsub.s32 %v5765, %v5767
        %v5769 = vrot.slane %v5755, %v5768
        %v5770 = vcombine.high %v5762, %v5762
        %v5771 = vcombine.high %v5769, %v5769
        %v5780 = vsel %vm2991, %v5745, -inf
        %v5781 = vrot.slane %v5780, 4
        %v5782 = vmax.f32 %v5780, %v5781
        %v5783 = vrot.slane %v5782, 2
        %v5784 = vmax.f32 %v5782, %v5783
        %v5785 = vrot.slane %v5784, 1
        %v5786 = vmax.f32 %v5784, %v5785
        %v5787 = vsel %vm2991, %v5753, -inf
        %v5788 = vrot.slane %v5787, 4
        %v5789 = vmax.f32 %v5787, %v5788
        %v5790 = vrot.slane %v5789, 2
        %v5791 = vmax.f32 %v5789, %v5790
        %v5792 = vrot.slane %v5791, 1
        %v5793 = vmax.f32 %v5791, %v5792
        %v5794 = vsel %vm2991, %v5752, -inf
        %v5795 = vrot.slane %v5794, 4
        %v5796 = vmax.f32 %v5794, %v5795
        %v5797 = vrot.slane %v5796, 2
        %v5798 = vmax.f32 %v5796, %v5797
        %v5799 = vrot.slane %v5798, 1
        %v5800 = vmax.f32 %v5798, %v5799
        %v5801 = vsel %vm2991, %v5754, -inf
        %v5802 = vrot.slane %v5801, 4
        %v5803 = vmax.f32 %v5801, %v5802
        %v5804 = vrot.slane %v5803, 2
        %v5805 = vmax.f32 %v5803, %v5804
        %v5806 = vrot.slane %v5805, 1
        %v5807 = vmax.f32 %v5805, %v5806
        %v5808 = vsel %vm2991, %v5762, -inf
        %v5809 = vrot.slane %v5808, 4
        %v5810 = vmax.f32 %v5808, %v5809
        %v5811 = vrot.slane %v5810, 2
        %v5812 = vmax.f32 %v5810, %v5811
        %v5813 = vrot.slane %v5812, 1
        %v5814 = vmax.f32 %v5812, %v5813
        %v5815 = vsel %vm2991, %v5770, -inf
        %v5816 = vrot.slane %v5815, 4
        %v5817 = vmax.f32 %v5815, %v5816
        %v5818 = vrot.slane %v5817, 2
        %v5819 = vmax.f32 %v5817, %v5818
        %v5820 = vrot.slane %v5819, 1
        %v5821 = vmax.f32 %v5819, %v5820
        %v5822 = vsel %vm2991, %v5769, -inf
        %v5823 = vrot.slane %v5822, 4
        %v5824 = vmax.f32 %v5822, %v5823
        %v5825 = vrot.slane %v5824, 2
        %v5826 = vmax.f32 %v5824, %v5825
        %v5827 = vrot.slane %v5826, 1
        %v5828 = vmax.f32 %v5826, %v5827
        %v5829 = vsel %vm2991, %v5771, -inf
        %v5830 = vrot.slane %v5829, 4
        %v5831 = vmax.f32 %v5829, %v5830
        %v5832 = vrot.slane %v5831, 2
        %v5833 = vmax.f32 %v5831, %v5832
        %v5834 = vrot.slane %v5833, 1
        %v5835 = vmax.f32 %v5833, %v5834
        %v5836 = vsel %vm3888, %v5786, -inf
        %v5837 = vsel %vm3888, %v5800, -inf
        %v5838 = vmax.f32 %v5836, %v5837
        %v5839 = vsel %vm3888, %v5793, -inf
        %v5840 = vsel %vm3888, %v5807, -inf
        %v5841 = vmax.f32 %v5839, %v5840
        %v5842 = vsel %vm3888, %v5814, -inf
        %v5843 = vsel %vm3888, %v5828, -inf
        %v5844 = vmax.f32 %v5842, %v5843
        %v5845 = vsel %vm3888, %v5821, -inf
        %v5846 = vsel %vm3888, %v5835, -inf
        %v5847 = vmax.f32 %v5845, %v5846
        %v5852 = vsel %vm4145, %v5841, %v5838
        %v5853 = vsel %vm4145, %v5847, %v5844
        %v5854 = vrot.slane %v5852, 7
        %v5855 = vrot.slane %v5853, 7
        %v5858 = vsel %vm558, 0.0, %v5854
        %v5859 = vsel %vm558, 0.0, %v5855
        %vm5860 = vcmask 1042432
        %v5861 = vsel %vm5860, %v658, 0.0
        %v5862 = vsel %vm5860, %v5858, 0.0
        %v5863 = vsel %vm5860, %v5859, 0.0
        %v5866 = vrot.slane %v5861, 1
        %v5867 = vrot.slane %v5862, 1
        %5868 = vrot.lane.b32.xlu0 %v5866, 32
        %v5869 = vpop.permute.xlu0 %5868
        %5870 = vrot.lane.b32.xlu0 %v5867, 32
        %v5871 = vpop.permute.xlu0 %5870
        %v5874 = vrot.slane %v5861, 2
        %v5875 = vrot.slane %v5862, 2
        %5876 = vrot.lane.b32.xlu0 %v5874, 64
        %v5877 = vpop.permute.xlu0 %5876
        %5878 = vrot.lane.b32.xlu0 %v5875, 64
        %v5879 = vpop.permute.xlu0 %5878
        %5883 = vrot.lane.b32.xlu0 %v5862, 96
        %v5884 = vpop.permute.xlu0 %5883
        %5885 = vrot.lane.b32.xlu0 %v5863, 96
        %v5886 = vpop.permute.xlu0 %5885
        %v5889 = vrot.slane %v5863, 1
        %v5892 = vrot.slane %v5863, 2
        %5893 = vrot.lane.b32.xlu0 %v5875, 32
        %v5894 = vpop.permute.xlu0 %5893
        %5895 = vrot.lane.b32.xlu0 %v5892, 32
        %v5896 = vpop.permute.xlu0 %5895
        %5899 = vrot.lane.b32.xlu0 %v5863, 64
        %v5900 = vpop.permute.xlu0 %5899
        %5901 = vrot.lane.b32.xlu0 %v5861, 64
        %v5902 = vpop.permute.xlu0 %5901
        %5905 = vrot.lane.b32.xlu0 %v5889, 96
        %v5906 = vpop.permute.xlu0 %5905
        %5907 = vrot.lane.b32.xlu0 %v5866, 96
        %v5908 = vpop.permute.xlu0 %5907
        %v5911 = vsel %vm3888, %v5861, %v5869
        %v5912 = vsel %vm3888, %v5862, %v5871
        %v5913 = vsel %vm4474, %v5911, %v5877
        %v5914 = vsel %vm4474, %v5912, %v5879
        %v5915 = vsel %vm4483, %v5913, %v5884
        %v5916 = vsel %vm4483, %v5914, %v5886
        %v5917 = vsel %vm3888, %v5867, %v5894
        %v5918 = vsel %vm3888, %v5889, %v5896
        %v5919 = vsel %vm4474, %v5917, %v5900
        %v5920 = vsel %vm4474, %v5918, %v5902
        %v5921 = vsel %vm4483, %v5919, %v5906
        %v5922 = vsel %vm4483, %v5920, %v5908
        %v5927 = vcombine.low %v5915, %v5921
        %v5929 = vunpack.c.l.s4 1983009808
        %v5930 = vunpack.c.0.s8 %v5929
        %v5931 = vlaneseq
        %v5932 = vshrl.u32 %v5931, 7
        %v5933 = vsub.s32 %v5930, %v5932
        %v5934 = vrot.slane %v5927, %v5933
        %v5936 = vunpack.c.l.s4 1983009808
        %v5937 = vunpack.c.0.s8 %v5936
        %v5938 = vlaneseq
        %v5939 = vshrl.u32 %v5938, 7
        %v5940 = vsub.s32 %v5937, %v5939
        %v5941 = vrot.slane %v5892, %v5940
        %v5942 = vcombine.low %v5934, %v5941
        %v5943 = vcombine.low %v5916, %v5922
        %v5945 = vunpack.c.l.s4 1983009808
        %v5946 = vunpack.c.0.s8 %v5945
        %v5947 = vlaneseq
        %v5948 = vshrl.u32 %v5947, 7
        %v5949 = vsub.s32 %v5946, %v5948
        %v5950 = vrot.slane %v5943, %v5949
        %v5952 = vunpack.c.l.s4 1983009808
        %v5953 = vunpack.c.0.s8 %v5952
        %v5954 = vlaneseq
        %v5955 = vshrl.u32 %v5954, 7
        %v5956 = vsub.s32 %v5953, %v5955
        %v5957 = vrot.slane %v5874, %v5956
        %v5958 = vcombine.low %v5950, %v5957
        %v5959 = vcombine.low %v5942, %v5958
        %v5960 = vcombine.high %v5942, %v5958
        %v5962 = vunpack.c.l.s4 1983009808
        %v5963 = vunpack.c.0.s8 %v5962
        %v5964 = vlaneseq
        %v5965 = vshrl.u32 %v5964, 7
        %v5966 = vsub.s32 %v5963, %v5965
        %v5967 = vrot.slane %v5959, %v5966
        %v5969 = vunpack.c.l.s4 1983009808
        %v5970 = vunpack.c.0.s8 %v5969
        %v5971 = vlaneseq
        %v5972 = vshrl.u32 %v5971, 7
        %v5973 = vsub.s32 %v5970, %v5972
        %v5974 = vrot.slane %v5960, %v5973
        %v5975 = vcombine.high %v5967, %v5967
        %v5979 = vpack.c.bf16 %v5967, %v5967
        %v5980 = vpack.c.bf16 %v5975, %v5975
        %v5981 = vpack.c.bf16 %v5974, %v5974
        %v5982 = vld [vmem:[%s10] sm:$0xf]
        %v5983 = vld [vmem:[%s10 + $0x4] sm:$0xf]
        %v5984 = vld [vmem:[%s10 + $0x8] sm:$0xf]
        %v5985 = vld [vmem:[%s10 + $0xc] sm:$0xf]
        %v5986 = vld [vmem:[%s10 + $0x10] sm:$0xf]
        %v5987 = vld [vmem:[%s10 + $0x14] sm:$0xf]
        %v5988 = vld [vmem:[%s10 + $0x18] sm:$0xf]
        %v5989 = vld [vmem:[%s10 + $0x1c] sm:$0xf]
        %v5990 = vld [vmem:[%s10 + $0x20] sm:$0xf]
        %v5991 = vld [vmem:[%s10 + $0x24] sm:$0xf]
        %v5992 = vld [vmem:[%s10 + $0x28] sm:$0xf]
        %v5993 = vld [vmem:[%s10 + $0x2c] sm:$0xf]
        %v5994 = vld [vmem:[%s10 + $0x30] sm:$0xf]
        %v5995 = vld [vmem:[%s10 + $0x34] sm:$0xf]
        %v5996 = vld [vmem:[%s10 + $0x38] sm:$0xf]
        %v5997 = vld [vmem:[%s10 + $0x3c] sm:$0xf]
        %v5998 = vld [vmem:[%s10 + $0x40] sm:$0xf]
        %v5999 = vld [vmem:[%s10 + $0x44] sm:$0xf]
        %v6000 = vld [vmem:[%s10 + $0x48] sm:$0xf]
        %v6001 = vld [vmem:[%s10 + $0x4c] sm:$0xf]
        %v6002 = vld [vmem:[%s10 + $0x50] sm:$0xf]
        %v6003 = vld [vmem:[%s10 + $0x54] sm:$0xf]
        %v6004 = vld [vmem:[%s10 + $0x58] sm:$0xf]
        %v6005 = vld [vmem:[%s10 + $0x5c] sm:$0xf]
        %v6006 = vld [vmem:[%s10 + $0x60] sm:$0xf]
        %v6007 = vld [vmem:[%s10 + $0x64] sm:$0xf]
        %v6008 = vld [vmem:[%s10 + $0x68] sm:$0xf]
        %v6009 = vld [vmem:[%s10 + $0x6c] sm:$0xf]
        %v6010 = vld [vmem:[%s10 + $0x70] sm:$0xf]
        %v6011 = vld [vmem:[%s10 + $0x74] sm:$0xf]
        %v6012 = vld [vmem:[%s10 + $0x78] sm:$0xf]
        %v6013 = vld [vmem:[%s10 + $0x7c] sm:$0xf]
        %v6014 = vld [vmem:[%s10 + $0x80] sm:$0xf]
        %v6015 = vld [vmem:[%s10 + $0x84] sm:$0xf]
        %v6016 = vld [vmem:[%s10 + $0x88] sm:$0xf]
        %v6017 = vld [vmem:[%s10 + $0x8c] sm:$0xf]
        %v6054 = vunpack.c.l.b16 %v5982
        %v6055 = vunpack.c.l.b16 %v5983
        %v6056 = vunpack.c.l.b16 %v5984
        %v6057 = vunpack.c.l.b16 %v5985
        %v6058 = vunpack.c.l.b16 %v5986
        %v6059 = vunpack.c.l.b16 %v5987
        %v6060 = vunpack.c.l.b16 %v5988
        %v6061 = vunpack.c.l.b16 %v5989
        %v6062 = vunpack.c.l.b16 %v5990
        %v6063 = vunpack.c.l.b16 %v5991
        %v6064 = vunpack.c.l.b16 %v5992
        %v6065 = vunpack.c.l.b16 %v5993
        %v6066 = vunpack.c.l.b16 %v5994
        %v6067 = vunpack.c.l.b16 %v5995
        %v6068 = vunpack.c.l.b16 %v5996
        %v6069 = vunpack.c.l.b16 %v5997
        %v6070 = vunpack.c.l.b16 %v5998
        %v6071 = vunpack.c.l.b16 %v5999
        %v6072 = vunpack.c.l.b16 %v6000
        %v6073 = vunpack.c.l.b16 %v6001
        %v6074 = vunpack.c.l.b16 %v6002
        %v6075 = vunpack.c.l.b16 %v6003
        %v6076 = vunpack.c.l.b16 %v6004
        %v6077 = vunpack.c.l.b16 %v6005
        %v6078 = vunpack.c.l.b16 %v6006
        %v6079 = vunpack.c.l.b16 %v6007
        %v6080 = vunpack.c.l.b16 %v6008
        %v6081 = vunpack.c.l.b16 %v6009
        %v6082 = vunpack.c.l.b16 %v6010
        %v6083 = vunpack.c.l.b16 %v6011
        %v6084 = vunpack.c.l.b16 %v6012
        %v6085 = vunpack.c.l.b16 %v6013
        %v6086 = vunpack.c.l.b16 %v6014
        %v6087 = vunpack.c.l.b16 %v6015
        %v6088 = vunpack.c.l.b16 %v6016
        %v6089 = vunpack.c.l.b16 %v6017
        %v6090 = vpack.c.b16 %v6055, %v6054
        %v6091 = vpack.c.b16 %v6057, %v6056
        %v6092 = vpack.c.b16 %v6059, %v6058
        %v6093 = vpack.c.b16 %v6061, %v6060
        %v6094 = vpack.c.b16 %v6063, %v6062
        %v6095 = vpack.c.b16 %v6065, %v6064
        %v6096 = vpack.c.b16 %v6067, %v6066
        %v6097 = vpack.c.b16 %v6069, %v6068
        %v6098 = vpack.c.b16 %v6071, %v6070
        %v6099 = vpack.c.b16 %v6073, %v6072
        %v6100 = vpack.c.b16 %v6075, %v6074
        %v6101 = vpack.c.b16 %v6077, %v6076
        %v6102 = vpack.c.b16 %v6079, %v6078
        %v6103 = vpack.c.b16 %v6081, %v6080
        %v6104 = vpack.c.b16 %v6083, %v6082
        %v6105 = vpack.c.b16 %v6085, %v6084
        %v6106 = vpack.c.b16 %v6087, %v6086
        %v6107 = vpack.c.b16 %v6089, %v6088
        %v6127 = vsel %vm3888, %v5981, 0
        %6129 = vmatprep.subr.bf16.mxu0 0
        %6130 = vmatpush1.bf16.msra.mxu0 %v6090
        %6131 = vmatprep.subr.bf16.mxu0 0
        %6132 = vmatpush1.bf16.msra.mxu0 %v6091
        %6133 = vmatprep.subr.bf16.mxu0 0
        %6134 = vmatpush1.bf16.msra.mxu0 %v6092
        %6135 = vmatprep.subr.bf16.mxu0 0
        %6136 = vmatpush1.bf16.msra.mxu0 %v6093
        %6137 = vmatprep.subr.bf16.mxu0 0
        %6138 = vmatpush1.bf16.msra.mxu0 %v6094
        %6139 = vmatprep.subr.bf16.mxu0 0
        %6140 = vmatpush1.bf16.msra.mxu0 %v6095
        %6141 = vmatprep.subr.bf16.mxu0 0
        %6142 = vmatpush1.bf16.msra.mxu0 %v6096
        %6143 = vmatprep.subr.bf16.mxu0 0
        %6144 = vmatpush1.bf16.msra.mxu0 %v6097
        %6145 = vmatprep.subr.bf16.mxu0 0
        %6146 = vmatpush1.bf16.msra.mxu0 %v6098
        %6147 = vmatprep.subr.bf16.mxu0 0
        %6148 = vmatpush1.bf16.msra.mxu0 %v6099
        %6149 = vmatprep.subr.bf16.mxu0 0
        %6150 = vmatpush1.bf16.msra.mxu0 %v6100
        %6151 = vmatprep.subr.bf16.mxu0 0
        %6152 = vmatpush1.bf16.msra.mxu0 %v6101
        %6153 = vmatprep.subr.bf16.mxu0 0
        %6154 = vmatpush1.bf16.msra.mxu0 %v6102
        %6155 = vmatprep.subr.bf16.mxu0 0
        %6156 = vmatpush1.bf16.msra.mxu0 %v6103
        %6157 = vmatprep.subr.bf16.mxu0 0
        %6158 = vmatpush1.bf16.msra.mxu0 %v6104
        %6159 = vmatprep.subr.bf16.mxu0 0
        %6160 = vmatpush1.bf16.msra.mxu0 %v6105
        %6161 = vmatprep.mubr.bf16.mxu0 %v5980
        %6162 = vmatmul.mubr.bf16.gmra.mrb[0].mxu0 %v5979
        %v6163 = vpop.f32.mrb[0].mxu0
        %v6164 = vadd.f32 0.0, %v6163
        %v6165 = vpop.f32.mrb[0].mxu0
        %v6166 = vpop.f32.mrb[0].mxu0
        %v6167 = vpop.f32.mrb[0].mxu0
        %6168 = vdwg.mxu0
        %6169 = vmatprep.subr.bf16.mxu0 0
        %6170 = vmatpush1.bf16.msra.mxu0 %v6106
        %6171 = vmatprep.subr.bf16.mxu0 0
        %6172 = vmatpush1.bf16.msra.mxu0 %v6107
        %6173 = vmatprep.subr.bf16.mxu0 0
        %6174 = vmatpush1.bf16.msra.mxu0 0
        %6175 = vmatprep.subr.bf16.mxu0 0
        %6176 = vmatpush1.bf16.msra.mxu0 0
        %6177 = vmatprep.subr.bf16.mxu0 0
        %6178 = vmatpush1.bf16.msra.mxu0 0
        %6179 = vmatprep.subr.bf16.mxu0 0
        %6180 = vmatpush1.bf16.msra.mxu0 0
        %6181 = vmatprep.subr.bf16.mxu0 0
        %6182 = vmatpush1.bf16.msra.mxu0 0
        %6183 = vmatprep.subr.bf16.mxu0 0
        %6184 = vmatpush1.bf16.msra.mxu0 0
        %6185 = vmatprep.subr.bf16.mxu0 0
        %6186 = vmatpush1.bf16.msra.mxu0 0
        %6187 = vmatprep.subr.bf16.mxu0 0
        %6188 = vmatpush1.bf16.msra.mxu0 0
        %6189 = vmatprep.subr.bf16.mxu0 0
        %6190 = vmatpush1.bf16.msra.mxu0 0
        %6191 = vmatprep.subr.bf16.mxu0 0
        %6192 = vmatpush1.bf16.msra.mxu0 0
        %6193 = vmatprep.subr.bf16.mxu0 0
        %6194 = vmatpush1.bf16.msra.mxu0 0
        %6195 = vmatprep.subr.bf16.mxu0 0
        %6196 = vmatpush1.bf16.msra.mxu0 0
        %6197 = vmatprep.subr.bf16.mxu0 0
        %6198 = vmatpush1.bf16.msra.mxu0 0
        %6199 = vmatprep.subr.bf16.mxu0 0
        %6200 = vmatpush1.bf16.msra.mxu0 0
        %6201 = vmatprep.mubr.bf16.mxu0 0
        %6202 = vmatmul.mubr.bf16.gmra.mrb[0].mxu0 %v6127
        %v6203 = vpop.f32.mrb[0].mxu0
        %v6204 = vadd.f32 %v6164, %v6203
        %v6205 = vpop.f32.mrb[0].mxu0
        %v6206 = vpop.f32.mrb[0].mxu0
        %v6207 = vpop.f32.mrb[0].mxu0
        %6208 = vdwg.mxu0
        %v6209 = vld [vmem:[%s11] sm:$0x1]
        %v6211 = vlaneseq
        %v6212 = vshrl.u32 %v6211, 7
        %v6213 = vsub.s32 0, %v6212
        %v6214 = vrot.slane %v6209, %v6213
        %v6216 = vmul.f32 %v6204, %v6214
        %v6217 = vld [vmem:[%s12] sm:$0x1]
        %v6219 = vlaneseq
        %v6220 = vshrl.u32 %v6219, 7
        %v6221 = vsub.s32 0, %v6220
        %v6222 = vrot.slane %v6217, %v6221
        %v6224 = vadd.f32 %v6216, %v6222
        %v6225 = vmax.f32 %v6224, 0.0
        %v6228 = vunpack.c.l.s4 1983009808
        %v6229 = vunpack.c.0.s8 %v6228
        %v6230 = vlaneseq
        %v6231 = vshrl.u32 %v6230, 7
        %v6232 = vsub.s32 %v6229, %v6231
        %v6233 = vrot.slane %v6225, %v6232
        %v6234 = vcombine.high %v6233, %v6233
        %v6237 = vsel %vm2991, %v6233, -inf
        %v6238 = vrot.slane %v6237, 4
        %v6239 = vmax.f32 %v6237, %v6238
        %v6240 = vrot.slane %v6239, 2
        %v6241 = vmax.f32 %v6239, %v6240
        %v6242 = vrot.slane %v6241, 1
        %v6243 = vmax.f32 %v6241, %v6242
        %v6244 = vsel %vm2991, %v6234, -inf
        %v6245 = vrot.slane %v6244, 4
        %v6246 = vmax.f32 %v6244, %v6245
        %v6247 = vrot.slane %v6246, 2
        %v6248 = vmax.f32 %v6246, %v6247
        %v6249 = vrot.slane %v6248, 1
        %v6250 = vmax.f32 %v6248, %v6249
        %v6251 = vsel %vm3888, %v6243, -inf
        %v6252 = vsel %vm3888, %v6250, -inf
        %v6253 = vmax.f32 %v6251, %v6252
        %v6254 = vpack.c.bf16 %v6253, %v6253
        %v6255 = vld [vmem:[%s13] sm:$0xf]
        %v6256 = vld [vmem:[%s13 + $0x4] sm:$0xf]
        %v6257 = vld [vmem:[%s13 + $0x8] sm:$0xf]
        %v6258 = vld [vmem:[%s13 + $0xc] sm:$0xf]
        %v6259 = vld [vmem:[%s14] sm:$0x1]
        %v6264 = vunpack.c.l.b16 %v6255
        %v6265 = vunpack.c.l.b16 %v6256
        %v6266 = vunpack.c.l.b16 %v6257
        %v6267 = vunpack.c.l.b16 %v6258
        %v6268 = vpack.c.b16 %v6265, %v6264
        %v6269 = vpack.c.b16 %v6267, %v6266
        %v6273 = vsel %vm3888, %v6254, 0
        %6275 = vmatprep.subr.bf16.mxu0 0
        %6276 = vmatpush1.bf16.msra.mxu0 %v6268
        %6277 = vmatprep.subr.bf16.mxu0 0
        %6278 = vmatpush1.bf16.msra.mxu0 %v6269
        %6279 = vmatprep.subr.bf16.mxu0 0
        %6280 = vmatpush1.bf16.msra.mxu0 0
        %6281 = vmatprep.subr.bf16.mxu0 0
        %6282 = vmatpush1.bf16.msra.mxu0 0
        %6283 = vmatprep.subr.bf16.mxu0 0
        %6284 = vmatpush1.bf16.msra.mxu0 0
        %6285 = vmatprep.subr.bf16.mxu0 0
        %6286 = vmatpush1.bf16.msra.mxu0 0
        %6287 = vmatprep.subr.bf16.mxu0 0
        %6288 = vmatpush1.bf16.msra.mxu0 0
        %6289 = vmatprep.subr.bf16.mxu0 0
        %6290 = vmatpush1.bf16.msra.mxu0 0
        %6291 = vmatprep.subr.bf16.mxu0 0
        %6292 = vmatpush1.bf16.msra.mxu0 0
        %6293 = vmatprep.subr.bf16.mxu0 0
        %6294 = vmatpush1.bf16.msra.mxu0 0
        %6295 = vmatprep.subr.bf16.mxu0 0
        %6296 = vmatpush1.bf16.msra.mxu0 0
        %6297 = vmatprep.subr.bf16.mxu0 0
        %6298 = vmatpush1.bf16.msra.mxu0 0
        %6299 = vmatprep.subr.bf16.mxu0 0
        %6300 = vmatpush1.bf16.msra.mxu0 0
        %6301 = vmatprep.subr.bf16.mxu0 0
        %6302 = vmatpush1.bf16.msra.mxu0 0
        %6303 = vmatprep.subr.bf16.mxu0 0
        %6304 = vmatpush1.bf16.msra.mxu0 0
        %6305 = vmatprep.subr.bf16.mxu0 0
        %6306 = vmatpush1.bf16.msra.mxu0 0
        %6307 = vmatprep.mubr.bf16.mxu0 0
        %6308 = vmatmul.mubr.bf16.gmra.mrb[0].mxu0 %v6273
        %v6309 = vpop.f32.mrb[0].mxu0
        %v6310 = vadd.f32 %v6259, %v6309
        %v6311 = vpop.f32.mrb[0].mxu0
        %v6312 = vpop.f32.mrb[0].mxu0
        %v6313 = vpop.f32.mrb[0].mxu0
        %6314 = vdwg.mxu0
        %6315 = vst [vmem:[%s486] sm:$0x1] %v6310
        %s6316 = sand.u32 %s357, 1
        %s6317 = scalar_lea.sflag [#allocation3], %s6316
        %s6318 = sand.u32 %s357, 1
        %s6319 = scalar_lea.vmem [#allocation2], %s6318
        // Predicated region
        $region81: #{cnn4_forward.1} parent=79 // pred_check
          %p6320 = pneg %p367
        $region82: #{cnn4_forward.1} parent=79 // pred_check_branch
          %6322 = sbr.rel (%p6320) target = $region84
        $region83: #{cnn4_forward.1} parent=79 // pred_region
          %s6324 = ssub.s32 16, 16
          %6325 = vsyncadd %s6317, %s6324
          %s6326 = smul.addr %s29, 16
          %s6327 = scalar_lea.hbm %s15, %s6326
          %s6329 = sshll.u32 %s6319, 4
          %s6330 = int_to_ptr.vmem [resolvable:$true] %s6329
          %6332 = dma.vmem_to_hbm [thread:$0]  %s6330, 16, %s6327, %s6317
        $region84: #{cnn4_forward.1} parent=79 // pred_fallthru
          _
      $region80: #{cnn4_forward.1} parent=5 // pred_fallthru
        _
      %p6333 = scmp.le.s32.totalorder 2, %s24
      // Predicated region
      $region85: #{cnn4_forward.1} parent=5 // pred_check
        %p6334 = pneg %p6333
      $region86: #{cnn4_forward.1} parent=5 // pred_check_branch
        %6336 = sbr.rel (%p6334) target = $region88
      $region87: #{cnn4_forward.1} parent=5 // pred_region
        %s6337 = ssub.s32 %s24, 2
        // Predicated region
        $region89: #{cnn4_forward.1} parent=87 // pred_check
          %p6338 = pneg %p373
        $region90: #{cnn4_forward.1} parent=87 // pred_check_branch
          %6340 = sbr.rel (%p6338) target = $region92
        $region91: #{cnn4_forward.1} parent=87 // pred_region
          %s6341 = sand.u32 %s358, 1
          %s6342 = scalar_lea.sflag [#allocation3], %s6341
          %s6343 = sand.u32 %s358, 1
          %s6344 = scalar_lea.vmem [#allocation2], %s6343
          %6345 = dma.done %s6342, 16
        $region92: #{cnn4_forward.1} parent=87 // pred_fallthru
          _
      $region88: #{cnn4_forward.1} parent=5 // pred_fallthru
        _
    $region6: #{cnn4_forward.1} parent=1 // loop_footer
      %s28 = sadd.s32 1, %s24
    $region7: #{cnn4_forward.1} parent=1 // loop_footer_branch
      %23 = sbr.rel target = $region3
    $region8: #{cnn4_forward.1} parent=1 // loop_exit
      _
    %6346 = vsyncpa [#allocation3], 1
    %s6347 = scalar_lea.sflag [#allocation3], 1
    %6348 = vsyncpa %s6347, 1

</llo_original>
